<compile_context>
chip_gen: v6e
topology: v6e:2x2x1
jax: 0.10.0
libtpu: 0.0.40
codegen_flags: <defaults>
</compile_context>

<pallas_src>
import functools

import jax
import jax.numpy as jnp
from jax.experimental import pallas as pl
from jax.experimental.pallas import tpu as pltpu


# ----------------------------------------------------------------------------
# Fused kernel: one grid step == one batch element, all heads unrolled.
#   qkv = x @ [Wq|Wk|Wv] ; dots = (q*scale) @ k^T ; attn = softmax(dots)
#   out = sum_h (attn_h @ v_h) @ Wout_h + b_out
# ----------------------------------------------------------------------------
def _fused_attention_kernel(x_ref, wq_ref, wk_ref, wv_ref, wo_ref, b_ref,
                            o_ref, *, heads):
    n = x_ref.shape[1]
    dim = o_ref.shape[2]
    x2 = x_ref[0, :, :].astype(jnp.float32)                    # (N, DIM)

    acc = jnp.zeros((n, dim), jnp.float32)                     # output accumulator
    for h in range(heads):                                     # static unroll (H small)
        # Per-head projections; scale is already folded into Wq in the wrapper.
        q = jnp.dot(x2, wq_ref[h, :, :].astype(jnp.float32),
                    preferred_element_type=jnp.float32)        # (N, DH)
        k = jnp.dot(x2, wk_ref[h, :, :].astype(jnp.float32),
                    preferred_element_type=jnp.float32)        # (N, DH)
        v = jnp.dot(x2, wv_ref[h, :, :].astype(jnp.float32),
                    preferred_element_type=jnp.float32)        # (N, DH)

        # q @ k^T with the transpose absorbed into the contraction dims
        # (no explicit XLU transpose).
        dots = jax.lax.dot_general(
            q, k, dimension_numbers=(((1,), (1,)), ((), ())),
            preferred_element_type=jnp.float32)                # (N, N)

        m = jnp.max(dots, axis=-1, keepdims=True)
        e = jnp.exp(dots - m)
        attn = e * pl.reciprocal(jnp.sum(e, axis=-1, keepdims=True),
                                 approx=True)                  # EUP slot

        oh = jnp.dot(attn, v, preferred_element_type=jnp.float32)       # (N, DH)
        # Output projection folded per head: out @ Wout == sum_h oh @ Wout_h.
        acc = acc + jnp.dot(oh, wo_ref[h, :, :].astype(jnp.float32),
                            preferred_element_type=jnp.float32)         # (N, DIM)

    acc = acc + b_ref[...].astype(jnp.float32)                 # (1, DIM) broadcast
    o_ref[0, :, :] = acc.astype(o_ref.dtype)


# ----------------------------------------------------------------------------
# Full module forward pass
# ----------------------------------------------------------------------------
def attention_forward(x, params, *, heads, dim_head):
    """x: (B, N, DIM) -> (B, N, DIM). Dropout(p=0.0) is an identity."""
    B, N, DIM = x.shape
    scale = dim_head ** (-0.5)

    # Repack PyTorch-layout weights into per-head slabs (tiny one-time XLA
    # reshapes/transposes on weights only -- nothing head-strided in-kernel).
    w3 = params["w_qkv"].reshape(DIM, 3, heads, dim_head)
    wq = jnp.transpose(w3[:, 0], (1, 0, 2)) * scale            # (H, DIM, DH), scale folded
    wk = jnp.transpose(w3[:, 1], (1, 0, 2))                    # (H, DIM, DH)
    wv = jnp.transpose(w3[:, 2], (1, 0, 2))                    # (H, DIM, DH)

    project_out = not (heads == 1 and dim_head == DIM)
    if project_out:
        wo = params["w_out"].reshape(heads, dim_head, DIM)     # (H, DH, DIM)
        b2 = params["b_out"].reshape(1, DIM)
    else:
        # nn.Identity() path: express as an identity projection + zero bias.
        wo = jnp.eye(DIM, dtype=x.dtype).reshape(heads, dim_head, DIM)
        b2 = jnp.zeros((1, DIM), x.dtype)

    kernel = functools.partial(_fused_attention_kernel, heads=heads)
    wqkv_spec = pl.BlockSpec((heads, DIM, dim_head), lambda b: (0, 0, 0))
    wout_spec = pl.BlockSpec((heads, dim_head, DIM), lambda b: (0, 0, 0))

    return pl.pallas_call(
        kernel,
        out_shape=jax.ShapeDtypeStruct((B, N, DIM), x.dtype),
        grid=(B,),
        in_specs=[
            pl.BlockSpec((1, N, DIM), lambda b: (b, 0, 0)),    # x (per-batch)
            wqkv_spec, wqkv_spec, wqkv_spec,                   # Wq, Wk, Wv (resident)
            wout_spec,                                         # Wout (resident)
            pl.BlockSpec((1, DIM), lambda b: (0, 0)),          # bias (resident)
        ],
        out_specs=pl.BlockSpec((1, N, DIM), lambda b: (b, 0, 0)),
        compiler_params=pltpu.CompilerParams(
            dimension_semantics=("parallel",),                 # v7x: 2 TCs split the batch
        ),
    )(x, wq, wk, wv, wo, b2)


def init_params(key, dim, heads, dim_head):
    inner_dim = heads * dim_head
    k1, k2, k3 = jax.random.split(key, 3)
    # Stored pre-transposed (in_features, out_features) so forward does x @ W.
    w_qkv = jax.random.normal(k1, (dim, inner_dim * 3), jnp.float32) * 0.02
    w_out = jax.random.normal(k2, (inner_dim, dim), jnp.float32) * 0.02
    b_out = jax.random.normal(k3, (dim,), jnp.float32) * 0.02
    return {"w_qkv": w_qkv, "w_out": w_out, "b_out": b_out}


def reference_forward(x, params, *, heads, dim_head):
    """Pure-JAX reference matching the PyTorch module semantics."""
    B, N, DIM = x.shape
    scale = dim_head ** (-0.5)
    qkv = x.reshape(B * N, DIM) @ params["w_qkv"]
    q, k, v = jnp.split(qkv, 3, axis=-1)

    def to_bhnd(t):
        return t.reshape(B, N, heads, dim_head).transpose(0, 2, 1, 3)

    q, k, v = to_bhnd(q), to_bhnd(k), to_bhnd(v)
    dots = jnp.einsum("bhid,bhjd->bhij", q, k) * scale
    attn = jax.nn.softmax(dots, axis=-1)
    out = jnp.einsum("bhij,bhjd->bhid", attn, v)
    out = out.transpose(0, 2, 1, 3).reshape(B * N, heads * dim_head)
    out = out @ params["w_out"] + params["b_out"]
    return out.reshape(B, N, DIM)


if __name__ == "__main__":
    B, N, DIM = 2, 8, 32
    HEADS, DIM_HEAD = 8, 64

    key = jax.random.PRNGKey(0)
    kx, kp = jax.random.split(key)
    x = jax.random.normal(kx, (B, N, DIM), jnp.float32)
    params = init_params(kp, DIM, HEADS, DIM_HEAD)

    fwd = jax.jit(functools.partial(attention_forward,
                                    heads=HEADS, dim_head=DIM_HEAD))
    out = jax.block_until_ready(fwd(x, params))

    ref = reference_forward(x, params, heads=HEADS, dim_head=DIM_HEAD)
    assert out.shape == (B, N, DIM)
    # approx=True reciprocal in the softmax normalization relaxes the match
    # slightly relative to the pure-f32 reference.
    err = float(jnp.max(jnp.abs(out - ref)))
    assert jnp.allclose(out, ref, atol=2e-3, rtol=2e-3), err

    print("KERNEL_OK")
</pallas_src>

<mosaic_0001>
module attributes {stable_mosaic.version = 11 : i64} {
  func.func @_fused_attention_kernel(%arg0: i32, %arg1: memref<1x8x32xf32, #tpu.memory_space<vmem>>, %arg2: memref<8x32x64xf32, #tpu.memory_space<vmem>>, %arg3: memref<8x32x64xf32, #tpu.memory_space<vmem>>, %arg4: memref<8x32x64xf32, #tpu.memory_space<vmem>>, %arg5: memref<8x64x32xf32, #tpu.memory_space<vmem>>, %arg6: memref<1x32xf32, #tpu.memory_space<vmem>>, %arg7: memref<1x8x32xf32, #tpu.memory_space<vmem>>) attributes {dimension_semantics = [#tpu.dimension_semantics<parallel>], iteration_bounds = array<i64: 2>, scalar_prefetch = 0 : i64, scratch_operands = 0 : i64, tpu.core_type = #tpu.core_type<tc>, window_params = [{transform_indices = @transform_0, window_bounds = array<i64: 1, 8, 32>}, {pipeline_mode = #tpu.pipeline_mode<synchronous>, transform_indices = @transform_1, window_bounds = array<i64: 8, 32, 64>}, {pipeline_mode = #tpu.pipeline_mode<synchronous>, transform_indices = @transform_2, window_bounds = array<i64: 8, 32, 64>}, {pipeline_mode = #tpu.pipeline_mode<synchronous>, transform_indices = @transform_3, window_bounds = array<i64: 8, 32, 64>}, {pipeline_mode = #tpu.pipeline_mode<synchronous>, transform_indices = @transform_4, window_bounds = array<i64: 8, 64, 32>}, {pipeline_mode = #tpu.pipeline_mode<synchronous>, transform_indices = @transform_5, window_bounds = array<i64: 1, 32>}, {transform_indices = @transform_6, window_bounds = array<i64: 1, 8, 32>}]} {
    %c0 = arith.constant 0 : index
    %c0_0 = arith.constant 0 : index
    %c0_1 = arith.constant 0 : index
    %0 = vector.load %arg1[%c0, %c0_0, %c0_1] : memref<1x8x32xf32, #tpu.memory_space<vmem>>, vector<1x8x32xf32>
    %1 = vector.shape_cast %0 : vector<1x8x32xf32> to vector<8x32xf32>
    %cst = arith.constant 0.000000e+00 : f32
    %2 = vector.broadcast %cst : f32 to vector<8x32xf32>
    %c0_2 = arith.constant 0 : index
    %c0_3 = arith.constant 0 : index
    %c0_4 = arith.constant 0 : index
    %3 = vector.load %arg2[%c0_2, %c0_3, %c0_4] : memref<8x32x64xf32, #tpu.memory_space<vmem>>, vector<1x32x64xf32>
    %4 = vector.shape_cast %3 : vector<1x32x64xf32> to vector<32x64xf32>
    %cst_5 = arith.constant dense<0.000000e+00> : vector<8x64xf32>
    %5 = tpu.matmul %1, %4, %cst_5 {dimension_numbers = #tpu.dot_dimension_numbers<[1], [0], [0], [1], [0, 0, 1, 1], [], []>} : vector<8x32xf32>, vector<32x64xf32>, vector<8x64xf32> -> vector<8x64xf32>
    %c0_6 = arith.constant 0 : index
    %c0_7 = arith.constant 0 : index
    %c0_8 = arith.constant 0 : index
    %6 = vector.load %arg3[%c0_6, %c0_7, %c0_8] : memref<8x32x64xf32, #tpu.memory_space<vmem>>, vector<1x32x64xf32>
    %7 = vector.shape_cast %6 : vector<1x32x64xf32> to vector<32x64xf32>
    %cst_9 = arith.constant dense<0.000000e+00> : vector<8x64xf32>
    %8 = tpu.matmul %1, %7, %cst_9 {dimension_numbers = #tpu.dot_dimension_numbers<[1], [0], [0], [1], [0, 0, 1, 1], [], []>} : vector<8x32xf32>, vector<32x64xf32>, vector<8x64xf32> -> vector<8x64xf32>
    %c0_10 = arith.constant 0 : index
    %c0_11 = arith.constant 0 : index
    %c0_12 = arith.constant 0 : index
    %9 = vector.load %arg4[%c0_10, %c0_11, %c0_12] : memref<8x32x64xf32, #tpu.memory_space<vmem>>, vector<1x32x64xf32>
    %10 = vector.shape_cast %9 : vector<1x32x64xf32> to vector<32x64xf32>
    %cst_13 = arith.constant dense<0.000000e+00> : vector<8x64xf32>
    %11 = tpu.matmul %1, %10, %cst_13 {dimension_numbers = #tpu.dot_dimension_numbers<[1], [0], [0], [1], [0, 0, 1, 1], [], []>} : vector<8x32xf32>, vector<32x64xf32>, vector<8x64xf32> -> vector<8x64xf32>
    %cst_14 = arith.constant dense<0.000000e+00> : vector<8x8xf32>
    %12 = tpu.matmul %5, %8, %cst_14 {dimension_numbers = #tpu.dot_dimension_numbers<[1], [1], [0], [0], [0, 0, 1, 0], [], []>} : vector<8x64xf32>, vector<8x64xf32>, vector<8x8xf32> -> vector<8x8xf32>
    %cst_15 = arith.constant dense<0xFF800000> : vector<8xf32>
    %13 = vector.multi_reduction <maximumf>, %12, %cst_15 [1] : vector<8x8xf32> to vector<8xf32>
    %14 = vector.shape_cast %13 : vector<8xf32> to vector<8x1xf32>
    %15 = vector.broadcast %14 : vector<8x1xf32> to vector<8x8xf32>
    %16 = arith.subf %12, %15 : vector<8x8xf32>
    %17 = math.exp %16 : vector<8x8xf32>
    %cst_16 = arith.constant dense<0.000000e+00> : vector<8xf32>
    %18 = vector.multi_reduction <add>, %17, %cst_16 [1] : vector<8x8xf32> to vector<8xf32>
    %19 = vector.shape_cast %18 : vector<8xf32> to vector<8x1xf32>
    %20 = tpu.reciprocal %19 {approx = true} : vector<8x1xf32> -> vector<8x1xf32>
    %21 = vector.broadcast %20 : vector<8x1xf32> to vector<8x8xf32>
    %22 = arith.mulf %17, %21 : vector<8x8xf32>
    %cst_17 = arith.constant dense<0.000000e+00> : vector<8x64xf32>
    %23 = tpu.matmul %22, %11, %cst_17 {dimension_numbers = #tpu.dot_dimension_numbers<[1], [0], [0], [1], [0, 0, 1, 1], [], []>} : vector<8x8xf32>, vector<8x64xf32>, vector<8x64xf32> -> vector<8x64xf32>
    %c0_18 = arith.constant 0 : index
    %c0_19 = arith.constant 0 : index
    %c0_20 = arith.constant 0 : index
    %24 = vector.load %arg5[%c0_18, %c0_19, %c0_20] : memref<8x64x32xf32, #tpu.memory_space<vmem>>, vector<1x64x32xf32>
    %25 = vector.shape_cast %24 : vector<1x64x32xf32> to vector<64x32xf32>
    %cst_21 = arith.constant dense<0.000000e+00> : vector<8x32xf32>
    %26 = tpu.matmul %23, %25, %cst_21 {dimension_numbers = #tpu.dot_dimension_numbers<[1], [0], [0], [1], [0, 0, 1, 1], [], []>} : vector<8x64xf32>, vector<64x32xf32>, vector<8x32xf32> -> vector<8x32xf32>
    %27 = arith.addf %2, %26 : vector<8x32xf32>
    %c1 = arith.constant 1 : index
    %c0_22 = arith.constant 0 : index
    %c0_23 = arith.constant 0 : index
    %28 = vector.load %arg2[%c1, %c0_22, %c0_23] : memref<8x32x64xf32, #tpu.memory_space<vmem>>, vector<1x32x64xf32>
    %29 = vector.shape_cast %28 : vector<1x32x64xf32> to vector<32x64xf32>
    %cst_24 = arith.constant dense<0.000000e+00> : vector<8x64xf32>
    %30 = tpu.matmul %1, %29, %cst_24 {dimension_numbers = #tpu.dot_dimension_numbers<[1], [0], [0], [1], [0, 0, 1, 1], [], []>} : vector<8x32xf32>, vector<32x64xf32>, vector<8x64xf32> -> vector<8x64xf32>
    %c1_25 = arith.constant 1 : index
    %c0_26 = arith.constant 0 : index
    %c0_27 = arith.constant 0 : index
    %31 = vector.load %arg3[%c1_25, %c0_26, %c0_27] : memref<8x32x64xf32, #tpu.memory_space<vmem>>, vector<1x32x64xf32>
    %32 = vector.shape_cast %31 : vector<1x32x64xf32> to vector<32x64xf32>
    %cst_28 = arith.constant dense<0.000000e+00> : vector<8x64xf32>
    %33 = tpu.matmul %1, %32, %cst_28 {dimension_numbers = #tpu.dot_dimension_numbers<[1], [0], [0], [1], [0, 0, 1, 1], [], []>} : vector<8x32xf32>, vector<32x64xf32>, vector<8x64xf32> -> vector<8x64xf32>
    %c1_29 = arith.constant 1 : index
    %c0_30 = arith.constant 0 : index
    %c0_31 = arith.constant 0 : index
    %34 = vector.load %arg4[%c1_29, %c0_30, %c0_31] : memref<8x32x64xf32, #tpu.memory_space<vmem>>, vector<1x32x64xf32>
    %35 = vector.shape_cast %34 : vector<1x32x64xf32> to vector<32x64xf32>
    %cst_32 = arith.constant dense<0.000000e+00> : vector<8x64xf32>
    %36 = tpu.matmul %1, %35, %cst_32 {dimension_numbers = #tpu.dot_dimension_numbers<[1], [0], [0], [1], [0, 0, 1, 1], [], []>} : vector<8x32xf32>, vector<32x64xf32>, vector<8x64xf32> -> vector<8x64xf32>
    %cst_33 = arith.constant dense<0.000000e+00> : vector<8x8xf32>
    %37 = tpu.matmul %30, %33, %cst_33 {dimension_numbers = #tpu.dot_dimension_numbers<[1], [1], [0], [0], [0, 0, 1, 0], [], []>} : vector<8x64xf32>, vector<8x64xf32>, vector<8x8xf32> -> vector<8x8xf32>
    %cst_34 = arith.constant dense<0xFF800000> : vector<8xf32>
    %38 = vector.multi_reduction <maximumf>, %37, %cst_34 [1] : vector<8x8xf32> to vector<8xf32>
    %39 = vector.shape_cast %38 : vector<8xf32> to vector<8x1xf32>
    %40 = vector.broadcast %39 : vector<8x1xf32> to vector<8x8xf32>
    %41 = arith.subf %37, %40 : vector<8x8xf32>
    %42 = math.exp %41 : vector<8x8xf32>
    %cst_35 = arith.constant dense<0.000000e+00> : vector<8xf32>
    %43 = vector.multi_reduction <add>, %42, %cst_35 [1] : vector<8x8xf32> to vector<8xf32>
    %44 = vector.shape_cast %43 : vector<8xf32> to vector<8x1xf32>
    %45 = tpu.reciprocal %44 {approx = true} : vector<8x1xf32> -> vector<8x1xf32>
    %46 = vector.broadcast %45 : vector<8x1xf32> to vector<8x8xf32>
    %47 = arith.mulf %42, %46 : vector<8x8xf32>
    %cst_36 = arith.constant dense<0.000000e+00> : vector<8x64xf32>
    %48 = tpu.matmul %47, %36, %cst_36 {dimension_numbers = #tpu.dot_dimension_numbers<[1], [0], [0], [1], [0, 0, 1, 1], [], []>} : vector<8x8xf32>, vector<8x64xf32>, vector<8x64xf32> -> vector<8x64xf32>
    %c1_37 = arith.constant 1 : index
    %c0_38 = arith.constant 0 : index
    %c0_39 = arith.constant 0 : index
    %49 = vector.load %arg5[%c1_37, %c0_38, %c0_39] : memref<8x64x32xf32, #tpu.memory_space<vmem>>, vector<1x64x32xf32>
    %50 = vector.shape_cast %49 : vector<1x64x32xf32> to vector<64x32xf32>
    %cst_40 = arith.constant dense<0.000000e+00> : vector<8x32xf32>
    %51 = tpu.matmul %48, %50, %cst_40 {dimension_numbers = #tpu.dot_dimension_numbers<[1], [0], [0], [1], [0, 0, 1, 1], [], []>} : vector<8x64xf32>, vector<64x32xf32>, vector<8x32xf32> -> vector<8x32xf32>
    %52 = arith.addf %27, %51 : vector<8x32xf32>
    %c2 = arith.constant 2 : index
    %c0_41 = arith.constant 0 : index
    %c0_42 = arith.constant 0 : index
    %53 = vector.load %arg2[%c2, %c0_41, %c0_42] : memref<8x32x64xf32, #tpu.memory_space<vmem>>, vector<1x32x64xf32>
    %54 = vector.shape_cast %53 : vector<1x32x64xf32> to vector<32x64xf32>
    %cst_43 = arith.constant dense<0.000000e+00> : vector<8x64xf32>
    %55 = tpu.matmul %1, %54, %cst_43 {dimension_numbers = #tpu.dot_dimension_numbers<[1], [0], [0], [1], [0, 0, 1, 1], [], []>} : vector<8x32xf32>, vector<32x64xf32>, vector<8x64xf32> -> vector<8x64xf32>
    %c2_44 = arith.constant 2 : index
    %c0_45 = arith.constant 0 : index
    %c0_46 = arith.constant 0 : index
    %56 = vector.load %arg3[%c2_44, %c0_45, %c0_46] : memref<8x32x64xf32, #tpu.memory_space<vmem>>, vector<1x32x64xf32>
    %57 = vector.shape_cast %56 : vector<1x32x64xf32> to vector<32x64xf32>
    %cst_47 = arith.constant dense<0.000000e+00> : vector<8x64xf32>
    %58 = tpu.matmul %1, %57, %cst_47 {dimension_numbers = #tpu.dot_dimension_numbers<[1], [0], [0], [1], [0, 0, 1, 1], [], []>} : vector<8x32xf32>, vector<32x64xf32>, vector<8x64xf32> -> vector<8x64xf32>
    %c2_48 = arith.constant 2 : index
    %c0_49 = arith.constant 0 : index
    %c0_50 = arith.constant 0 : index
    %59 = vector.load %arg4[%c2_48, %c0_49, %c0_50] : memref<8x32x64xf32, #tpu.memory_space<vmem>>, vector<1x32x64xf32>
    %60 = vector.shape_cast %59 : vector<1x32x64xf32> to vector<32x64xf32>
    %cst_51 = arith.constant dense<0.000000e+00> : vector<8x64xf32>
    %61 = tpu.matmul %1, %60, %cst_51 {dimension_numbers = #tpu.dot_dimension_numbers<[1], [0], [0], [1], [0, 0, 1, 1], [], []>} : vector<8x32xf32>, vector<32x64xf32>, vector<8x64xf32> -> vector<8x64xf32>
    %cst_52 = arith.constant dense<0.000000e+00> : vector<8x8xf32>
    %62 = tpu.matmul %55, %58, %cst_52 {dimension_numbers = #tpu.dot_dimension_numbers<[1], [1], [0], [0], [0, 0, 1, 0], [], []>} : vector<8x64xf32>, vector<8x64xf32>, vector<8x8xf32> -> vector<8x8xf32>
    %cst_53 = arith.constant dense<0xFF800000> : vector<8xf32>
    %63 = vector.multi_reduction <maximumf>, %62, %cst_53 [1] : vector<8x8xf32> to vector<8xf32>
    %64 = vector.shape_cast %63 : vector<8xf32> to vector<8x1xf32>
    %65 = vector.broadcast %64 : vector<8x1xf32> to vector<8x8xf32>
    %66 = arith.subf %62, %65 : vector<8x8xf32>
    %67 = math.exp %66 : vector<8x8xf32>
    %cst_54 = arith.constant dense<0.000000e+00> : vector<8xf32>
    %68 = vector.multi_reduction <add>, %67, %cst_54 [1] : vector<8x8xf32> to vector<8xf32>
    %69 = vector.shape_cast %68 : vector<8xf32> to vector<8x1xf32>
    %70 = tpu.reciprocal %69 {approx = true} : vector<8x1xf32> -> vector<8x1xf32>
    %71 = vector.broadcast %70 : vector<8x1xf32> to vector<8x8xf32>
    %72 = arith.mulf %67, %71 : vector<8x8xf32>
    %cst_55 = arith.constant dense<0.000000e+00> : vector<8x64xf32>
    %73 = tpu.matmul %72, %61, %cst_55 {dimension_numbers = #tpu.dot_dimension_numbers<[1], [0], [0], [1], [0, 0, 1, 1], [], []>} : vector<8x8xf32>, vector<8x64xf32>, vector<8x64xf32> -> vector<8x64xf32>
    %c2_56 = arith.constant 2 : index
    %c0_57 = arith.constant 0 : index
    %c0_58 = arith.constant 0 : index
    %74 = vector.load %arg5[%c2_56, %c0_57, %c0_58] : memref<8x64x32xf32, #tpu.memory_space<vmem>>, vector<1x64x32xf32>
    %75 = vector.shape_cast %74 : vector<1x64x32xf32> to vector<64x32xf32>
    %cst_59 = arith.constant dense<0.000000e+00> : vector<8x32xf32>
    %76 = tpu.matmul %73, %75, %cst_59 {dimension_numbers = #tpu.dot_dimension_numbers<[1], [0], [0], [1], [0, 0, 1, 1], [], []>} : vector<8x64xf32>, vector<64x32xf32>, vector<8x32xf32> -> vector<8x32xf32>
    %77 = arith.addf %52, %76 : vector<8x32xf32>
    %c3 = arith.constant 3 : index
    %c0_60 = arith.constant 0 : index
    %c0_61 = arith.constant 0 : index
    %78 = vector.load %arg2[%c3, %c0_60, %c0_61] : memref<8x32x64xf32, #tpu.memory_space<vmem>>, vector<1x32x64xf32>
    %79 = vector.shape_cast %78 : vector<1x32x64xf32> to vector<32x64xf32>
    %cst_62 = arith.constant dense<0.000000e+00> : vector<8x64xf32>
    %80 = tpu.matmul %1, %79, %cst_62 {dimension_numbers = #tpu.dot_dimension_numbers<[1], [0], [0], [1], [0, 0, 1, 1], [], []>} : vector<8x32xf32>, vector<32x64xf32>, vector<8x64xf32> -> vector<8x64xf32>
    %c3_63 = arith.constant 3 : index
    %c0_64 = arith.constant 0 : index
    %c0_65 = arith.constant 0 : index
    %81 = vector.load %arg3[%c3_63, %c0_64, %c0_65] : memref<8x32x64xf32, #tpu.memory_space<vmem>>, vector<1x32x64xf32>
    %82 = vector.shape_cast %81 : vector<1x32x64xf32> to vector<32x64xf32>
    %cst_66 = arith.constant dense<0.000000e+00> : vector<8x64xf32>
    %83 = tpu.matmul %1, %82, %cst_66 {dimension_numbers = #tpu.dot_dimension_numbers<[1], [0], [0], [1], [0, 0, 1, 1], [], []>} : vector<8x32xf32>, vector<32x64xf32>, vector<8x64xf32> -> vector<8x64xf32>
    %c3_67 = arith.constant 3 : index
    %c0_68 = arith.constant 0 : index
    %c0_69 = arith.constant 0 : index
    %84 = vector.load %arg4[%c3_67, %c0_68, %c0_69] : memref<8x32x64xf32, #tpu.memory_space<vmem>>, vector<1x32x64xf32>
    %85 = vector.shape_cast %84 : vector<1x32x64xf32> to vector<32x64xf32>
    %cst_70 = arith.constant dense<0.000000e+00> : vector<8x64xf32>
    %86 = tpu.matmul %1, %85, %cst_70 {dimension_numbers = #tpu.dot_dimension_numbers<[1], [0], [0], [1], [0, 0, 1, 1], [], []>} : vector<8x32xf32>, vector<32x64xf32>, vector<8x64xf32> -> vector<8x64xf32>
    %cst_71 = arith.constant dense<0.000000e+00> : vector<8x8xf32>
    %87 = tpu.matmul %80, %83, %cst_71 {dimension_numbers = #tpu.dot_dimension_numbers<[1], [1], [0], [0], [0, 0, 1, 0], [], []>} : vector<8x64xf32>, vector<8x64xf32>, vector<8x8xf32> -> vector<8x8xf32>
    %cst_72 = arith.constant dense<0xFF800000> : vector<8xf32>
    %88 = vector.multi_reduction <maximumf>, %87, %cst_72 [1] : vector<8x8xf32> to vector<8xf32>
    %89 = vector.shape_cast %88 : vector<8xf32> to vector<8x1xf32>
    %90 = vector.broadcast %89 : vector<8x1xf32> to vector<8x8xf32>
    %91 = arith.subf %87, %90 : vector<8x8xf32>
    %92 = math.exp %91 : vector<8x8xf32>
    %cst_73 = arith.constant dense<0.000000e+00> : vector<8xf32>
    %93 = vector.multi_reduction <add>, %92, %cst_73 [1] : vector<8x8xf32> to vector<8xf32>
    %94 = vector.shape_cast %93 : vector<8xf32> to vector<8x1xf32>
    %95 = tpu.reciprocal %94 {approx = true} : vector<8x1xf32> -> vector<8x1xf32>
    %96 = vector.broadcast %95 : vector<8x1xf32> to vector<8x8xf32>
    %97 = arith.mulf %92, %96 : vector<8x8xf32>
    %cst_74 = arith.constant dense<0.000000e+00> : vector<8x64xf32>
    %98 = tpu.matmul %97, %86, %cst_74 {dimension_numbers = #tpu.dot_dimension_numbers<[1], [0], [0], [1], [0, 0, 1, 1], [], []>} : vector<8x8xf32>, vector<8x64xf32>, vector<8x64xf32> -> vector<8x64xf32>
    %c3_75 = arith.constant 3 : index
    %c0_76 = arith.constant 0 : index
    %c0_77 = arith.constant 0 : index
    %99 = vector.load %arg5[%c3_75, %c0_76, %c0_77] : memref<8x64x32xf32, #tpu.memory_space<vmem>>, vector<1x64x32xf32>
    %100 = vector.shape_cast %99 : vector<1x64x32xf32> to vector<64x32xf32>
    %cst_78 = arith.constant dense<0.000000e+00> : vector<8x32xf32>
    %101 = tpu.matmul %98, %100, %cst_78 {dimension_numbers = #tpu.dot_dimension_numbers<[1], [0], [0], [1], [0, 0, 1, 1], [], []>} : vector<8x64xf32>, vector<64x32xf32>, vector<8x32xf32> -> vector<8x32xf32>
    %102 = arith.addf %77, %101 : vector<8x32xf32>
    %c4 = arith.constant 4 : index
    %c0_79 = arith.constant 0 : index
    %c0_80 = arith.constant 0 : index
    %103 = vector.load %arg2[%c4, %c0_79, %c0_80] : memref<8x32x64xf32, #tpu.memory_space<vmem>>, vector<1x32x64xf32>
    %104 = vector.shape_cast %103 : vector<1x32x64xf32> to vector<32x64xf32>
    %cst_81 = arith.constant dense<0.000000e+00> : vector<8x64xf32>
    %105 = tpu.matmul %1, %104, %cst_81 {dimension_numbers = #tpu.dot_dimension_numbers<[1], [0], [0], [1], [0, 0, 1, 1], [], []>} : vector<8x32xf32>, vector<32x64xf32>, vector<8x64xf32> -> vector<8x64xf32>
    %c4_82 = arith.constant 4 : index
    %c0_83 = arith.constant 0 : index
    %c0_84 = arith.constant 0 : index
    %106 = vector.load %arg3[%c4_82, %c0_83, %c0_84] : memref<8x32x64xf32, #tpu.memory_space<vmem>>, vector<1x32x64xf32>
    %107 = vector.shape_cast %106 : vector<1x32x64xf32> to vector<32x64xf32>
    %cst_85 = arith.constant dense<0.000000e+00> : vector<8x64xf32>
    %108 = tpu.matmul %1, %107, %cst_85 {dimension_numbers = #tpu.dot_dimension_numbers<[1], [0], [0], [1], [0, 0, 1, 1], [], []>} : vector<8x32xf32>, vector<32x64xf32>, vector<8x64xf32> -> vector<8x64xf32>
    %c4_86 = arith.constant 4 : index
    %c0_87 = arith.constant 0 : index
    %c0_88 = arith.constant 0 : index
    %109 = vector.load %arg4[%c4_86, %c0_87, %c0_88] : memref<8x32x64xf32, #tpu.memory_space<vmem>>, vector<1x32x64xf32>
    %110 = vector.shape_cast %109 : vector<1x32x64xf32> to vector<32x64xf32>
    %cst_89 = arith.constant dense<0.000000e+00> : vector<8x64xf32>
    %111 = tpu.matmul %1, %110, %cst_89 {dimension_numbers = #tpu.dot_dimension_numbers<[1], [0], [0], [1], [0, 0, 1, 1], [], []>} : vector<8x32xf32>, vector<32x64xf32>, vector<8x64xf32> -> vector<8x64xf32>
    %cst_90 = arith.constant dense<0.000000e+00> : vector<8x8xf32>
    %112 = tpu.matmul %105, %108, %cst_90 {dimension_numbers = #tpu.dot_dimension_numbers<[1], [1], [0], [0], [0, 0, 1, 0], [], []>} : vector<8x64xf32>, vector<8x64xf32>, vector<8x8xf32> -> vector<8x8xf32>
    %cst_91 = arith.constant dense<0xFF800000> : vector<8xf32>
    %113 = vector.multi_reduction <maximumf>, %112, %cst_91 [1] : vector<8x8xf32> to vector<8xf32>
    %114 = vector.shape_cast %113 : vector<8xf32> to vector<8x1xf32>
    %115 = vector.broadcast %114 : vector<8x1xf32> to vector<8x8xf32>
    %116 = arith.subf %112, %115 : vector<8x8xf32>
    %117 = math.exp %116 : vector<8x8xf32>
    %cst_92 = arith.constant dense<0.000000e+00> : vector<8xf32>
    %118 = vector.multi_reduction <add>, %117, %cst_92 [1] : vector<8x8xf32> to vector<8xf32>
    %119 = vector.shape_cast %118 : vector<8xf32> to vector<8x1xf32>
    %120 = tpu.reciprocal %119 {approx = true} : vector<8x1xf32> -> vector<8x1xf32>
    %121 = vector.broadcast %120 : vector<8x1xf32> to vector<8x8xf32>
    %122 = arith.mulf %117, %121 : vector<8x8xf32>
    %cst_93 = arith.constant dense<0.000000e+00> : vector<8x64xf32>
    %123 = tpu.matmul %122, %111, %cst_93 {dimension_numbers = #tpu.dot_dimension_numbers<[1], [0], [0], [1], [0, 0, 1, 1], [], []>} : vector<8x8xf32>, vector<8x64xf32>, vector<8x64xf32> -> vector<8x64xf32>
    %c4_94 = arith.constant 4 : index
    %c0_95 = arith.constant 0 : index
    %c0_96 = arith.constant 0 : index
    %124 = vector.load %arg5[%c4_94, %c0_95, %c0_96] : memref<8x64x32xf32, #tpu.memory_space<vmem>>, vector<1x64x32xf32>
    %125 = vector.shape_cast %124 : vector<1x64x32xf32> to vector<64x32xf32>
    %cst_97 = arith.constant dense<0.000000e+00> : vector<8x32xf32>
    %126 = tpu.matmul %123, %125, %cst_97 {dimension_numbers = #tpu.dot_dimension_numbers<[1], [0], [0], [1], [0, 0, 1, 1], [], []>} : vector<8x64xf32>, vector<64x32xf32>, vector<8x32xf32> -> vector<8x32xf32>
    %127 = arith.addf %102, %126 : vector<8x32xf32>
    %c5 = arith.constant 5 : index
    %c0_98 = arith.constant 0 : index
    %c0_99 = arith.constant 0 : index
    %128 = vector.load %arg2[%c5, %c0_98, %c0_99] : memref<8x32x64xf32, #tpu.memory_space<vmem>>, vector<1x32x64xf32>
    %129 = vector.shape_cast %128 : vector<1x32x64xf32> to vector<32x64xf32>
    %cst_100 = arith.constant dense<0.000000e+00> : vector<8x64xf32>
    %130 = tpu.matmul %1, %129, %cst_100 {dimension_numbers = #tpu.dot_dimension_numbers<[1], [0], [0], [1], [0, 0, 1, 1], [], []>} : vector<8x32xf32>, vector<32x64xf32>, vector<8x64xf32> -> vector<8x64xf32>
    %c5_101 = arith.constant 5 : index
    %c0_102 = arith.constant 0 : index
    %c0_103 = arith.constant 0 : index
    %131 = vector.load %arg3[%c5_101, %c0_102, %c0_103] : memref<8x32x64xf32, #tpu.memory_space<vmem>>, vector<1x32x64xf32>
    %132 = vector.shape_cast %131 : vector<1x32x64xf32> to vector<32x64xf32>
    %cst_104 = arith.constant dense<0.000000e+00> : vector<8x64xf32>
    %133 = tpu.matmul %1, %132, %cst_104 {dimension_numbers = #tpu.dot_dimension_numbers<[1], [0], [0], [1], [0, 0, 1, 1], [], []>} : vector<8x32xf32>, vector<32x64xf32>, vector<8x64xf32> -> vector<8x64xf32>
    %c5_105 = arith.constant 5 : index
    %c0_106 = arith.constant 0 : index
    %c0_107 = arith.constant 0 : index
    %134 = vector.load %arg4[%c5_105, %c0_106, %c0_107] : memref<8x32x64xf32, #tpu.memory_space<vmem>>, vector<1x32x64xf32>
    %135 = vector.shape_cast %134 : vector<1x32x64xf32> to vector<32x64xf32>
    %cst_108 = arith.constant dense<0.000000e+00> : vector<8x64xf32>
    %136 = tpu.matmul %1, %135, %cst_108 {dimension_numbers = #tpu.dot_dimension_numbers<[1], [0], [0], [1], [0, 0, 1, 1], [], []>} : vector<8x32xf32>, vector<32x64xf32>, vector<8x64xf32> -> vector<8x64xf32>
    %cst_109 = arith.constant dense<0.000000e+00> : vector<8x8xf32>
    %137 = tpu.matmul %130, %133, %cst_109 {dimension_numbers = #tpu.dot_dimension_numbers<[1], [1], [0], [0], [0, 0, 1, 0], [], []>} : vector<8x64xf32>, vector<8x64xf32>, vector<8x8xf32> -> vector<8x8xf32>
    %cst_110 = arith.constant dense<0xFF800000> : vector<8xf32>
    %138 = vector.multi_reduction <maximumf>, %137, %cst_110 [1] : vector<8x8xf32> to vector<8xf32>
    %139 = vector.shape_cast %138 : vector<8xf32> to vector<8x1xf32>
    %140 = vector.broadcast %139 : vector<8x1xf32> to vector<8x8xf32>
    %141 = arith.subf %137, %140 : vector<8x8xf32>
    %142 = math.exp %141 : vector<8x8xf32>
    %cst_111 = arith.constant dense<0.000000e+00> : vector<8xf32>
    %143 = vector.multi_reduction <add>, %142, %cst_111 [1] : vector<8x8xf32> to vector<8xf32>
    %144 = vector.shape_cast %143 : vector<8xf32> to vector<8x1xf32>
    %145 = tpu.reciprocal %144 {approx = true} : vector<8x1xf32> -> vector<8x1xf32>
    %146 = vector.broadcast %145 : vector<8x1xf32> to vector<8x8xf32>
    %147 = arith.mulf %142, %146 : vector<8x8xf32>
    %cst_112 = arith.constant dense<0.000000e+00> : vector<8x64xf32>
    %148 = tpu.matmul %147, %136, %cst_112 {dimension_numbers = #tpu.dot_dimension_numbers<[1], [0], [0], [1], [0, 0, 1, 1], [], []>} : vector<8x8xf32>, vector<8x64xf32>, vector<8x64xf32> -> vector<8x64xf32>
    %c5_113 = arith.constant 5 : index
    %c0_114 = arith.constant 0 : index
    %c0_115 = arith.constant 0 : index
    %149 = vector.load %arg5[%c5_113, %c0_114, %c0_115] : memref<8x64x32xf32, #tpu.memory_space<vmem>>, vector<1x64x32xf32>
    %150 = vector.shape_cast %149 : vector<1x64x32xf32> to vector<64x32xf32>
    %cst_116 = arith.constant dense<0.000000e+00> : vector<8x32xf32>
    %151 = tpu.matmul %148, %150, %cst_116 {dimension_numbers = #tpu.dot_dimension_numbers<[1], [0], [0], [1], [0, 0, 1, 1], [], []>} : vector<8x64xf32>, vector<64x32xf32>, vector<8x32xf32> -> vector<8x32xf32>
    %152 = arith.addf %127, %151 : vector<8x32xf32>
    %c6 = arith.constant 6 : index
    %c0_117 = arith.constant 0 : index
    %c0_118 = arith.constant 0 : index
    %153 = vector.load %arg2[%c6, %c0_117, %c0_118] : memref<8x32x64xf32, #tpu.memory_space<vmem>>, vector<1x32x64xf32>
    %154 = vector.shape_cast %153 : vector<1x32x64xf32> to vector<32x64xf32>
    %cst_119 = arith.constant dense<0.000000e+00> : vector<8x64xf32>
    %155 = tpu.matmul %1, %154, %cst_119 {dimension_numbers = #tpu.dot_dimension_numbers<[1], [0], [0], [1], [0, 0, 1, 1], [], []>} : vector<8x32xf32>, vector<32x64xf32>, vector<8x64xf32> -> vector<8x64xf32>
    %c6_120 = arith.constant 6 : index
    %c0_121 = arith.constant 0 : index
    %c0_122 = arith.constant 0 : index
    %156 = vector.load %arg3[%c6_120, %c0_121, %c0_122] : memref<8x32x64xf32, #tpu.memory_space<vmem>>, vector<1x32x64xf32>
    %157 = vector.shape_cast %156 : vector<1x32x64xf32> to vector<32x64xf32>
    %cst_123 = arith.constant dense<0.000000e+00> : vector<8x64xf32>
    %158 = tpu.matmul %1, %157, %cst_123 {dimension_numbers = #tpu.dot_dimension_numbers<[1], [0], [0], [1], [0, 0, 1, 1], [], []>} : vector<8x32xf32>, vector<32x64xf32>, vector<8x64xf32> -> vector<8x64xf32>
    %c6_124 = arith.constant 6 : index
    %c0_125 = arith.constant 0 : index
    %c0_126 = arith.constant 0 : index
    %159 = vector.load %arg4[%c6_124, %c0_125, %c0_126] : memref<8x32x64xf32, #tpu.memory_space<vmem>>, vector<1x32x64xf32>
    %160 = vector.shape_cast %159 : vector<1x32x64xf32> to vector<32x64xf32>
    %cst_127 = arith.constant dense<0.000000e+00> : vector<8x64xf32>
    %161 = tpu.matmul %1, %160, %cst_127 {dimension_numbers = #tpu.dot_dimension_numbers<[1], [0], [0], [1], [0, 0, 1, 1], [], []>} : vector<8x32xf32>, vector<32x64xf32>, vector<8x64xf32> -> vector<8x64xf32>
    %cst_128 = arith.constant dense<0.000000e+00> : vector<8x8xf32>
    %162 = tpu.matmul %155, %158, %cst_128 {dimension_numbers = #tpu.dot_dimension_numbers<[1], [1], [0], [0], [0, 0, 1, 0], [], []>} : vector<8x64xf32>, vector<8x64xf32>, vector<8x8xf32> -> vector<8x8xf32>
    %cst_129 = arith.constant dense<0xFF800000> : vector<8xf32>
    %163 = vector.multi_reduction <maximumf>, %162, %cst_129 [1] : vector<8x8xf32> to vector<8xf32>
    %164 = vector.shape_cast %163 : vector<8xf32> to vector<8x1xf32>
    %165 = vector.broadcast %164 : vector<8x1xf32> to vector<8x8xf32>
    %166 = arith.subf %162, %165 : vector<8x8xf32>
    %167 = math.exp %166 : vector<8x8xf32>
    %cst_130 = arith.constant dense<0.000000e+00> : vector<8xf32>
    %168 = vector.multi_reduction <add>, %167, %cst_130 [1] : vector<8x8xf32> to vector<8xf32>
    %169 = vector.shape_cast %168 : vector<8xf32> to vector<8x1xf32>
    %170 = tpu.reciprocal %169 {approx = true} : vector<8x1xf32> -> vector<8x1xf32>
    %171 = vector.broadcast %170 : vector<8x1xf32> to vector<8x8xf32>
    %172 = arith.mulf %167, %171 : vector<8x8xf32>
    %cst_131 = arith.constant dense<0.000000e+00> : vector<8x64xf32>
    %173 = tpu.matmul %172, %161, %cst_131 {dimension_numbers = #tpu.dot_dimension_numbers<[1], [0], [0], [1], [0, 0, 1, 1], [], []>} : vector<8x8xf32>, vector<8x64xf32>, vector<8x64xf32> -> vector<8x64xf32>
    %c6_132 = arith.constant 6 : index
    %c0_133 = arith.constant 0 : index
    %c0_134 = arith.constant 0 : index
    %174 = vector.load %arg5[%c6_132, %c0_133, %c0_134] : memref<8x64x32xf32, #tpu.memory_space<vmem>>, vector<1x64x32xf32>
    %175 = vector.shape_cast %174 : vector<1x64x32xf32> to vector<64x32xf32>
    %cst_135 = arith.constant dense<0.000000e+00> : vector<8x32xf32>
    %176 = tpu.matmul %173, %175, %cst_135 {dimension_numbers = #tpu.dot_dimension_numbers<[1], [0], [0], [1], [0, 0, 1, 1], [], []>} : vector<8x64xf32>, vector<64x32xf32>, vector<8x32xf32> -> vector<8x32xf32>
    %177 = arith.addf %152, %176 : vector<8x32xf32>
    %c7 = arith.constant 7 : index
    %c0_136 = arith.constant 0 : index
    %c0_137 = arith.constant 0 : index
    %178 = vector.load %arg2[%c7, %c0_136, %c0_137] : memref<8x32x64xf32, #tpu.memory_space<vmem>>, vector<1x32x64xf32>
    %179 = vector.shape_cast %178 : vector<1x32x64xf32> to vector<32x64xf32>
    %cst_138 = arith.constant dense<0.000000e+00> : vector<8x64xf32>
    %180 = tpu.matmul %1, %179, %cst_138 {dimension_numbers = #tpu.dot_dimension_numbers<[1], [0], [0], [1], [0, 0, 1, 1], [], []>} : vector<8x32xf32>, vector<32x64xf32>, vector<8x64xf32> -> vector<8x64xf32>
    %c7_139 = arith.constant 7 : index
    %c0_140 = arith.constant 0 : index
    %c0_141 = arith.constant 0 : index
    %181 = vector.load %arg3[%c7_139, %c0_140, %c0_141] : memref<8x32x64xf32, #tpu.memory_space<vmem>>, vector<1x32x64xf32>
    %182 = vector.shape_cast %181 : vector<1x32x64xf32> to vector<32x64xf32>
    %cst_142 = arith.constant dense<0.000000e+00> : vector<8x64xf32>
    %183 = tpu.matmul %1, %182, %cst_142 {dimension_numbers = #tpu.dot_dimension_numbers<[1], [0], [0], [1], [0, 0, 1, 1], [], []>} : vector<8x32xf32>, vector<32x64xf32>, vector<8x64xf32> -> vector<8x64xf32>
    %c7_143 = arith.constant 7 : index
    %c0_144 = arith.constant 0 : index
    %c0_145 = arith.constant 0 : index
    %184 = vector.load %arg4[%c7_143, %c0_144, %c0_145] : memref<8x32x64xf32, #tpu.memory_space<vmem>>, vector<1x32x64xf32>
    %185 = vector.shape_cast %184 : vector<1x32x64xf32> to vector<32x64xf32>
    %cst_146 = arith.constant dense<0.000000e+00> : vector<8x64xf32>
    %186 = tpu.matmul %1, %185, %cst_146 {dimension_numbers = #tpu.dot_dimension_numbers<[1], [0], [0], [1], [0, 0, 1, 1], [], []>} : vector<8x32xf32>, vector<32x64xf32>, vector<8x64xf32> -> vector<8x64xf32>
    %cst_147 = arith.constant dense<0.000000e+00> : vector<8x8xf32>
    %187 = tpu.matmul %180, %183, %cst_147 {dimension_numbers = #tpu.dot_dimension_numbers<[1], [1], [0], [0], [0, 0, 1, 0], [], []>} : vector<8x64xf32>, vector<8x64xf32>, vector<8x8xf32> -> vector<8x8xf32>
    %cst_148 = arith.constant dense<0xFF800000> : vector<8xf32>
    %188 = vector.multi_reduction <maximumf>, %187, %cst_148 [1] : vector<8x8xf32> to vector<8xf32>
    %189 = vector.shape_cast %188 : vector<8xf32> to vector<8x1xf32>
    %190 = vector.broadcast %189 : vector<8x1xf32> to vector<8x8xf32>
    %191 = arith.subf %187, %190 : vector<8x8xf32>
    %192 = math.exp %191 : vector<8x8xf32>
    %cst_149 = arith.constant dense<0.000000e+00> : vector<8xf32>
    %193 = vector.multi_reduction <add>, %192, %cst_149 [1] : vector<8x8xf32> to vector<8xf32>
    %194 = vector.shape_cast %193 : vector<8xf32> to vector<8x1xf32>
    %195 = tpu.reciprocal %194 {approx = true} : vector<8x1xf32> -> vector<8x1xf32>
    %196 = vector.broadcast %195 : vector<8x1xf32> to vector<8x8xf32>
    %197 = arith.mulf %192, %196 : vector<8x8xf32>
    %cst_150 = arith.constant dense<0.000000e+00> : vector<8x64xf32>
    %198 = tpu.matmul %197, %186, %cst_150 {dimension_numbers = #tpu.dot_dimension_numbers<[1], [0], [0], [1], [0, 0, 1, 1], [], []>} : vector<8x8xf32>, vector<8x64xf32>, vector<8x64xf32> -> vector<8x64xf32>
    %c7_151 = arith.constant 7 : index
    %c0_152 = arith.constant 0 : index
    %c0_153 = arith.constant 0 : index
    %199 = vector.load %arg5[%c7_151, %c0_152, %c0_153] : memref<8x64x32xf32, #tpu.memory_space<vmem>>, vector<1x64x32xf32>
    %200 = vector.shape_cast %199 : vector<1x64x32xf32> to vector<64x32xf32>
    %cst_154 = arith.constant dense<0.000000e+00> : vector<8x32xf32>
    %201 = tpu.matmul %198, %200, %cst_154 {dimension_numbers = #tpu.dot_dimension_numbers<[1], [0], [0], [1], [0, 0, 1, 1], [], []>} : vector<8x64xf32>, vector<64x32xf32>, vector<8x32xf32> -> vector<8x32xf32>
    %202 = arith.addf %177, %201 : vector<8x32xf32>
    %c0_155 = arith.constant 0 : index
    %c0_156 = arith.constant 0 : index
    %203 = vector.load %arg6[%c0_155, %c0_156] : memref<1x32xf32, #tpu.memory_space<vmem>>, vector<1x32xf32>
    %204 = vector.broadcast %203 : vector<1x32xf32> to vector<8x32xf32>
    %205 = arith.addf %202, %204 : vector<8x32xf32>
    %c0_157 = arith.constant 0 : index
    %c0_158 = arith.constant 0 : index
    %c0_159 = arith.constant 0 : index
    %206 = vector.load %arg7[%c0_157, %c0_158, %c0_159] : memref<1x8x32xf32, #tpu.memory_space<vmem>>, vector<1x8x32xf32>
    %207 = vector.shape_cast %206 : vector<1x8x32xf32> to vector<8x32xf32>
    %208 = vector.shape_cast %205 : vector<8x32xf32> to vector<1x8x32xf32>
    tpu.vector_store %arg7[%c0_157, %c0_158, %c0_159], %208 {strides = array<i32>} : memref<1x8x32xf32, #tpu.memory_space<vmem>>, vector<1x8x32xf32>,
    return
  }
  func.func @transform_0(%arg0: i32) -> (i32, i32, i32) {
    %c0_i32 = arith.constant 0 : i32
    %c0_i32_0 = arith.constant 0 : i32
    %c0_i32_1 = arith.constant 0 : i32
    return %arg0, %c0_i32, %c0_i32_0 : i32, i32, i32
  }
  func.func @transform_1(%arg0: i32) -> (i32, i32, i32) {
    %c0_i32 = arith.constant 0 : i32
    %c0_i32_0 = arith.constant 0 : i32
    %c0_i32_1 = arith.constant 0 : i32
    %c0_i32_2 = arith.constant 0 : i32
    return %c0_i32, %c0_i32_0, %c0_i32_1 : i32, i32, i32
  }
  func.func @transform_2(%arg0: i32) -> (i32, i32, i32) {
    %c0_i32 = arith.constant 0 : i32
    %c0_i32_0 = arith.constant 0 : i32
    %c0_i32_1 = arith.constant 0 : i32
    %c0_i32_2 = arith.constant 0 : i32
    return %c0_i32, %c0_i32_0, %c0_i32_1 : i32, i32, i32
  }
  func.func @transform_3(%arg0: i32) -> (i32, i32, i32) {
    %c0_i32 = arith.constant 0 : i32
    %c0_i32_0 = arith.constant 0 : i32
    %c0_i32_1 = arith.constant 0 : i32
    %c0_i32_2 = arith.constant 0 : i32
    return %c0_i32, %c0_i32_0, %c0_i32_1 : i32, i32, i32
  }
  func.func @transform_4(%arg0: i32) -> (i32, i32, i32) {
    %c0_i32 = arith.constant 0 : i32
    %c0_i32_0 = arith.constant 0 : i32
    %c0_i32_1 = arith.constant 0 : i32
    %c0_i32_2 = arith.constant 0 : i32
    return %c0_i32, %c0_i32_0, %c0_i32_1 : i32, i32, i32
  }
  func.func @transform_5(%arg0: i32) -> (i32, i32) {
    %c0_i32 = arith.constant 0 : i32
    %c0_i32_0 = arith.constant 0 : i32
    %c0_i32_1 = arith.constant 0 : i32
    return %c0_i32, %c0_i32_0 : i32, i32
  }
  func.func @transform_6(%arg0: i32) -> (i32, i32, i32) {
    %c0_i32 = arith.constant 0 : i32
    %c0_i32_0 = arith.constant 0 : i32
    %c0_i32_1 = arith.constant 0 : i32
    return %arg0, %c0_i32, %c0_i32_0 : i32, i32, i32
  }
}

</mosaic_0001>

<llo_original>
// kernel: attention_forward.1
$region0: #{attention_forward.1}
  #allocation0 [shape = 'u32[]', space=smem, size = 0x4, offset = 0x4, fixed_abs, tag = 'smem constant byte address 0x4 - core index']
  #allocation1 [shape = 'u32[144,128]{1,0:T(1,128)}', space=vmem, size = 0x12000, scoped, tag = 'internal scratch']
  %s0 = inlined_call_operand.vmem [shape: f32[2,8,32], index: 0, kind: input, shape index: {}]
  %s1 = inlined_call_operand.vmem [shape: f32[8,32,64], index: 1, kind: input, shape index: {}]
  %s2 = inlined_call_operand.vmem [shape: f32[8,32,64], index: 2, kind: input, shape index: {}]
  %s3 = inlined_call_operand.vmem [shape: f32[8,32,64], index: 3, kind: input, shape index: {}]
  %s4 = inlined_call_operand.vmem [shape: f32[8,64,32], index: 4, kind: input, shape index: {}]
  %s5 = inlined_call_operand.vmem [shape: f32[1,32], index: 5, kind: input, shape index: {}]
  %s6 = inlined_call_operand.hbm [shape: f32[2,8,32], index: 6, kind: output, shape index: {}]
  %s7 = sld [smem:[#allocation0]]
  $region57: #{attention_forward.1} parent=0
    _
  %s9 = ssub.s32 1, %s7
  %s10 = scalar_select 0, %s9, %s7
  $region1: #{attention_forward.1} parent=0
    #allocation2 [shape = 'u8[8192]{0}', space=vmem, size = 0x2000, scoped, tag = 'output window, operand 0']
    #allocation3 [shape = 's32[2]{0}', space=sflag, size = 0x8, scoped, tag = 'scoped memory for attention_forward.1']
    %11 = vsyncpa [#allocation3], 0
    %s12 = scalar_lea.sflag [#allocation3], 1
    %13 = vsyncpa %s12, 0
    loop: start=0, step=1, limit=4
    $region2: #{attention_forward.1} parent=1 // loop_pre_header
      _
    $region3: #{attention_forward.1} parent=1 // loop_header
      %s15 = sphi 0, %s19
      %p16 = scmp.ge.s32.totalorder %s15, 4
      %s25 = sphi 0, %s27
      %s28 = sphi 0, %s25
      %s29 = sphi 0, %s28
      %s45 = sphi 0, %s29
      %s49 = sphi 0, %s49
      %s51 = sphi 0, %s49
      %s52 = sphi 0, %s51
      %s66 = sphi 0, %s52
      %s70 = sphi 0, %s70
      %s72 = sphi 0, %s70
      %s73 = sphi 0, %s72
      %s87 = sphi 0, %s73
      %s91 = sphi 0, %s91
      %s93 = sphi 0, %s91
      %s94 = sphi 0, %s93
      %s108 = sphi 0, %s94
      %s112 = sphi 0, %s112
      %s114 = sphi 0, %s112
      %s115 = sphi 0, %s114
      %s129 = sphi 0, %s115
      %s133 = sphi 0, %s133
      %s135 = sphi 0, %s133
      %s136 = sphi 0, %s135
      %s150 = sphi 0, %s136
      %s156 = sphi 0, %s158
      %s159 = sphi 0, %s156
      %s160 = sphi 0, %s159
      %s176 = sphi 0, %s160
    $region4: #{attention_forward.1} parent=1 // loop_header_branch
      %18 = sbr.rel (%p16) target = $region8
    $region5: #{attention_forward.1} parent=1 // loop_body
      %s20 = ssub.s32 %s15, 1
      %s21 = ssub.s32 %s15, 2
      %s22 = sadd.s32 %s15, 1
      %s23 = ssub.s32 %s15, %s22
      %p24 = scmp.eq.s32.totalorder %s23, 0
      %s26 = sadd.s32 %s25, 1
      %s27 = scalar_select %p24, %s25, %s26
      %p30 = pneg %p24
      %p31 = scmp.eq.s32.totalorder %s15, 1
      %p32 = por %p30, %p31
      %p33 = scmp.ne.s32.totalorder %s25, %s28
      %p34 = scmp.eq.s32.totalorder %s15, 0
      %p35 = por %p33, %p34
      %p36 = scmp.ne.s32.totalorder %s25, %s28
      %p37 = scmp.eq.s32.totalorder %s20, 1
      %p38 = por %p36, %p37
      %p39 = scmp.ne.s32.totalorder %s28, %s29
      %p40 = scmp.eq.s32.totalorder %s20, 0
      %p41 = por %p39, %p40
      %p42 = scmp.ne.s32.totalorder %s28, %s29
      %p43 = scmp.eq.s32.totalorder %s21, 1
      %p44 = por %p42, %p43
      %p46 = scmp.ne.s32.totalorder %s29, %s45
      %p47 = scmp.eq.s32.totalorder %s21, 0
      %p48 = por %p46, %p47
      %s50 = sadd.s32 %s49, 1
      %p53 = scmp.eq.s32.totalorder %s15, 1
      %p54 = scmp.ne.s32.totalorder %s49, %s51
      %p55 = scmp.eq.s32.totalorder %s15, 0
      %p56 = por %p54, %p55
      %p57 = scmp.ne.s32.totalorder %s49, %s51
      %p58 = scmp.eq.s32.totalorder %s20, 1
      %p59 = por %p57, %p58
      %p60 = scmp.ne.s32.totalorder %s51, %s52
      %p61 = scmp.eq.s32.totalorder %s20, 0
      %p62 = por %p60, %p61
      %p63 = scmp.ne.s32.totalorder %s51, %s52
      %p64 = scmp.eq.s32.totalorder %s21, 1
      %p65 = por %p63, %p64
      %p67 = scmp.ne.s32.totalorder %s52, %s66
      %p68 = scmp.eq.s32.totalorder %s21, 0
      %p69 = por %p67, %p68
      %s71 = sadd.s32 %s70, 1
      %p74 = scmp.eq.s32.totalorder %s15, 1
      %p75 = scmp.ne.s32.totalorder %s70, %s72
      %p76 = scmp.eq.s32.totalorder %s15, 0
      %p77 = por %p75, %p76
      %p78 = scmp.ne.s32.totalorder %s70, %s72
      %p79 = scmp.eq.s32.totalorder %s20, 1
      %p80 = por %p78, %p79
      %p81 = scmp.ne.s32.totalorder %s72, %s73
      %p82 = scmp.eq.s32.totalorder %s20, 0
      %p83 = por %p81, %p82
      %p84 = scmp.ne.s32.totalorder %s72, %s73
      %p85 = scmp.eq.s32.totalorder %s21, 1
      %p86 = por %p84, %p85
      %p88 = scmp.ne.s32.totalorder %s73, %s87
      %p89 = scmp.eq.s32.totalorder %s21, 0
      %p90 = por %p88, %p89
      %s92 = sadd.s32 %s91, 1
      %p95 = scmp.eq.s32.totalorder %s15, 1
      %p96 = scmp.ne.s32.totalorder %s91, %s93
      %p97 = scmp.eq.s32.totalorder %s15, 0
      %p98 = por %p96, %p97
      %p99 = scmp.ne.s32.totalorder %s91, %s93
      %p100 = scmp.eq.s32.totalorder %s20, 1
      %p101 = por %p99, %p100
      %p102 = scmp.ne.s32.totalorder %s93, %s94
      %p103 = scmp.eq.s32.totalorder %s20, 0
      %p104 = por %p102, %p103
      %p105 = scmp.ne.s32.totalorder %s93, %s94
      %p106 = scmp.eq.s32.totalorder %s21, 1
      %p107 = por %p105, %p106
      %p109 = scmp.ne.s32.totalorder %s94, %s108
      %p110 = scmp.eq.s32.totalorder %s21, 0
      %p111 = por %p109, %p110
      %s113 = sadd.s32 %s112, 1
      %p116 = scmp.eq.s32.totalorder %s15, 1
      %p117 = scmp.ne.s32.totalorder %s112, %s114
      %p118 = scmp.eq.s32.totalorder %s15, 0
      %p119 = por %p117, %p118
      %p120 = scmp.ne.s32.totalorder %s112, %s114
      %p121 = scmp.eq.s32.totalorder %s20, 1
      %p122 = por %p120, %p121
      %p123 = scmp.ne.s32.totalorder %s114, %s115
      %p124 = scmp.eq.s32.totalorder %s20, 0
      %p125 = por %p123, %p124
      %p126 = scmp.ne.s32.totalorder %s114, %s115
      %p127 = scmp.eq.s32.totalorder %s21, 1
      %p128 = por %p126, %p127
      %p130 = scmp.ne.s32.totalorder %s115, %s129
      %p131 = scmp.eq.s32.totalorder %s21, 0
      %p132 = por %p130, %p131
      %s134 = sadd.s32 %s133, 1
      %p137 = scmp.eq.s32.totalorder %s15, 1
      %p138 = scmp.ne.s32.totalorder %s133, %s135
      %p139 = scmp.eq.s32.totalorder %s15, 0
      %p140 = por %p138, %p139
      %p141 = scmp.ne.s32.totalorder %s133, %s135
      %p142 = scmp.eq.s32.totalorder %s20, 1
      %p143 = por %p141, %p142
      %p144 = scmp.ne.s32.totalorder %s135, %s136
      %p145 = scmp.eq.s32.totalorder %s20, 0
      %p146 = por %p144, %p145
      %p147 = scmp.ne.s32.totalorder %s135, %s136
      %p148 = scmp.eq.s32.totalorder %s21, 1
      %p149 = por %p147, %p148
      %p151 = scmp.ne.s32.totalorder %s136, %s150
      %p152 = scmp.eq.s32.totalorder %s21, 0
      %p153 = por %p151, %p152
      %s154 = ssub.s32 %s15, %s22
      %p155 = scmp.eq.s32.totalorder %s154, 0
      %s157 = sadd.s32 %s156, 1
      %s158 = scalar_select %p155, %s156, %s157
      %p161 = pneg %p155
      %p162 = scmp.eq.s32.totalorder %s15, 1
      %p163 = por %p161, %p162
      %p164 = scmp.ne.s32.totalorder %s156, %s159
      %p165 = scmp.eq.s32.totalorder %s15, 0
      %p166 = por %p164, %p165
      %p167 = scmp.ne.s32.totalorder %s156, %s159
      %p168 = scmp.eq.s32.totalorder %s20, 1
      %p169 = por %p167, %p168
      %p170 = scmp.ne.s32.totalorder %s159, %s160
      %p171 = scmp.eq.s32.totalorder %s20, 0
      %p172 = por %p170, %p171
      %p173 = scmp.ne.s32.totalorder %s159, %s160
      %p174 = scmp.eq.s32.totalorder %s21, 1
      %p175 = por %p173, %p174
      %p177 = scmp.ne.s32.totalorder %s160, %s176
      %p178 = scmp.eq.s32.totalorder %s21, 0
      %p179 = por %p177, %p178
      %p180 = scmp.le.s32.totalorder 1, %s15
      %p181 = scmp.lt.s32.totalorder %s15, 3
      %p182 = pnand %p180, %p181
      %p183 = pneg %p182
      // Predicated region
      $region9: #{attention_forward.1} parent=5 // pred_check
        _
      $region10: #{attention_forward.1} parent=5 // pred_check_branch
        %185 = sbr.rel (%p182) target = $region12
      $region11: #{attention_forward.1} parent=5 // pred_region
        %s186 = ssub.s32 %s15, 1
        // Predicated region
        $region13: #{attention_forward.1} parent=11 // pred_check
          %p187 = pneg %p62
        $region14: #{attention_forward.1} parent=11 // pred_check_branch
          %189 = sbr.rel (%p187) target = $region16
        $region15: #{attention_forward.1} parent=11 // pred_region
          _
        $region16: #{attention_forward.1} parent=11 // pred_fallthru
          _
        // Predicated region
        $region17: #{attention_forward.1} parent=11 // pred_check
          %p190 = pneg %p83
        $region18: #{attention_forward.1} parent=11 // pred_check_branch
          %192 = sbr.rel (%p190) target = $region20
        $region19: #{attention_forward.1} parent=11 // pred_region
          _
        $region20: #{attention_forward.1} parent=11 // pred_fallthru
          _
        // Predicated region
        $region21: #{attention_forward.1} parent=11 // pred_check
          %p193 = pneg %p104
        $region22: #{attention_forward.1} parent=11 // pred_check_branch
          %195 = sbr.rel (%p193) target = $region24
        $region23: #{attention_forward.1} parent=11 // pred_region
          _
        $region24: #{attention_forward.1} parent=11 // pred_fallthru
          _
        // Predicated region
        $region25: #{attention_forward.1} parent=11 // pred_check
          %p196 = pneg %p125
        $region26: #{attention_forward.1} parent=11 // pred_check_branch
          %198 = sbr.rel (%p196) target = $region28
        $region27: #{attention_forward.1} parent=11 // pred_region
          _
        $region28: #{attention_forward.1} parent=11 // pred_fallthru
          _
        // Predicated region
        $region29: #{attention_forward.1} parent=11 // pred_check
          %p199 = pneg %p146
        $region30: #{attention_forward.1} parent=11 // pred_check_branch
          %201 = sbr.rel (%p199) target = $region32
        $region31: #{attention_forward.1} parent=11 // pred_region
          _
        $region32: #{attention_forward.1} parent=11 // pred_fallthru
          _
      $region12: #{attention_forward.1} parent=5 // pred_fallthru
        _
      %p202 = scmp.lt.s32.totalorder %s15, 2
      // Predicated region
      $region33: #{attention_forward.1} parent=5 // pred_check
        %p203 = pneg %p202
      $region34: #{attention_forward.1} parent=5 // pred_check_branch
        %205 = sbr.rel (%p203) target = $region36
      $region35: #{attention_forward.1} parent=5 // pred_region
        // Predicated region
        $region37: #{attention_forward.1} parent=35 // pred_check
          %p206 = pneg %p35
        $region38: #{attention_forward.1} parent=35 // pred_check_branch
          %208 = sbr.rel (%p206) target = $region40
        $region39: #{attention_forward.1} parent=35 // pred_region
          %p209 = scmp.lt.s32.totalorder %s15, 1
          %s210 = scalar_select %p209, %s15, 1
          %s211 = smul.addr %s210, 8
          %s212 = scalar_lea.vmem %s0, %s211
        $region40: #{attention_forward.1} parent=35 // pred_fallthru
          _
      $region36: #{attention_forward.1} parent=5 // pred_fallthru
        _
      %p213 = scmp.le.s32.totalorder 1, %s15
      %p214 = scmp.lt.s32.totalorder %s15, 3
      %p215 = pnand %p213, %p214
      %p216 = pneg %p215
      // Predicated region
      $region41: #{attention_forward.1} parent=5 // pred_check
        _
      $region42: #{attention_forward.1} parent=5 // pred_check_branch
        %218 = sbr.rel (%p215) target = $region44
      $region43: #{attention_forward.1} parent=5 // pred_region
        %s219 = ssub.s32 %s15, 1
        %p220 = scmp.lt.s32.totalorder %s20, 1
        %s221 = scalar_select %p220, %s20, 1
        %s222 = smul.addr %s221, 8
        %s223 = scalar_lea.vmem %s0, %s222
        %p224 = pneg %p41
        %p225 = pneg %p38
        %p226 = pneg %p62
        %p227 = pneg %p59
        %p228 = pneg %p83
        %p229 = pneg %p80
        %p230 = pneg %p104
        %p231 = pneg %p101
        %p232 = pneg %p125
        %p233 = pneg %p122
        %p234 = pneg %p146
        %p235 = pneg %p143
        %p236 = pneg %p172
        %p237 = pneg %p169
        %s238 = sand.u32 %s159, 1
        %s239 = scalar_lea.sflag [#allocation3], %s238
        %s240 = sand.u32 %s159, 1
        %s241 = smul.addr %s240, 8
        %s242 = scalar_lea.vmem [#allocation2], %s241
        %p243 = scmp.lt.s32.totalorder %s20, 1
        %s244 = scalar_select %p243, %s20, 1
        %s245 = smul.addr %s244, 8
        %s246 = scalar_lea.vmem %s0, %s245
        %v247 = vld [vmem:[%s246] sm:$0xff]
        %v248 = vld [vmem:[%s1] sm:$0xff]
        %v249 = vld [vmem:[%s1 + $0x8] sm:$0xff]
        %v250 = vld [vmem:[%s1 + $0x10] sm:$0xff]
        %v251 = vld [vmem:[%s1 + $0x18] sm:$0xff]
        %vm252 = vcmask 261120
        %v254 = vsel %vm252, %v247, 0
        %256 = vmatprep.subr.mxu0 0.0
        %257 = vmatpush1.msra.mxu0 0.0
        %258 = vmatprep.subr.mxu0 0.0
        %259 = vmatpush1.msra.mxu0 0.0
        %260 = vmatprep.subr.mxu0 0.0
        %261 = vmatpush1.msra.mxu0 0.0
        %262 = vmatprep.subr.mxu0 0.0
        %263 = vmatpush1.msra.mxu0 0.0
        %264 = vmatprep.subr.mxu0 0.0
        %265 = vmatpush1.msra.mxu0 0.0
        %266 = vmatprep.subr.mxu0 0.0
        %267 = vmatpush1.msra.mxu0 0.0
        %268 = vmatprep.subr.mxu0 0.0
        %269 = vmatpush1.msra.mxu0 0.0
        %270 = vmatprep.subr.mxu0 0.0
        %271 = vmatpush1.msra.mxu0 0.0
        %272 = vmatprep.subr.mxu0 0.0
        %273 = vmatpush1.msra.mxu0 0.0
        %274 = vmatprep.subr.mxu0 0.0
        %275 = vmatpush1.msra.mxu0 0.0
        %276 = vmatprep.subr.mxu0 0.0
        %277 = vmatpush1.msra.mxu0 0.0
        %278 = vmatprep.subr.mxu0 0.0
        %279 = vmatpush1.msra.mxu0 0.0
        %280 = vmatprep.subr.mxu0 0.0
        %281 = vmatpush1.msra.mxu0 %v251
        %282 = vmatprep.subr.mxu0 0.0
        %283 = vmatpush1.msra.mxu0 %v250
        %284 = vmatprep.subr.mxu0 0.0
        %285 = vmatpush1.msra.mxu0 %v249
        %286 = vmatprep.subr.mxu0 0.0
        %287 = vmatpush1.msra.mxu0 %v248
        %288 = vmatprep.subr.mxu0 0.0
        %289 = vmatpush2.msra.mxu0 0.0
        %290 = vmatprep.subr.mxu0 0.0
        %291 = vmatpush2.msra.mxu0 0.0
        %292 = vmatprep.subr.mxu0 0.0
        %293 = vmatpush2.msra.mxu0 0.0
        %294 = vmatprep.subr.mxu0 0.0
        %295 = vmatpush2.msra.mxu0 0.0
        %296 = vmatprep.subr.mxu0 0.0
        %297 = vmatpush2.msra.mxu0 0.0
        %298 = vmatprep.subr.mxu0 0.0
        %299 = vmatpush2.msra.mxu0 0.0
        %300 = vmatprep.subr.mxu0 0.0
        %301 = vmatpush2.msra.mxu0 0.0
        %302 = vmatprep.subr.mxu0 0.0
        %303 = vmatpush2.msra.mxu0 0.0
        %304 = vmatprep.subr.mxu0 0.0
        %305 = vmatpush2.msra.mxu0 0.0
        %306 = vmatprep.subr.mxu0 0.0
        %307 = vmatpush2.msra.mxu0 0.0
        %308 = vmatprep.subr.mxu0 0.0
        %309 = vmatpush2.msra.mxu0 0.0
        %310 = vmatprep.subr.mxu0 0.0
        %311 = vmatpush2.msra.mxu0 0.0
        %312 = vmatprep.subr.mxu0 0.0
        %313 = vmatpush2.msra.mxu0 0.0
        %314 = vmatprep.subr.mxu0 0.0
        %315 = vmatpush2.msra.mxu0 0.0
        %316 = vmatprep.subr.mxu0 0.0
        %317 = vmatpush2.msra.mxu0 0.0
        %318 = vmatprep.subr.mxu0 0.0
        %319 = vmatpush2.msra.mxu0 0.0
        %320 = vmatprep.mubr.f32.mxu0 0.0
        %321 = vmatmul.mubr.f32.gmra.mxu0 %v254
        %v322 = vpop.f32.mrf.mxu0
        %v323 = vadd.f32 0.0, %v322
        %v324 = vpop.f32.mrf.mxu0
        %325 = vdwg.mxu0
        %v326 = vld [vmem:[%s2] sm:$0xff]
        %v327 = vld [vmem:[%s2 + $0x8] sm:$0xff]
        %v328 = vld [vmem:[%s2 + $0x10] sm:$0xff]
        %v329 = vld [vmem:[%s2 + $0x18] sm:$0xff]
        %330 = vmatprep.subr.mxu0 0.0
        %331 = vmatpush1.msra.mxu0 0.0
        %332 = vmatprep.subr.mxu0 0.0
        %333 = vmatpush1.msra.mxu0 0.0
        %334 = vmatprep.subr.mxu0 0.0
        %335 = vmatpush1.msra.mxu0 0.0
        %336 = vmatprep.subr.mxu0 0.0
        %337 = vmatpush1.msra.mxu0 0.0
        %338 = vmatprep.subr.mxu0 0.0
        %339 = vmatpush1.msra.mxu0 0.0
        %340 = vmatprep.subr.mxu0 0.0
        %341 = vmatpush1.msra.mxu0 0.0
        %342 = vmatprep.subr.mxu0 0.0
        %343 = vmatpush1.msra.mxu0 0.0
        %344 = vmatprep.subr.mxu0 0.0
        %345 = vmatpush1.msra.mxu0 0.0
        %346 = vmatprep.subr.mxu0 0.0
        %347 = vmatpush1.msra.mxu0 0.0
        %348 = vmatprep.subr.mxu0 0.0
        %349 = vmatpush1.msra.mxu0 0.0
        %350 = vmatprep.subr.mxu0 0.0
        %351 = vmatpush1.msra.mxu0 0.0
        %352 = vmatprep.subr.mxu0 0.0
        %353 = vmatpush1.msra.mxu0 0.0
        %354 = vmatprep.subr.mxu0 0.0
        %355 = vmatpush1.msra.mxu0 %v329
        %356 = vmatprep.subr.mxu0 0.0
        %357 = vmatpush1.msra.mxu0 %v328
        %358 = vmatprep.subr.mxu0 0.0
        %359 = vmatpush1.msra.mxu0 %v327
        %360 = vmatprep.subr.mxu0 0.0
        %361 = vmatpush1.msra.mxu0 %v326
        %362 = vmatprep.subr.mxu0 0.0
        %363 = vmatpush2.msra.mxu0 0.0
        %364 = vmatprep.subr.mxu0 0.0
        %365 = vmatpush2.msra.mxu0 0.0
        %366 = vmatprep.subr.mxu0 0.0
        %367 = vmatpush2.msra.mxu0 0.0
        %368 = vmatprep.subr.mxu0 0.0
        %369 = vmatpush2.msra.mxu0 0.0
        %370 = vmatprep.subr.mxu0 0.0
        %371 = vmatpush2.msra.mxu0 0.0
        %372 = vmatprep.subr.mxu0 0.0
        %373 = vmatpush2.msra.mxu0 0.0
        %374 = vmatprep.subr.mxu0 0.0
        %375 = vmatpush2.msra.mxu0 0.0
        %376 = vmatprep.subr.mxu0 0.0
        %377 = vmatpush2.msra.mxu0 0.0
        %378 = vmatprep.subr.mxu0 0.0
        %379 = vmatpush2.msra.mxu0 0.0
        %380 = vmatprep.subr.mxu0 0.0
        %381 = vmatpush2.msra.mxu0 0.0
        %382 = vmatprep.subr.mxu0 0.0
        %383 = vmatpush2.msra.mxu0 0.0
        %384 = vmatprep.subr.mxu0 0.0
        %385 = vmatpush2.msra.mxu0 0.0
        %386 = vmatprep.subr.mxu0 0.0
        %387 = vmatpush2.msra.mxu0 0.0
        %388 = vmatprep.subr.mxu0 0.0
        %389 = vmatpush2.msra.mxu0 0.0
        %390 = vmatprep.subr.mxu0 0.0
        %391 = vmatpush2.msra.mxu0 0.0
        %392 = vmatprep.subr.mxu0 0.0
        %393 = vmatpush2.msra.mxu0 0.0
        %394 = vmatprep.mubr.f32.mxu0 0.0
        %395 = vmatmul.mubr.f32.gmra.mxu0 %v254
        %v396 = vpop.f32.mrf.mxu0
        %v397 = vadd.f32 0.0, %v396
        %v398 = vpop.f32.mrf.mxu0
        %399 = vdwg.mxu0
        %v400 = vld [vmem:[%s3] sm:$0xff]
        %v401 = vld [vmem:[%s3 + $0x8] sm:$0xff]
        %v402 = vld [vmem:[%s3 + $0x10] sm:$0xff]
        %v403 = vld [vmem:[%s3 + $0x18] sm:$0xff]
        %404 = vmatprep.subr.mxu0 0.0
        %405 = vmatpush1.msra.mxu0 0.0
        %406 = vmatprep.subr.mxu0 0.0
        %407 = vmatpush1.msra.mxu0 0.0
        %408 = vmatprep.subr.mxu0 0.0
        %409 = vmatpush1.msra.mxu0 0.0
        %410 = vmatprep.subr.mxu0 0.0
        %411 = vmatpush1.msra.mxu0 0.0
        %412 = vmatprep.subr.mxu0 0.0
        %413 = vmatpush1.msra.mxu0 0.0
        %414 = vmatprep.subr.mxu0 0.0
        %415 = vmatpush1.msra.mxu0 0.0
        %416 = vmatprep.subr.mxu0 0.0
        %417 = vmatpush1.msra.mxu0 0.0
        %418 = vmatprep.subr.mxu0 0.0
        %419 = vmatpush1.msra.mxu0 0.0
        %420 = vmatprep.subr.mxu0 0.0
        %421 = vmatpush1.msra.mxu0 0.0
        %422 = vmatprep.subr.mxu0 0.0
        %423 = vmatpush1.msra.mxu0 0.0
        %424 = vmatprep.subr.mxu0 0.0
        %425 = vmatpush1.msra.mxu0 0.0
        %426 = vmatprep.subr.mxu0 0.0
        %427 = vmatpush1.msra.mxu0 0.0
        %428 = vmatprep.subr.mxu0 0.0
        %429 = vmatpush1.msra.mxu0 %v403
        %430 = vmatprep.subr.mxu0 0.0
        %431 = vmatpush1.msra.mxu0 %v402
        %432 = vmatprep.subr.mxu0 0.0
        %433 = vmatpush1.msra.mxu0 %v401
        %434 = vmatprep.subr.mxu0 0.0
        %435 = vmatpush1.msra.mxu0 %v400
        %436 = vmatprep.subr.mxu0 0.0
        %437 = vmatpush2.msra.mxu0 0.0
        %438 = vmatprep.subr.mxu0 0.0
        %439 = vmatpush2.msra.mxu0 0.0
        %440 = vmatprep.subr.mxu0 0.0
        %441 = vmatpush2.msra.mxu0 0.0
        %442 = vmatprep.subr.mxu0 0.0
        %443 = vmatpush2.msra.mxu0 0.0
        %444 = vmatprep.subr.mxu0 0.0
        %445 = vmatpush2.msra.mxu0 0.0
        %446 = vmatprep.subr.mxu0 0.0
        %447 = vmatpush2.msra.mxu0 0.0
        %448 = vmatprep.subr.mxu0 0.0
        %449 = vmatpush2.msra.mxu0 0.0
        %450 = vmatprep.subr.mxu0 0.0
        %451 = vmatpush2.msra.mxu0 0.0
        %452 = vmatprep.subr.mxu0 0.0
        %453 = vmatpush2.msra.mxu0 0.0
        %454 = vmatprep.subr.mxu0 0.0
        %455 = vmatpush2.msra.mxu0 0.0
        %456 = vmatprep.subr.mxu0 0.0
        %457 = vmatpush2.msra.mxu0 0.0
        %458 = vmatprep.subr.mxu0 0.0
        %459 = vmatpush2.msra.mxu0 0.0
        %460 = vmatprep.subr.mxu0 0.0
        %461 = vmatpush2.msra.mxu0 0.0
        %462 = vmatprep.subr.mxu0 0.0
        %463 = vmatpush2.msra.mxu0 0.0
        %464 = vmatprep.subr.mxu0 0.0
        %465 = vmatpush2.msra.mxu0 0.0
        %466 = vmatprep.subr.mxu0 0.0
        %467 = vmatpush2.msra.mxu0 0.0
        %468 = vmatprep.mubr.f32.mxu0 0.0
        %469 = vmatmul.mubr.f32.gmra.mxu0 %v254
        %v470 = vpop.f32.mrf.mxu0
        %v471 = vadd.f32 0.0, %v470
        %v472 = vpop.f32.mrf.mxu0
        %473 = vdwg.mxu0
        %vm474 = vcmask 523264
        %v476 = vsel %vm474, %v323, 0
        %v479 = vsel %vm474, %v397, 0
        %481 = vmatprep.subr.mxu0 0.0
        %482 = vmatpush1.xpose.msra.mxu0 0.0
        %483 = vmatprep.subr.mxu0 0.0
        %484 = vmatpush1.xpose.msra.mxu0 0.0
        %485 = vmatprep.subr.mxu0 0.0
        %486 = vmatpush1.xpose.msra.mxu0 0.0
        %487 = vmatprep.subr.mxu0 0.0
        %488 = vmatpush1.xpose.msra.mxu0 0.0
        %489 = vmatprep.subr.mxu0 0.0
        %490 = vmatpush1.xpose.msra.mxu0 0.0
        %491 = vmatprep.subr.mxu0 0.0
        %492 = vmatpush1.xpose.msra.mxu0 0.0
        %493 = vmatprep.subr.mxu0 0.0
        %494 = vmatpush1.xpose.msra.mxu0 0.0
        %495 = vmatprep.subr.mxu0 0.0
        %496 = vmatpush1.xpose.msra.mxu0 0.0
        %497 = vmatprep.subr.mxu0 0.0
        %498 = vmatpush1.xpose.msra.mxu0 0.0
        %499 = vmatprep.subr.mxu0 0.0
        %500 = vmatpush1.xpose.msra.mxu0 0.0
        %501 = vmatprep.subr.mxu0 0.0
        %502 = vmatpush1.xpose.msra.mxu0 0.0
        %503 = vmatprep.subr.mxu0 0.0
        %504 = vmatpush1.xpose.msra.mxu0 0.0
        %505 = vmatprep.subr.mxu0 0.0
        %506 = vmatpush1.xpose.msra.mxu0 0.0
        %507 = vmatprep.subr.mxu0 0.0
        %508 = vmatpush1.xpose.msra.mxu0 0.0
        %509 = vmatprep.subr.mxu0 0.0
        %510 = vmatpush1.xpose.msra.mxu0 0.0
        %511 = vmatprep.subr.mxu0 0.0
        %512 = vmatpush1.xpose.msra.mxu0 %v479
        %513 = vmatprep.subr.mxu0 0.0
        %514 = vmatpush2.xpose.msra.mxu0 0.0
        %515 = vmatprep.subr.mxu0 0.0
        %516 = vmatpush2.xpose.msra.mxu0 0.0
        %517 = vmatprep.subr.mxu0 0.0
        %518 = vmatpush2.xpose.msra.mxu0 0.0
        %519 = vmatprep.subr.mxu0 0.0
        %520 = vmatpush2.xpose.msra.mxu0 0.0
        %521 = vmatprep.subr.mxu0 0.0
        %522 = vmatpush2.xpose.msra.mxu0 0.0
        %523 = vmatprep.subr.mxu0 0.0
        %524 = vmatpush2.xpose.msra.mxu0 0.0
        %525 = vmatprep.subr.mxu0 0.0
        %526 = vmatpush2.xpose.msra.mxu0 0.0
        %527 = vmatprep.subr.mxu0 0.0
        %528 = vmatpush2.xpose.msra.mxu0 0.0
        %529 = vmatprep.subr.mxu0 0.0
        %530 = vmatpush2.xpose.msra.mxu0 0.0
        %531 = vmatprep.subr.mxu0 0.0
        %532 = vmatpush2.xpose.msra.mxu0 0.0
        %533 = vmatprep.subr.mxu0 0.0
        %534 = vmatpush2.xpose.msra.mxu0 0.0
        %535 = vmatprep.subr.mxu0 0.0
        %536 = vmatpush2.xpose.msra.mxu0 0.0
        %537 = vmatprep.subr.mxu0 0.0
        %538 = vmatpush2.xpose.msra.mxu0 0.0
        %539 = vmatprep.subr.mxu0 0.0
        %540 = vmatpush2.xpose.msra.mxu0 0.0
        %541 = vmatprep.subr.mxu0 0.0
        %542 = vmatpush2.xpose.msra.mxu0 0.0
        %543 = vmatprep.subr.mxu0 0.0
        %544 = vmatpush2.xpose.msra.mxu0 0.0
        %545 = vmatprep.mubr.f32.mxu0 0.0
        %546 = vmatmul.mubr.f32.gmra.mxu0 %v476
        %v547 = vpop.f32.mrf.mxu0
        %v548 = vadd.f32 0.0, %v547
        %v549 = vpop.f32.mrf.mxu0
        %550 = vdwg.mxu0
        %vm551 = vcmask 64512
        %v552 = vsel %vm551, %v548, -inf
        %553 = vmax.xlane.f32.xlu0 %v552
        %v554 = vpop.xlane.xlu0 %553
        %v555 = vsub.f32 %v548, %v554
        %v556 = vmul.f32 %v555, 1.442695
        %v557 = vpow.pop %v556
        %v558 = vsel %vm551, %v557, 0.0
        %559 = vadd.xlane.f32.xlu0 %v558
        %v560 = vpop.xlane.xlu0 %559
        %v561 = vrcp.pop %v560
        %v562 = vmul.f32 %v557, %v561
        %v564 = vsel %vm551, %v562, 0
        %566 = vmatprep.subr.mxu0 0.0
        %567 = vmatpush1.msra.mxu0 0.0
        %568 = vmatprep.subr.mxu0 0.0
        %569 = vmatpush1.msra.mxu0 0.0
        %570 = vmatprep.subr.mxu0 0.0
        %571 = vmatpush1.msra.mxu0 0.0
        %572 = vmatprep.subr.mxu0 0.0
        %573 = vmatpush1.msra.mxu0 0.0
        %574 = vmatprep.subr.mxu0 0.0
        %575 = vmatpush1.msra.mxu0 0.0
        %576 = vmatprep.subr.mxu0 0.0
        %577 = vmatpush1.msra.mxu0 0.0
        %578 = vmatprep.subr.mxu0 0.0
        %579 = vmatpush1.msra.mxu0 0.0
        %580 = vmatprep.subr.mxu0 0.0
        %581 = vmatpush1.msra.mxu0 0.0
        %582 = vmatprep.subr.mxu0 0.0
        %583 = vmatpush1.msra.mxu0 0.0
        %584 = vmatprep.subr.mxu0 0.0
        %585 = vmatpush1.msra.mxu0 0.0
        %586 = vmatprep.subr.mxu0 0.0
        %587 = vmatpush1.msra.mxu0 0.0
        %588 = vmatprep.subr.mxu0 0.0
        %589 = vmatpush1.msra.mxu0 0.0
        %590 = vmatprep.subr.mxu0 0.0
        %591 = vmatpush1.msra.mxu0 0.0
        %592 = vmatprep.subr.mxu0 0.0
        %593 = vmatpush1.msra.mxu0 0.0
        %594 = vmatprep.subr.mxu0 0.0
        %595 = vmatpush1.msra.mxu0 0.0
        %596 = vmatprep.subr.mxu0 0.0
        %597 = vmatpush1.msra.mxu0 %v471
        %598 = vmatprep.subr.mxu0 0.0
        %599 = vmatpush2.msra.mxu0 0.0
        %600 = vmatprep.subr.mxu0 0.0
        %601 = vmatpush2.msra.mxu0 0.0
        %602 = vmatprep.subr.mxu0 0.0
        %603 = vmatpush2.msra.mxu0 0.0
        %604 = vmatprep.subr.mxu0 0.0
        %605 = vmatpush2.msra.mxu0 0.0
        %606 = vmatprep.subr.mxu0 0.0
        %607 = vmatpush2.msra.mxu0 0.0
        %608 = vmatprep.subr.mxu0 0.0
        %609 = vmatpush2.msra.mxu0 0.0
        %610 = vmatprep.subr.mxu0 0.0
        %611 = vmatpush2.msra.mxu0 0.0
        %612 = vmatprep.subr.mxu0 0.0
        %613 = vmatpush2.msra.mxu0 0.0
        %614 = vmatprep.subr.mxu0 0.0
        %615 = vmatpush2.msra.mxu0 0.0
        %616 = vmatprep.subr.mxu0 0.0
        %617 = vmatpush2.msra.mxu0 0.0
        %618 = vmatprep.subr.mxu0 0.0
        %619 = vmatpush2.msra.mxu0 0.0
        %620 = vmatprep.subr.mxu0 0.0
        %621 = vmatpush2.msra.mxu0 0.0
        %622 = vmatprep.subr.mxu0 0.0
        %623 = vmatpush2.msra.mxu0 0.0
        %624 = vmatprep.subr.mxu0 0.0
        %625 = vmatpush2.msra.mxu0 0.0
        %626 = vmatprep.subr.mxu0 0.0
        %627 = vmatpush2.msra.mxu0 0.0
        %628 = vmatprep.subr.mxu0 0.0
        %629 = vmatpush2.msra.mxu0 0.0
        %630 = vmatprep.mubr.f32.mxu0 0.0
        %631 = vmatmul.mubr.f32.gmra.mxu0 %v564
        %v632 = vpop.f32.mrf.mxu0
        %v633 = vadd.f32 0.0, %v632
        %v634 = vpop.f32.mrf.mxu0
        %635 = vdwg.mxu0
        %v636 = vld [vmem:[%s4] sm:$0xff]
        %v637 = vld [vmem:[%s4 + $0x8] sm:$0xff]
        %v638 = vld [vmem:[%s4 + $0x10] sm:$0xff]
        %v639 = vld [vmem:[%s4 + $0x18] sm:$0xff]
        %v640 = vld [vmem:[%s4 + $0x20] sm:$0xff]
        %v641 = vld [vmem:[%s4 + $0x28] sm:$0xff]
        %v642 = vld [vmem:[%s4 + $0x30] sm:$0xff]
        %v643 = vld [vmem:[%s4 + $0x38] sm:$0xff]
        %s644 = scalar_lea.vmem %s1, 32
        %v645 = vld [vmem:[%s644] sm:$0xff]
        %v646 = vld [vmem:[%s644 + $0x8] sm:$0xff]
        %v647 = vld [vmem:[%s644 + $0x10] sm:$0xff]
        %v648 = vld [vmem:[%s644 + $0x18] sm:$0xff]
        %649 = vmatprep.subr.mxu0 0.0
        %650 = vmatpush1.msra.mxu0 0.0
        %651 = vmatprep.subr.mxu0 0.0
        %652 = vmatpush1.msra.mxu0 0.0
        %653 = vmatprep.subr.mxu0 0.0
        %654 = vmatpush1.msra.mxu0 0.0
        %655 = vmatprep.subr.mxu0 0.0
        %656 = vmatpush1.msra.mxu0 0.0
        %657 = vmatprep.subr.mxu0 0.0
        %658 = vmatpush1.msra.mxu0 0.0
        %659 = vmatprep.subr.mxu0 0.0
        %660 = vmatpush1.msra.mxu0 0.0
        %661 = vmatprep.subr.mxu0 0.0
        %662 = vmatpush1.msra.mxu0 0.0
        %663 = vmatprep.subr.mxu0 0.0
        %664 = vmatpush1.msra.mxu0 0.0
        %665 = vmatprep.subr.mxu0 0.0
        %666 = vmatpush1.msra.mxu0 0.0
        %667 = vmatprep.subr.mxu0 0.0
        %668 = vmatpush1.msra.mxu0 0.0
        %669 = vmatprep.subr.mxu0 0.0
        %670 = vmatpush1.msra.mxu0 0.0
        %671 = vmatprep.subr.mxu0 0.0
        %672 = vmatpush1.msra.mxu0 0.0
        %673 = vmatprep.subr.mxu0 0.0
        %674 = vmatpush1.msra.mxu0 %v648
        %675 = vmatprep.subr.mxu0 0.0
        %676 = vmatpush1.msra.mxu0 %v647
        %677 = vmatprep.subr.mxu0 0.0
        %678 = vmatpush1.msra.mxu0 %v646
        %679 = vmatprep.subr.mxu0 0.0
        %680 = vmatpush1.msra.mxu0 %v645
        %681 = vmatprep.subr.mxu0 0.0
        %682 = vmatpush2.msra.mxu0 0.0
        %683 = vmatprep.subr.mxu0 0.0
        %684 = vmatpush2.msra.mxu0 0.0
        %685 = vmatprep.subr.mxu0 0.0
        %686 = vmatpush2.msra.mxu0 0.0
        %687 = vmatprep.subr.mxu0 0.0
        %688 = vmatpush2.msra.mxu0 0.0
        %689 = vmatprep.subr.mxu0 0.0
        %690 = vmatpush2.msra.mxu0 0.0
        %691 = vmatprep.subr.mxu0 0.0
        %692 = vmatpush2.msra.mxu0 0.0
        %693 = vmatprep.subr.mxu0 0.0
        %694 = vmatpush2.msra.mxu0 0.0
        %695 = vmatprep.subr.mxu0 0.0
        %696 = vmatpush2.msra.mxu0 0.0
        %697 = vmatprep.subr.mxu0 0.0
        %698 = vmatpush2.msra.mxu0 0.0
        %699 = vmatprep.subr.mxu0 0.0
        %700 = vmatpush2.msra.mxu0 0.0
        %701 = vmatprep.subr.mxu0 0.0
        %702 = vmatpush2.msra.mxu0 0.0
        %703 = vmatprep.subr.mxu0 0.0
        %704 = vmatpush2.msra.mxu0 0.0
        %705 = vmatprep.subr.mxu0 0.0
        %706 = vmatpush2.msra.mxu0 0.0
        %707 = vmatprep.subr.mxu0 0.0
        %708 = vmatpush2.msra.mxu0 0.0
        %709 = vmatprep.subr.mxu0 0.0
        %710 = vmatpush2.msra.mxu0 0.0
        %711 = vmatprep.subr.mxu0 0.0
        %712 = vmatpush2.msra.mxu0 0.0
        %713 = vmatprep.mubr.f32.mxu0 0.0
        %714 = vmatmul.mubr.f32.gmra.mxu0 %v254
        %v715 = vpop.f32.mrf.mxu0
        %v716 = vadd.f32 0.0, %v715
        %v717 = vpop.f32.mrf.mxu0
        %718 = vdwg.mxu0
        %s719 = scalar_lea.vmem %s2, 32
        %v720 = vld [vmem:[%s719] sm:$0xff]
        %v721 = vld [vmem:[%s719 + $0x8] sm:$0xff]
        %v722 = vld [vmem:[%s719 + $0x10] sm:$0xff]
        %v723 = vld [vmem:[%s719 + $0x18] sm:$0xff]
        %724 = vmatprep.subr.mxu0 0.0
        %725 = vmatpush1.msra.mxu0 0.0
        %726 = vmatprep.subr.mxu0 0.0
        %727 = vmatpush1.msra.mxu0 0.0
        %728 = vmatprep.subr.mxu0 0.0
        %729 = vmatpush1.msra.mxu0 0.0
        %730 = vmatprep.subr.mxu0 0.0
        %731 = vmatpush1.msra.mxu0 0.0
        %732 = vmatprep.subr.mxu0 0.0
        %733 = vmatpush1.msra.mxu0 0.0
        %734 = vmatprep.subr.mxu0 0.0
        %735 = vmatpush1.msra.mxu0 0.0
        %736 = vmatprep.subr.mxu0 0.0
        %737 = vmatpush1.msra.mxu0 0.0
        %738 = vmatprep.subr.mxu0 0.0
        %739 = vmatpush1.msra.mxu0 0.0
        %740 = vmatprep.subr.mxu0 0.0
        %741 = vmatpush1.msra.mxu0 0.0
        %742 = vmatprep.subr.mxu0 0.0
        %743 = vmatpush1.msra.mxu0 0.0
        %744 = vmatprep.subr.mxu0 0.0
        %745 = vmatpush1.msra.mxu0 0.0
        %746 = vmatprep.subr.mxu0 0.0
        %747 = vmatpush1.msra.mxu0 0.0
        %748 = vmatprep.subr.mxu0 0.0
        %749 = vmatpush1.msra.mxu0 %v723
        %750 = vmatprep.subr.mxu0 0.0
        %751 = vmatpush1.msra.mxu0 %v722
        %752 = vmatprep.subr.mxu0 0.0
        %753 = vmatpush1.msra.mxu0 %v721
        %754 = vmatprep.subr.mxu0 0.0
        %755 = vmatpush1.msra.mxu0 %v720
        %756 = vmatprep.subr.mxu0 0.0
        %757 = vmatpush2.msra.mxu0 0.0
        %758 = vmatprep.subr.mxu0 0.0
        %759 = vmatpush2.msra.mxu0 0.0
        %760 = vmatprep.subr.mxu0 0.0
        %761 = vmatpush2.msra.mxu0 0.0
        %762 = vmatprep.subr.mxu0 0.0
        %763 = vmatpush2.msra.mxu0 0.0
        %764 = vmatprep.subr.mxu0 0.0
        %765 = vmatpush2.msra.mxu0 0.0
        %766 = vmatprep.subr.mxu0 0.0
        %767 = vmatpush2.msra.mxu0 0.0
        %768 = vmatprep.subr.mxu0 0.0
        %769 = vmatpush2.msra.mxu0 0.0
        %770 = vmatprep.subr.mxu0 0.0
        %771 = vmatpush2.msra.mxu0 0.0
        %772 = vmatprep.subr.mxu0 0.0
        %773 = vmatpush2.msra.mxu0 0.0
        %774 = vmatprep.subr.mxu0 0.0
        %775 = vmatpush2.msra.mxu0 0.0
        %776 = vmatprep.subr.mxu0 0.0
        %777 = vmatpush2.msra.mxu0 0.0
        %778 = vmatprep.subr.mxu0 0.0
        %779 = vmatpush2.msra.mxu0 0.0
        %780 = vmatprep.subr.mxu0 0.0
        %781 = vmatpush2.msra.mxu0 0.0
        %782 = vmatprep.subr.mxu0 0.0
        %783 = vmatpush2.msra.mxu0 0.0
        %784 = vmatprep.subr.mxu0 0.0
        %785 = vmatpush2.msra.mxu0 0.0
        %786 = vmatprep.subr.mxu0 0.0
        %787 = vmatpush2.msra.mxu0 0.0
        %788 = vmatprep.mubr.f32.mxu0 0.0
        %789 = vmatmul.mubr.f32.gmra.mxu0 %v254
        %v790 = vpop.f32.mrf.mxu0
        %v791 = vadd.f32 0.0, %v790
        %v792 = vpop.f32.mrf.mxu0
        %793 = vdwg.mxu0
        %s794 = scalar_lea.vmem %s3, 32
        %v795 = vld [vmem:[%s794] sm:$0xff]
        %v796 = vld [vmem:[%s794 + $0x8] sm:$0xff]
        %v797 = vld [vmem:[%s794 + $0x10] sm:$0xff]
        %v798 = vld [vmem:[%s794 + $0x18] sm:$0xff]
        %799 = vmatprep.subr.mxu0 0.0
        %800 = vmatpush1.msra.mxu0 0.0
        %801 = vmatprep.subr.mxu0 0.0
        %802 = vmatpush1.msra.mxu0 0.0
        %803 = vmatprep.subr.mxu0 0.0
        %804 = vmatpush1.msra.mxu0 0.0
        %805 = vmatprep.subr.mxu0 0.0
        %806 = vmatpush1.msra.mxu0 0.0
        %807 = vmatprep.subr.mxu0 0.0
        %808 = vmatpush1.msra.mxu0 0.0
        %809 = vmatprep.subr.mxu0 0.0
        %810 = vmatpush1.msra.mxu0 0.0
        %811 = vmatprep.subr.mxu0 0.0
        %812 = vmatpush1.msra.mxu0 0.0
        %813 = vmatprep.subr.mxu0 0.0
        %814 = vmatpush1.msra.mxu0 0.0
        %815 = vmatprep.subr.mxu0 0.0
        %816 = vmatpush1.msra.mxu0 0.0
        %817 = vmatprep.subr.mxu0 0.0
        %818 = vmatpush1.msra.mxu0 0.0
        %819 = vmatprep.subr.mxu0 0.0
        %820 = vmatpush1.msra.mxu0 0.0
        %821 = vmatprep.subr.mxu0 0.0
        %822 = vmatpush1.msra.mxu0 0.0
        %823 = vmatprep.subr.mxu0 0.0
        %824 = vmatpush1.msra.mxu0 %v798
        %825 = vmatprep.subr.mxu0 0.0
        %826 = vmatpush1.msra.mxu0 %v797
        %827 = vmatprep.subr.mxu0 0.0
        %828 = vmatpush1.msra.mxu0 %v796
        %829 = vmatprep.subr.mxu0 0.0
        %830 = vmatpush1.msra.mxu0 %v795
        %831 = vmatprep.subr.mxu0 0.0
        %832 = vmatpush2.msra.mxu0 0.0
        %833 = vmatprep.subr.mxu0 0.0
        %834 = vmatpush2.msra.mxu0 0.0
        %835 = vmatprep.subr.mxu0 0.0
        %836 = vmatpush2.msra.mxu0 0.0
        %837 = vmatprep.subr.mxu0 0.0
        %838 = vmatpush2.msra.mxu0 0.0
        %839 = vmatprep.subr.mxu0 0.0
        %840 = vmatpush2.msra.mxu0 0.0
        %841 = vmatprep.subr.mxu0 0.0
        %842 = vmatpush2.msra.mxu0 0.0
        %843 = vmatprep.subr.mxu0 0.0
        %844 = vmatpush2.msra.mxu0 0.0
        %845 = vmatprep.subr.mxu0 0.0
        %846 = vmatpush2.msra.mxu0 0.0
        %847 = vmatprep.subr.mxu0 0.0
        %848 = vmatpush2.msra.mxu0 0.0
        %849 = vmatprep.subr.mxu0 0.0
        %850 = vmatpush2.msra.mxu0 0.0
        %851 = vmatprep.subr.mxu0 0.0
        %852 = vmatpush2.msra.mxu0 0.0
        %853 = vmatprep.subr.mxu0 0.0
        %854 = vmatpush2.msra.mxu0 0.0
        %855 = vmatprep.subr.mxu0 0.0
        %856 = vmatpush2.msra.mxu0 0.0
        %857 = vmatprep.subr.mxu0 0.0
        %858 = vmatpush2.msra.mxu0 0.0
        %859 = vmatprep.subr.mxu0 0.0
        %860 = vmatpush2.msra.mxu0 0.0
        %861 = vmatprep.subr.mxu0 0.0
        %862 = vmatpush2.msra.mxu0 0.0
        %863 = vmatprep.mubr.f32.mxu0 0.0
        %864 = vmatmul.mubr.f32.gmra.mxu0 %v254
        %v865 = vpop.f32.mrf.mxu0
        %v866 = vadd.f32 0.0, %v865
        %v867 = vpop.f32.mrf.mxu0
        %868 = vdwg.mxu0
        %v870 = vsel %vm474, %v716, 0
        %v873 = vsel %vm474, %v791, 0
        %875 = vmatprep.subr.mxu0 0.0
        %876 = vmatpush1.xpose.msra.mxu0 0.0
        %877 = vmatprep.subr.mxu0 0.0
        %878 = vmatpush1.xpose.msra.mxu0 0.0
        %879 = vmatprep.subr.mxu0 0.0
        %880 = vmatpush1.xpose.msra.mxu0 0.0
        %881 = vmatprep.subr.mxu0 0.0
        %882 = vmatpush1.xpose.msra.mxu0 0.0
        %883 = vmatprep.subr.mxu0 0.0
        %884 = vmatpush1.xpose.msra.mxu0 0.0
        %885 = vmatprep.subr.mxu0 0.0
        %886 = vmatpush1.xpose.msra.mxu0 0.0
        %887 = vmatprep.subr.mxu0 0.0
        %888 = vmatpush1.xpose.msra.mxu0 0.0
        %889 = vmatprep.subr.mxu0 0.0
        %890 = vmatpush1.xpose.msra.mxu0 0.0
        %891 = vmatprep.subr.mxu0 0.0
        %892 = vmatpush1.xpose.msra.mxu0 0.0
        %893 = vmatprep.subr.mxu0 0.0
        %894 = vmatpush1.xpose.msra.mxu0 0.0
        %895 = vmatprep.subr.mxu0 0.0
        %896 = vmatpush1.xpose.msra.mxu0 0.0
        %897 = vmatprep.subr.mxu0 0.0
        %898 = vmatpush1.xpose.msra.mxu0 0.0
        %899 = vmatprep.subr.mxu0 0.0
        %900 = vmatpush1.xpose.msra.mxu0 0.0
        %901 = vmatprep.subr.mxu0 0.0
        %902 = vmatpush1.xpose.msra.mxu0 0.0
        %903 = vmatprep.subr.mxu0 0.0
        %904 = vmatpush1.xpose.msra.mxu0 0.0
        %905 = vmatprep.subr.mxu0 0.0
        %906 = vmatpush1.xpose.msra.mxu0 %v873
        %907 = vmatprep.subr.mxu0 0.0
        %908 = vmatpush2.xpose.msra.mxu0 0.0
        %909 = vmatprep.subr.mxu0 0.0
        %910 = vmatpush2.xpose.msra.mxu0 0.0
        %911 = vmatprep.subr.mxu0 0.0
        %912 = vmatpush2.xpose.msra.mxu0 0.0
        %913 = vmatprep.subr.mxu0 0.0
        %914 = vmatpush2.xpose.msra.mxu0 0.0
        %915 = vmatprep.subr.mxu0 0.0
        %916 = vmatpush2.xpose.msra.mxu0 0.0
        %917 = vmatprep.subr.mxu0 0.0
        %918 = vmatpush2.xpose.msra.mxu0 0.0
        %919 = vmatprep.subr.mxu0 0.0
        %920 = vmatpush2.xpose.msra.mxu0 0.0
        %921 = vmatprep.subr.mxu0 0.0
        %922 = vmatpush2.xpose.msra.mxu0 0.0
        %923 = vmatprep.subr.mxu0 0.0
        %924 = vmatpush2.xpose.msra.mxu0 0.0
        %925 = vmatprep.subr.mxu0 0.0
        %926 = vmatpush2.xpose.msra.mxu0 0.0
        %927 = vmatprep.subr.mxu0 0.0
        %928 = vmatpush2.xpose.msra.mxu0 0.0
        %929 = vmatprep.subr.mxu0 0.0
        %930 = vmatpush2.xpose.msra.mxu0 0.0
        %931 = vmatprep.subr.mxu0 0.0
        %932 = vmatpush2.xpose.msra.mxu0 0.0
        %933 = vmatprep.subr.mxu0 0.0
        %934 = vmatpush2.xpose.msra.mxu0 0.0
        %935 = vmatprep.subr.mxu0 0.0
        %936 = vmatpush2.xpose.msra.mxu0 0.0
        %937 = vmatprep.subr.mxu0 0.0
        %938 = vmatpush2.xpose.msra.mxu0 0.0
        %939 = vmatprep.mubr.f32.mxu0 0.0
        %940 = vmatmul.mubr.f32.gmra.mxu0 %v870
        %v941 = vpop.f32.mrf.mxu0
        %v942 = vadd.f32 0.0, %v941
        %v943 = vpop.f32.mrf.mxu0
        %944 = vdwg.mxu0
        %v945 = vsel %vm551, %v942, -inf
        %946 = vmax.xlane.f32.xlu0 %v945
        %v947 = vpop.xlane.xlu0 %946
        %v948 = vsub.f32 %v942, %v947
        %v949 = vmul.f32 %v948, 1.442695
        %v950 = vpow.pop %v949
        %v951 = vsel %vm551, %v950, 0.0
        %952 = vadd.xlane.f32.xlu0 %v951
        %v953 = vpop.xlane.xlu0 %952
        %v954 = vrcp.pop %v953
        %v955 = vmul.f32 %v950, %v954
        %v957 = vsel %vm551, %v955, 0
        %959 = vmatprep.subr.mxu0 0.0
        %960 = vmatpush1.msra.mxu0 0.0
        %961 = vmatprep.subr.mxu0 0.0
        %962 = vmatpush1.msra.mxu0 0.0
        %963 = vmatprep.subr.mxu0 0.0
        %964 = vmatpush1.msra.mxu0 0.0
        %965 = vmatprep.subr.mxu0 0.0
        %966 = vmatpush1.msra.mxu0 0.0
        %967 = vmatprep.subr.mxu0 0.0
        %968 = vmatpush1.msra.mxu0 0.0
        %969 = vmatprep.subr.mxu0 0.0
        %970 = vmatpush1.msra.mxu0 0.0
        %971 = vmatprep.subr.mxu0 0.0
        %972 = vmatpush1.msra.mxu0 0.0
        %973 = vmatprep.subr.mxu0 0.0
        %974 = vmatpush1.msra.mxu0 0.0
        %975 = vmatprep.subr.mxu0 0.0
        %976 = vmatpush1.msra.mxu0 0.0
        %977 = vmatprep.subr.mxu0 0.0
        %978 = vmatpush1.msra.mxu0 0.0
        %979 = vmatprep.subr.mxu0 0.0
        %980 = vmatpush1.msra.mxu0 0.0
        %981 = vmatprep.subr.mxu0 0.0
        %982 = vmatpush1.msra.mxu0 0.0
        %983 = vmatprep.subr.mxu0 0.0
        %984 = vmatpush1.msra.mxu0 0.0
        %985 = vmatprep.subr.mxu0 0.0
        %986 = vmatpush1.msra.mxu0 0.0
        %987 = vmatprep.subr.mxu0 0.0
        %988 = vmatpush1.msra.mxu0 0.0
        %989 = vmatprep.subr.mxu0 0.0
        %990 = vmatpush1.msra.mxu0 %v866
        %991 = vmatprep.subr.mxu0 0.0
        %992 = vmatpush2.msra.mxu0 0.0
        %993 = vmatprep.subr.mxu0 0.0
        %994 = vmatpush2.msra.mxu0 0.0
        %995 = vmatprep.subr.mxu0 0.0
        %996 = vmatpush2.msra.mxu0 0.0
        %997 = vmatprep.subr.mxu0 0.0
        %998 = vmatpush2.msra.mxu0 0.0
        %999 = vmatprep.subr.mxu0 0.0
        %1000 = vmatpush2.msra.mxu0 0.0
        %1001 = vmatprep.subr.mxu0 0.0
        %1002 = vmatpush2.msra.mxu0 0.0
        %1003 = vmatprep.subr.mxu0 0.0
        %1004 = vmatpush2.msra.mxu0 0.0
        %1005 = vmatprep.subr.mxu0 0.0
        %1006 = vmatpush2.msra.mxu0 0.0
        %1007 = vmatprep.subr.mxu0 0.0
        %1008 = vmatpush2.msra.mxu0 0.0
        %1009 = vmatprep.subr.mxu0 0.0
        %1010 = vmatpush2.msra.mxu0 0.0
        %1011 = vmatprep.subr.mxu0 0.0
        %1012 = vmatpush2.msra.mxu0 0.0
        %1013 = vmatprep.subr.mxu0 0.0
        %1014 = vmatpush2.msra.mxu0 0.0
        %1015 = vmatprep.subr.mxu0 0.0
        %1016 = vmatpush2.msra.mxu0 0.0
        %1017 = vmatprep.subr.mxu0 0.0
        %1018 = vmatpush2.msra.mxu0 0.0
        %1019 = vmatprep.subr.mxu0 0.0
        %1020 = vmatpush2.msra.mxu0 0.0
        %1021 = vmatprep.subr.mxu0 0.0
        %1022 = vmatpush2.msra.mxu0 0.0
        %1023 = vmatprep.mubr.f32.mxu0 0.0
        %1024 = vmatmul.mubr.f32.gmra.mxu0 %v957
        %v1025 = vpop.f32.mrf.mxu0
        %v1026 = vadd.f32 0.0, %v1025
        %v1027 = vpop.f32.mrf.mxu0
        %1028 = vdwg.mxu0
        %s1029 = scalar_lea.vmem %s4, 64
        %v1030 = vld [vmem:[%s1029] sm:$0xff]
        %v1031 = vld [vmem:[%s1029 + $0x8] sm:$0xff]
        %v1032 = vld [vmem:[%s1029 + $0x10] sm:$0xff]
        %v1033 = vld [vmem:[%s1029 + $0x18] sm:$0xff]
        %v1034 = vld [vmem:[%s1029 + $0x20] sm:$0xff]
        %v1035 = vld [vmem:[%s1029 + $0x28] sm:$0xff]
        %v1036 = vld [vmem:[%s1029 + $0x30] sm:$0xff]
        %v1037 = vld [vmem:[%s1029 + $0x38] sm:$0xff]
        %v1039 = vsel %vm474, %v1026, 0
        %1041 = vmatprep.subr.mxu0 0.0
        %1042 = vmatpush1.msra.mxu0 0.0
        %1043 = vmatprep.subr.mxu0 0.0
        %1044 = vmatpush1.msra.mxu0 0.0
        %1045 = vmatprep.subr.mxu0 0.0
        %1046 = vmatpush1.msra.mxu0 0.0
        %1047 = vmatprep.subr.mxu0 0.0
        %1048 = vmatpush1.msra.mxu0 0.0
        %1049 = vmatprep.subr.mxu0 0.0
        %1050 = vmatpush1.msra.mxu0 0.0
        %1051 = vmatprep.subr.mxu0 0.0
        %1052 = vmatpush1.msra.mxu0 0.0
        %1053 = vmatprep.subr.mxu0 0.0
        %1054 = vmatpush1.msra.mxu0 0.0
        %1055 = vmatprep.subr.mxu0 0.0
        %1056 = vmatpush1.msra.mxu0 0.0
        %1057 = vmatprep.subr.mxu0 0.0
        %1058 = vmatpush1.msra.mxu0 %v1037
        %1059 = vmatprep.subr.mxu0 0.0
        %1060 = vmatpush1.msra.mxu0 %v1036
        %1061 = vmatprep.subr.mxu0 0.0
        %1062 = vmatpush1.msra.mxu0 %v1035
        %1063 = vmatprep.subr.mxu0 0.0
        %1064 = vmatpush1.msra.mxu0 %v1034
        %1065 = vmatprep.subr.mxu0 0.0
        %1066 = vmatpush1.msra.mxu0 %v1033
        %1067 = vmatprep.subr.mxu0 0.0
        %1068 = vmatpush1.msra.mxu0 %v1032
        %1069 = vmatprep.subr.mxu0 0.0
        %1070 = vmatpush1.msra.mxu0 %v1031
        %1071 = vmatprep.subr.mxu0 0.0
        %1072 = vmatpush1.msra.mxu0 %v1030
        %1073 = vmatprep.subr.mxu0 0.0
        %1074 = vmatpush2.msra.mxu0 0.0
        %1075 = vmatprep.subr.mxu0 0.0
        %1076 = vmatpush2.msra.mxu0 0.0
        %1077 = vmatprep.subr.mxu0 0.0
        %1078 = vmatpush2.msra.mxu0 0.0
        %1079 = vmatprep.subr.mxu0 0.0
        %1080 = vmatpush2.msra.mxu0 0.0
        %1081 = vmatprep.subr.mxu0 0.0
        %1082 = vmatpush2.msra.mxu0 0.0
        %1083 = vmatprep.subr.mxu0 0.0
        %1084 = vmatpush2.msra.mxu0 0.0
        %1085 = vmatprep.subr.mxu0 0.0
        %1086 = vmatpush2.msra.mxu0 0.0
        %1087 = vmatprep.subr.mxu0 0.0
        %1088 = vmatpush2.msra.mxu0 0.0
        %1089 = vmatprep.subr.mxu0 0.0
        %1090 = vmatpush2.msra.mxu0 0.0
        %1091 = vmatprep.subr.mxu0 0.0
        %1092 = vmatpush2.msra.mxu0 0.0
        %1093 = vmatprep.subr.mxu0 0.0
        %1094 = vmatpush2.msra.mxu0 0.0
        %1095 = vmatprep.subr.mxu0 0.0
        %1096 = vmatpush2.msra.mxu0 0.0
        %1097 = vmatprep.subr.mxu0 0.0
        %1098 = vmatpush2.msra.mxu0 0.0
        %1099 = vmatprep.subr.mxu0 0.0
        %1100 = vmatpush2.msra.mxu0 0.0
        %1101 = vmatprep.subr.mxu0 0.0
        %1102 = vmatpush2.msra.mxu0 0.0
        %1103 = vmatprep.subr.mxu0 0.0
        %1104 = vmatpush2.msra.mxu0 0.0
        %1105 = vmatprep.mubr.f32.mxu0 0.0
        %1106 = vmatmul.mubr.f32.gmra.mxu0 %v1039
        %v1107 = vpop.f32.mrf.mxu0
        %v1108 = vadd.f32 0.0, %v1107
        %v1109 = vpop.f32.mrf.mxu0
        %1110 = vdwg.mxu0
        %v1112 = vsel %vm474, %v633, 0
        %1114 = vmatprep.subr.mxu0 0.0
        %1115 = vmatpush1.msra.mxu0 0.0
        %1116 = vmatprep.subr.mxu0 0.0
        %1117 = vmatpush1.msra.mxu0 0.0
        %1118 = vmatprep.subr.mxu0 0.0
        %1119 = vmatpush1.msra.mxu0 0.0
        %1120 = vmatprep.subr.mxu0 0.0
        %1121 = vmatpush1.msra.mxu0 0.0
        %1122 = vmatprep.subr.mxu0 0.0
        %1123 = vmatpush1.msra.mxu0 0.0
        %1124 = vmatprep.subr.mxu0 0.0
        %1125 = vmatpush1.msra.mxu0 0.0
        %1126 = vmatprep.subr.mxu0 0.0
        %1127 = vmatpush1.msra.mxu0 0.0
        %1128 = vmatprep.subr.mxu0 0.0
        %1129 = vmatpush1.msra.mxu0 0.0
        %1130 = vmatprep.subr.mxu0 0.0
        %1131 = vmatpush1.msra.mxu0 %v643
        %1132 = vmatprep.subr.mxu0 0.0
        %1133 = vmatpush1.msra.mxu0 %v642
        %1134 = vmatprep.subr.mxu0 0.0
        %1135 = vmatpush1.msra.mxu0 %v641
        %1136 = vmatprep.subr.mxu0 0.0
        %1137 = vmatpush1.msra.mxu0 %v640
        %1138 = vmatprep.subr.mxu0 0.0
        %1139 = vmatpush1.msra.mxu0 %v639
        %1140 = vmatprep.subr.mxu0 0.0
        %1141 = vmatpush1.msra.mxu0 %v638
        %1142 = vmatprep.subr.mxu0 0.0
        %1143 = vmatpush1.msra.mxu0 %v637
        %1144 = vmatprep.subr.mxu0 0.0
        %1145 = vmatpush1.msra.mxu0 %v636
        %1146 = vmatprep.subr.mxu0 0.0
        %1147 = vmatpush2.msra.mxu0 0.0
        %1148 = vmatprep.subr.mxu0 0.0
        %1149 = vmatpush2.msra.mxu0 0.0
        %1150 = vmatprep.subr.mxu0 0.0
        %1151 = vmatpush2.msra.mxu0 0.0
        %1152 = vmatprep.subr.mxu0 0.0
        %1153 = vmatpush2.msra.mxu0 0.0
        %1154 = vmatprep.subr.mxu0 0.0
        %1155 = vmatpush2.msra.mxu0 0.0
        %1156 = vmatprep.subr.mxu0 0.0
        %1157 = vmatpush2.msra.mxu0 0.0
        %1158 = vmatprep.subr.mxu0 0.0
        %1159 = vmatpush2.msra.mxu0 0.0
        %1160 = vmatprep.subr.mxu0 0.0
        %1161 = vmatpush2.msra.mxu0 0.0
        %1162 = vmatprep.subr.mxu0 0.0
        %1163 = vmatpush2.msra.mxu0 0.0
        %1164 = vmatprep.subr.mxu0 0.0
        %1165 = vmatpush2.msra.mxu0 0.0
        %1166 = vmatprep.subr.mxu0 0.0
        %1167 = vmatpush2.msra.mxu0 0.0
        %1168 = vmatprep.subr.mxu0 0.0
        %1169 = vmatpush2.msra.mxu0 0.0
        %1170 = vmatprep.subr.mxu0 0.0
        %1171 = vmatpush2.msra.mxu0 0.0
        %1172 = vmatprep.subr.mxu0 0.0
        %1173 = vmatpush2.msra.mxu0 0.0
        %1174 = vmatprep.subr.mxu0 0.0
        %1175 = vmatpush2.msra.mxu0 0.0
        %1176 = vmatprep.subr.mxu0 0.0
        %1177 = vmatpush2.msra.mxu0 0.0
        %1178 = vmatprep.mubr.f32.mxu0 0.0
        %1179 = vmatmul.mubr.f32.gmra.mxu0 %v1112
        %v1180 = vpop.f32.mrf.mxu0
        %v1181 = vadd.f32 %v1108, %v1180
        %v1182 = vpop.f32.mrf.mxu0
        %1183 = vdwg.mxu0
        %s1184 = scalar_lea.vmem %s1, 64
        %v1185 = vld [vmem:[%s1184] sm:$0xff]
        %v1186 = vld [vmem:[%s1184 + $0x8] sm:$0xff]
        %v1187 = vld [vmem:[%s1184 + $0x10] sm:$0xff]
        %v1188 = vld [vmem:[%s1184 + $0x18] sm:$0xff]
        %1189 = vmatprep.subr.mxu0 0.0
        %1190 = vmatpush1.msra.mxu0 0.0
        %1191 = vmatprep.subr.mxu0 0.0
        %1192 = vmatpush1.msra.mxu0 0.0
        %1193 = vmatprep.subr.mxu0 0.0
        %1194 = vmatpush1.msra.mxu0 0.0
        %1195 = vmatprep.subr.mxu0 0.0
        %1196 = vmatpush1.msra.mxu0 0.0
        %1197 = vmatprep.subr.mxu0 0.0
        %1198 = vmatpush1.msra.mxu0 0.0
        %1199 = vmatprep.subr.mxu0 0.0
        %1200 = vmatpush1.msra.mxu0 0.0
        %1201 = vmatprep.subr.mxu0 0.0
        %1202 = vmatpush1.msra.mxu0 0.0
        %1203 = vmatprep.subr.mxu0 0.0
        %1204 = vmatpush1.msra.mxu0 0.0
        %1205 = vmatprep.subr.mxu0 0.0
        %1206 = vmatpush1.msra.mxu0 0.0
        %1207 = vmatprep.subr.mxu0 0.0
        %1208 = vmatpush1.msra.mxu0 0.0
        %1209 = vmatprep.subr.mxu0 0.0
        %1210 = vmatpush1.msra.mxu0 0.0
        %1211 = vmatprep.subr.mxu0 0.0
        %1212 = vmatpush1.msra.mxu0 0.0
        %1213 = vmatprep.subr.mxu0 0.0
        %1214 = vmatpush1.msra.mxu0 %v1188
        %1215 = vmatprep.subr.mxu0 0.0
        %1216 = vmatpush1.msra.mxu0 %v1187
        %1217 = vmatprep.subr.mxu0 0.0
        %1218 = vmatpush1.msra.mxu0 %v1186
        %1219 = vmatprep.subr.mxu0 0.0
        %1220 = vmatpush1.msra.mxu0 %v1185
        %1221 = vmatprep.subr.mxu0 0.0
        %1222 = vmatpush2.msra.mxu0 0.0
        %1223 = vmatprep.subr.mxu0 0.0
        %1224 = vmatpush2.msra.mxu0 0.0
        %1225 = vmatprep.subr.mxu0 0.0
        %1226 = vmatpush2.msra.mxu0 0.0
        %1227 = vmatprep.subr.mxu0 0.0
        %1228 = vmatpush2.msra.mxu0 0.0
        %1229 = vmatprep.subr.mxu0 0.0
        %1230 = vmatpush2.msra.mxu0 0.0
        %1231 = vmatprep.subr.mxu0 0.0
        %1232 = vmatpush2.msra.mxu0 0.0
        %1233 = vmatprep.subr.mxu0 0.0
        %1234 = vmatpush2.msra.mxu0 0.0
        %1235 = vmatprep.subr.mxu0 0.0
        %1236 = vmatpush2.msra.mxu0 0.0
        %1237 = vmatprep.subr.mxu0 0.0
        %1238 = vmatpush2.msra.mxu0 0.0
        %1239 = vmatprep.subr.mxu0 0.0
        %1240 = vmatpush2.msra.mxu0 0.0
        %1241 = vmatprep.subr.mxu0 0.0
        %1242 = vmatpush2.msra.mxu0 0.0
        %1243 = vmatprep.subr.mxu0 0.0
        %1244 = vmatpush2.msra.mxu0 0.0
        %1245 = vmatprep.subr.mxu0 0.0
        %1246 = vmatpush2.msra.mxu0 0.0
        %1247 = vmatprep.subr.mxu0 0.0
        %1248 = vmatpush2.msra.mxu0 0.0
        %1249 = vmatprep.subr.mxu0 0.0
        %1250 = vmatpush2.msra.mxu0 0.0
        %1251 = vmatprep.subr.mxu0 0.0
        %1252 = vmatpush2.msra.mxu0 0.0
        %1253 = vmatprep.mubr.f32.mxu0 0.0
        %1254 = vmatmul.mubr.f32.gmra.mxu0 %v254
        %v1255 = vpop.f32.mrf.mxu0
        %v1256 = vadd.f32 0.0, %v1255
        %v1257 = vpop.f32.mrf.mxu0
        %1258 = vdwg.mxu0
        %s1259 = scalar_lea.vmem %s2, 64
        %v1260 = vld [vmem:[%s1259] sm:$0xff]
        %v1261 = vld [vmem:[%s1259 + $0x8] sm:$0xff]
        %v1262 = vld [vmem:[%s1259 + $0x10] sm:$0xff]
        %v1263 = vld [vmem:[%s1259 + $0x18] sm:$0xff]
        %1264 = vmatprep.subr.mxu0 0.0
        %1265 = vmatpush1.msra.mxu0 0.0
        %1266 = vmatprep.subr.mxu0 0.0
        %1267 = vmatpush1.msra.mxu0 0.0
        %1268 = vmatprep.subr.mxu0 0.0
        %1269 = vmatpush1.msra.mxu0 0.0
        %1270 = vmatprep.subr.mxu0 0.0
        %1271 = vmatpush1.msra.mxu0 0.0
        %1272 = vmatprep.subr.mxu0 0.0
        %1273 = vmatpush1.msra.mxu0 0.0
        %1274 = vmatprep.subr.mxu0 0.0
        %1275 = vmatpush1.msra.mxu0 0.0
        %1276 = vmatprep.subr.mxu0 0.0
        %1277 = vmatpush1.msra.mxu0 0.0
        %1278 = vmatprep.subr.mxu0 0.0
        %1279 = vmatpush1.msra.mxu0 0.0
        %1280 = vmatprep.subr.mxu0 0.0
        %1281 = vmatpush1.msra.mxu0 0.0
        %1282 = vmatprep.subr.mxu0 0.0
        %1283 = vmatpush1.msra.mxu0 0.0
        %1284 = vmatprep.subr.mxu0 0.0
        %1285 = vmatpush1.msra.mxu0 0.0
        %1286 = vmatprep.subr.mxu0 0.0
        %1287 = vmatpush1.msra.mxu0 0.0
        %1288 = vmatprep.subr.mxu0 0.0
        %1289 = vmatpush1.msra.mxu0 %v1263
        %1290 = vmatprep.subr.mxu0 0.0
        %1291 = vmatpush1.msra.mxu0 %v1262
        %1292 = vmatprep.subr.mxu0 0.0
        %1293 = vmatpush1.msra.mxu0 %v1261
        %1294 = vmatprep.subr.mxu0 0.0
        %1295 = vmatpush1.msra.mxu0 %v1260
        %1296 = vmatprep.subr.mxu0 0.0
        %1297 = vmatpush2.msra.mxu0 0.0
        %1298 = vmatprep.subr.mxu0 0.0
        %1299 = vmatpush2.msra.mxu0 0.0
        %1300 = vmatprep.subr.mxu0 0.0
        %1301 = vmatpush2.msra.mxu0 0.0
        %1302 = vmatprep.subr.mxu0 0.0
        %1303 = vmatpush2.msra.mxu0 0.0
        %1304 = vmatprep.subr.mxu0 0.0
        %1305 = vmatpush2.msra.mxu0 0.0
        %1306 = vmatprep.subr.mxu0 0.0
        %1307 = vmatpush2.msra.mxu0 0.0
        %1308 = vmatprep.subr.mxu0 0.0
        %1309 = vmatpush2.msra.mxu0 0.0
        %1310 = vmatprep.subr.mxu0 0.0
        %1311 = vmatpush2.msra.mxu0 0.0
        %1312 = vmatprep.subr.mxu0 0.0
        %1313 = vmatpush2.msra.mxu0 0.0
        %1314 = vmatprep.subr.mxu0 0.0
        %1315 = vmatpush2.msra.mxu0 0.0
        %1316 = vmatprep.subr.mxu0 0.0
        %1317 = vmatpush2.msra.mxu0 0.0
        %1318 = vmatprep.subr.mxu0 0.0
        %1319 = vmatpush2.msra.mxu0 0.0
        %1320 = vmatprep.subr.mxu0 0.0
        %1321 = vmatpush2.msra.mxu0 0.0
        %1322 = vmatprep.subr.mxu0 0.0
        %1323 = vmatpush2.msra.mxu0 0.0
        %1324 = vmatprep.subr.mxu0 0.0
        %1325 = vmatpush2.msra.mxu0 0.0
        %1326 = vmatprep.subr.mxu0 0.0
        %1327 = vmatpush2.msra.mxu0 0.0
        %1328 = vmatprep.mubr.f32.mxu0 0.0
        %1329 = vmatmul.mubr.f32.gmra.mxu0 %v254
        %v1330 = vpop.f32.mrf.mxu0
        %v1331 = vadd.f32 0.0, %v1330
        %v1332 = vpop.f32.mrf.mxu0
        %1333 = vdwg.mxu0
        %s1334 = scalar_lea.vmem %s3, 64
        %v1335 = vld [vmem:[%s1334] sm:$0xff]
        %v1336 = vld [vmem:[%s1334 + $0x8] sm:$0xff]
        %v1337 = vld [vmem:[%s1334 + $0x10] sm:$0xff]
        %v1338 = vld [vmem:[%s1334 + $0x18] sm:$0xff]
        %1339 = vmatprep.subr.mxu0 0.0
        %1340 = vmatpush1.msra.mxu0 0.0
        %1341 = vmatprep.subr.mxu0 0.0
        %1342 = vmatpush1.msra.mxu0 0.0
        %1343 = vmatprep.subr.mxu0 0.0
        %1344 = vmatpush1.msra.mxu0 0.0
        %1345 = vmatprep.subr.mxu0 0.0
        %1346 = vmatpush1.msra.mxu0 0.0
        %1347 = vmatprep.subr.mxu0 0.0
        %1348 = vmatpush1.msra.mxu0 0.0
        %1349 = vmatprep.subr.mxu0 0.0
        %1350 = vmatpush1.msra.mxu0 0.0
        %1351 = vmatprep.subr.mxu0 0.0
        %1352 = vmatpush1.msra.mxu0 0.0
        %1353 = vmatprep.subr.mxu0 0.0
        %1354 = vmatpush1.msra.mxu0 0.0
        %1355 = vmatprep.subr.mxu0 0.0
        %1356 = vmatpush1.msra.mxu0 0.0
        %1357 = vmatprep.subr.mxu0 0.0
        %1358 = vmatpush1.msra.mxu0 0.0
        %1359 = vmatprep.subr.mxu0 0.0
        %1360 = vmatpush1.msra.mxu0 0.0
        %1361 = vmatprep.subr.mxu0 0.0
        %1362 = vmatpush1.msra.mxu0 0.0
        %1363 = vmatprep.subr.mxu0 0.0
        %1364 = vmatpush1.msra.mxu0 %v1338
        %1365 = vmatprep.subr.mxu0 0.0
        %1366 = vmatpush1.msra.mxu0 %v1337
        %1367 = vmatprep.subr.mxu0 0.0
        %1368 = vmatpush1.msra.mxu0 %v1336
        %1369 = vmatprep.subr.mxu0 0.0
        %1370 = vmatpush1.msra.mxu0 %v1335
        %1371 = vmatprep.subr.mxu0 0.0
        %1372 = vmatpush2.msra.mxu0 0.0
        %1373 = vmatprep.subr.mxu0 0.0
        %1374 = vmatpush2.msra.mxu0 0.0
        %1375 = vmatprep.subr.mxu0 0.0
        %1376 = vmatpush2.msra.mxu0 0.0
        %1377 = vmatprep.subr.mxu0 0.0
        %1378 = vmatpush2.msra.mxu0 0.0
        %1379 = vmatprep.subr.mxu0 0.0
        %1380 = vmatpush2.msra.mxu0 0.0
        %1381 = vmatprep.subr.mxu0 0.0
        %1382 = vmatpush2.msra.mxu0 0.0
        %1383 = vmatprep.subr.mxu0 0.0
        %1384 = vmatpush2.msra.mxu0 0.0
        %1385 = vmatprep.subr.mxu0 0.0
        %1386 = vmatpush2.msra.mxu0 0.0
        %1387 = vmatprep.subr.mxu0 0.0
        %1388 = vmatpush2.msra.mxu0 0.0
        %1389 = vmatprep.subr.mxu0 0.0
        %1390 = vmatpush2.msra.mxu0 0.0
        %1391 = vmatprep.subr.mxu0 0.0
        %1392 = vmatpush2.msra.mxu0 0.0
        %1393 = vmatprep.subr.mxu0 0.0
        %1394 = vmatpush2.msra.mxu0 0.0
        %1395 = vmatprep.subr.mxu0 0.0
        %1396 = vmatpush2.msra.mxu0 0.0
        %1397 = vmatprep.subr.mxu0 0.0
        %1398 = vmatpush2.msra.mxu0 0.0
        %1399 = vmatprep.subr.mxu0 0.0
        %1400 = vmatpush2.msra.mxu0 0.0
        %1401 = vmatprep.subr.mxu0 0.0
        %1402 = vmatpush2.msra.mxu0 0.0
        %1403 = vmatprep.mubr.f32.mxu0 0.0
        %1404 = vmatmul.mubr.f32.gmra.mxu0 %v254
        %v1405 = vpop.f32.mrf.mxu0
        %v1406 = vadd.f32 0.0, %v1405
        %v1407 = vpop.f32.mrf.mxu0
        %1408 = vdwg.mxu0
        %v1410 = vsel %vm474, %v1256, 0
        %v1413 = vsel %vm474, %v1331, 0
        %1415 = vmatprep.subr.mxu0 0.0
        %1416 = vmatpush1.xpose.msra.mxu0 0.0
        %1417 = vmatprep.subr.mxu0 0.0
        %1418 = vmatpush1.xpose.msra.mxu0 0.0
        %1419 = vmatprep.subr.mxu0 0.0
        %1420 = vmatpush1.xpose.msra.mxu0 0.0
        %1421 = vmatprep.subr.mxu0 0.0
        %1422 = vmatpush1.xpose.msra.mxu0 0.0
        %1423 = vmatprep.subr.mxu0 0.0
        %1424 = vmatpush1.xpose.msra.mxu0 0.0
        %1425 = vmatprep.subr.mxu0 0.0
        %1426 = vmatpush1.xpose.msra.mxu0 0.0
        %1427 = vmatprep.subr.mxu0 0.0
        %1428 = vmatpush1.xpose.msra.mxu0 0.0
        %1429 = vmatprep.subr.mxu0 0.0
        %1430 = vmatpush1.xpose.msra.mxu0 0.0
        %1431 = vmatprep.subr.mxu0 0.0
        %1432 = vmatpush1.xpose.msra.mxu0 0.0
        %1433 = vmatprep.subr.mxu0 0.0
        %1434 = vmatpush1.xpose.msra.mxu0 0.0
        %1435 = vmatprep.subr.mxu0 0.0
        %1436 = vmatpush1.xpose.msra.mxu0 0.0
        %1437 = vmatprep.subr.mxu0 0.0
        %1438 = vmatpush1.xpose.msra.mxu0 0.0
        %1439 = vmatprep.subr.mxu0 0.0
        %1440 = vmatpush1.xpose.msra.mxu0 0.0
        %1441 = vmatprep.subr.mxu0 0.0
        %1442 = vmatpush1.xpose.msra.mxu0 0.0
        %1443 = vmatprep.subr.mxu0 0.0
        %1444 = vmatpush1.xpose.msra.mxu0 0.0
        %1445 = vmatprep.subr.mxu0 0.0
        %1446 = vmatpush1.xpose.msra.mxu0 %v1413
        %1447 = vmatprep.subr.mxu0 0.0
        %1448 = vmatpush2.xpose.msra.mxu0 0.0
        %1449 = vmatprep.subr.mxu0 0.0
        %1450 = vmatpush2.xpose.msra.mxu0 0.0
        %1451 = vmatprep.subr.mxu0 0.0
        %1452 = vmatpush2.xpose.msra.mxu0 0.0
        %1453 = vmatprep.subr.mxu0 0.0
        %1454 = vmatpush2.xpose.msra.mxu0 0.0
        %1455 = vmatprep.subr.mxu0 0.0
        %1456 = vmatpush2.xpose.msra.mxu0 0.0
        %1457 = vmatprep.subr.mxu0 0.0
        %1458 = vmatpush2.xpose.msra.mxu0 0.0
        %1459 = vmatprep.subr.mxu0 0.0
        %1460 = vmatpush2.xpose.msra.mxu0 0.0
        %1461 = vmatprep.subr.mxu0 0.0
        %1462 = vmatpush2.xpose.msra.mxu0 0.0
        %1463 = vmatprep.subr.mxu0 0.0
        %1464 = vmatpush2.xpose.msra.mxu0 0.0
        %1465 = vmatprep.subr.mxu0 0.0
        %1466 = vmatpush2.xpose.msra.mxu0 0.0
        %1467 = vmatprep.subr.mxu0 0.0
        %1468 = vmatpush2.xpose.msra.mxu0 0.0
        %1469 = vmatprep.subr.mxu0 0.0
        %1470 = vmatpush2.xpose.msra.mxu0 0.0
        %1471 = vmatprep.subr.mxu0 0.0
        %1472 = vmatpush2.xpose.msra.mxu0 0.0
        %1473 = vmatprep.subr.mxu0 0.0
        %1474 = vmatpush2.xpose.msra.mxu0 0.0
        %1475 = vmatprep.subr.mxu0 0.0
        %1476 = vmatpush2.xpose.msra.mxu0 0.0
        %1477 = vmatprep.subr.mxu0 0.0
        %1478 = vmatpush2.xpose.msra.mxu0 0.0
        %1479 = vmatprep.mubr.f32.mxu0 0.0
        %1480 = vmatmul.mubr.f32.gmra.mxu0 %v1410
        %v1481 = vpop.f32.mrf.mxu0
        %v1482 = vadd.f32 0.0, %v1481
        %v1483 = vpop.f32.mrf.mxu0
        %1484 = vdwg.mxu0
        %v1485 = vsel %vm551, %v1482, -inf
        %1486 = vmax.xlane.f32.xlu0 %v1485
        %v1487 = vpop.xlane.xlu0 %1486
        %v1488 = vsub.f32 %v1482, %v1487
        %v1489 = vmul.f32 %v1488, 1.442695
        %v1490 = vpow.pop %v1489
        %v1491 = vsel %vm551, %v1490, 0.0
        %1492 = vadd.xlane.f32.xlu0 %v1491
        %v1493 = vpop.xlane.xlu0 %1492
        %v1494 = vrcp.pop %v1493
        %v1495 = vmul.f32 %v1490, %v1494
        %v1497 = vsel %vm551, %v1495, 0
        %1499 = vmatprep.subr.mxu0 0.0
        %1500 = vmatpush1.msra.mxu0 0.0
        %1501 = vmatprep.subr.mxu0 0.0
        %1502 = vmatpush1.msra.mxu0 0.0
        %1503 = vmatprep.subr.mxu0 0.0
        %1504 = vmatpush1.msra.mxu0 0.0
        %1505 = vmatprep.subr.mxu0 0.0
        %1506 = vmatpush1.msra.mxu0 0.0
        %1507 = vmatprep.subr.mxu0 0.0
        %1508 = vmatpush1.msra.mxu0 0.0
        %1509 = vmatprep.subr.mxu0 0.0
        %1510 = vmatpush1.msra.mxu0 0.0
        %1511 = vmatprep.subr.mxu0 0.0
        %1512 = vmatpush1.msra.mxu0 0.0
        %1513 = vmatprep.subr.mxu0 0.0
        %1514 = vmatpush1.msra.mxu0 0.0
        %1515 = vmatprep.subr.mxu0 0.0
        %1516 = vmatpush1.msra.mxu0 0.0
        %1517 = vmatprep.subr.mxu0 0.0
        %1518 = vmatpush1.msra.mxu0 0.0
        %1519 = vmatprep.subr.mxu0 0.0
        %1520 = vmatpush1.msra.mxu0 0.0
        %1521 = vmatprep.subr.mxu0 0.0
        %1522 = vmatpush1.msra.mxu0 0.0
        %1523 = vmatprep.subr.mxu0 0.0
        %1524 = vmatpush1.msra.mxu0 0.0
        %1525 = vmatprep.subr.mxu0 0.0
        %1526 = vmatpush1.msra.mxu0 0.0
        %1527 = vmatprep.subr.mxu0 0.0
        %1528 = vmatpush1.msra.mxu0 0.0
        %1529 = vmatprep.subr.mxu0 0.0
        %1530 = vmatpush1.msra.mxu0 %v1406
        %1531 = vmatprep.subr.mxu0 0.0
        %1532 = vmatpush2.msra.mxu0 0.0
        %1533 = vmatprep.subr.mxu0 0.0
        %1534 = vmatpush2.msra.mxu0 0.0
        %1535 = vmatprep.subr.mxu0 0.0
        %1536 = vmatpush2.msra.mxu0 0.0
        %1537 = vmatprep.subr.mxu0 0.0
        %1538 = vmatpush2.msra.mxu0 0.0
        %1539 = vmatprep.subr.mxu0 0.0
        %1540 = vmatpush2.msra.mxu0 0.0
        %1541 = vmatprep.subr.mxu0 0.0
        %1542 = vmatpush2.msra.mxu0 0.0
        %1543 = vmatprep.subr.mxu0 0.0
        %1544 = vmatpush2.msra.mxu0 0.0
        %1545 = vmatprep.subr.mxu0 0.0
        %1546 = vmatpush2.msra.mxu0 0.0
        %1547 = vmatprep.subr.mxu0 0.0
        %1548 = vmatpush2.msra.mxu0 0.0
        %1549 = vmatprep.subr.mxu0 0.0
        %1550 = vmatpush2.msra.mxu0 0.0
        %1551 = vmatprep.subr.mxu0 0.0
        %1552 = vmatpush2.msra.mxu0 0.0
        %1553 = vmatprep.subr.mxu0 0.0
        %1554 = vmatpush2.msra.mxu0 0.0
        %1555 = vmatprep.subr.mxu0 0.0
        %1556 = vmatpush2.msra.mxu0 0.0
        %1557 = vmatprep.subr.mxu0 0.0
        %1558 = vmatpush2.msra.mxu0 0.0
        %1559 = vmatprep.subr.mxu0 0.0
        %1560 = vmatpush2.msra.mxu0 0.0
        %1561 = vmatprep.subr.mxu0 0.0
        %1562 = vmatpush2.msra.mxu0 0.0
        %1563 = vmatprep.mubr.f32.mxu0 0.0
        %1564 = vmatmul.mubr.f32.gmra.mxu0 %v1497
        %v1565 = vpop.f32.mrf.mxu0
        %v1566 = vadd.f32 0.0, %v1565
        %v1567 = vpop.f32.mrf.mxu0
        %1568 = vdwg.mxu0
        %s1569 = scalar_lea.vmem %s4, 128
        %v1570 = vld [vmem:[%s1569] sm:$0xff]
        %v1571 = vld [vmem:[%s1569 + $0x8] sm:$0xff]
        %v1572 = vld [vmem:[%s1569 + $0x10] sm:$0xff]
        %v1573 = vld [vmem:[%s1569 + $0x18] sm:$0xff]
        %v1574 = vld [vmem:[%s1569 + $0x20] sm:$0xff]
        %v1575 = vld [vmem:[%s1569 + $0x28] sm:$0xff]
        %v1576 = vld [vmem:[%s1569 + $0x30] sm:$0xff]
        %v1577 = vld [vmem:[%s1569 + $0x38] sm:$0xff]
        %v1579 = vsel %vm474, %v1566, 0
        %1581 = vmatprep.subr.mxu0 0.0
        %1582 = vmatpush1.msra.mxu0 0.0
        %1583 = vmatprep.subr.mxu0 0.0
        %1584 = vmatpush1.msra.mxu0 0.0
        %1585 = vmatprep.subr.mxu0 0.0
        %1586 = vmatpush1.msra.mxu0 0.0
        %1587 = vmatprep.subr.mxu0 0.0
        %1588 = vmatpush1.msra.mxu0 0.0
        %1589 = vmatprep.subr.mxu0 0.0
        %1590 = vmatpush1.msra.mxu0 0.0
        %1591 = vmatprep.subr.mxu0 0.0
        %1592 = vmatpush1.msra.mxu0 0.0
        %1593 = vmatprep.subr.mxu0 0.0
        %1594 = vmatpush1.msra.mxu0 0.0
        %1595 = vmatprep.subr.mxu0 0.0
        %1596 = vmatpush1.msra.mxu0 0.0
        %1597 = vmatprep.subr.mxu0 0.0
        %1598 = vmatpush1.msra.mxu0 %v1577
        %1599 = vmatprep.subr.mxu0 0.0
        %1600 = vmatpush1.msra.mxu0 %v1576
        %1601 = vmatprep.subr.mxu0 0.0
        %1602 = vmatpush1.msra.mxu0 %v1575
        %1603 = vmatprep.subr.mxu0 0.0
        %1604 = vmatpush1.msra.mxu0 %v1574
        %1605 = vmatprep.subr.mxu0 0.0
        %1606 = vmatpush1.msra.mxu0 %v1573
        %1607 = vmatprep.subr.mxu0 0.0
        %1608 = vmatpush1.msra.mxu0 %v1572
        %1609 = vmatprep.subr.mxu0 0.0
        %1610 = vmatpush1.msra.mxu0 %v1571
        %1611 = vmatprep.subr.mxu0 0.0
        %1612 = vmatpush1.msra.mxu0 %v1570
        %1613 = vmatprep.subr.mxu0 0.0
        %1614 = vmatpush2.msra.mxu0 0.0
        %1615 = vmatprep.subr.mxu0 0.0
        %1616 = vmatpush2.msra.mxu0 0.0
        %1617 = vmatprep.subr.mxu0 0.0
        %1618 = vmatpush2.msra.mxu0 0.0
        %1619 = vmatprep.subr.mxu0 0.0
        %1620 = vmatpush2.msra.mxu0 0.0
        %1621 = vmatprep.subr.mxu0 0.0
        %1622 = vmatpush2.msra.mxu0 0.0
        %1623 = vmatprep.subr.mxu0 0.0
        %1624 = vmatpush2.msra.mxu0 0.0
        %1625 = vmatprep.subr.mxu0 0.0
        %1626 = vmatpush2.msra.mxu0 0.0
        %1627 = vmatprep.subr.mxu0 0.0
        %1628 = vmatpush2.msra.mxu0 0.0
        %1629 = vmatprep.subr.mxu0 0.0
        %1630 = vmatpush2.msra.mxu0 0.0
        %1631 = vmatprep.subr.mxu0 0.0
        %1632 = vmatpush2.msra.mxu0 0.0
        %1633 = vmatprep.subr.mxu0 0.0
        %1634 = vmatpush2.msra.mxu0 0.0
        %1635 = vmatprep.subr.mxu0 0.0
        %1636 = vmatpush2.msra.mxu0 0.0
        %1637 = vmatprep.subr.mxu0 0.0
        %1638 = vmatpush2.msra.mxu0 0.0
        %1639 = vmatprep.subr.mxu0 0.0
        %1640 = vmatpush2.msra.mxu0 0.0
        %1641 = vmatprep.subr.mxu0 0.0
        %1642 = vmatpush2.msra.mxu0 0.0
        %1643 = vmatprep.subr.mxu0 0.0
        %1644 = vmatpush2.msra.mxu0 0.0
        %1645 = vmatprep.mubr.f32.mxu0 0.0
        %1646 = vmatmul.mubr.f32.gmra.mxu0 %v1579
        %v1647 = vpop.f32.mrf.mxu0
        %v1648 = vadd.f32 0.0, %v1647
        %v1649 = vpop.f32.mrf.mxu0
        %1650 = vdwg.mxu0
        %v1651 = vadd.f32 %v1181, %v1648
        %s1652 = scalar_lea.vmem %s1, 96
        %v1653 = vld [vmem:[%s1652] sm:$0xff]
        %v1654 = vld [vmem:[%s1652 + $0x8] sm:$0xff]
        %v1655 = vld [vmem:[%s1652 + $0x10] sm:$0xff]
        %v1656 = vld [vmem:[%s1652 + $0x18] sm:$0xff]
        %1657 = vmatprep.subr.mxu0 0.0
        %1658 = vmatpush1.msra.mxu0 0.0
        %1659 = vmatprep.subr.mxu0 0.0
        %1660 = vmatpush1.msra.mxu0 0.0
        %1661 = vmatprep.subr.mxu0 0.0
        %1662 = vmatpush1.msra.mxu0 0.0
        %1663 = vmatprep.subr.mxu0 0.0
        %1664 = vmatpush1.msra.mxu0 0.0
        %1665 = vmatprep.subr.mxu0 0.0
        %1666 = vmatpush1.msra.mxu0 0.0
        %1667 = vmatprep.subr.mxu0 0.0
        %1668 = vmatpush1.msra.mxu0 0.0
        %1669 = vmatprep.subr.mxu0 0.0
        %1670 = vmatpush1.msra.mxu0 0.0
        %1671 = vmatprep.subr.mxu0 0.0
        %1672 = vmatpush1.msra.mxu0 0.0
        %1673 = vmatprep.subr.mxu0 0.0
        %1674 = vmatpush1.msra.mxu0 0.0
        %1675 = vmatprep.subr.mxu0 0.0
        %1676 = vmatpush1.msra.mxu0 0.0
        %1677 = vmatprep.subr.mxu0 0.0
        %1678 = vmatpush1.msra.mxu0 0.0
        %1679 = vmatprep.subr.mxu0 0.0
        %1680 = vmatpush1.msra.mxu0 0.0
        %1681 = vmatprep.subr.mxu0 0.0
        %1682 = vmatpush1.msra.mxu0 %v1656
        %1683 = vmatprep.subr.mxu0 0.0
        %1684 = vmatpush1.msra.mxu0 %v1655
        %1685 = vmatprep.subr.mxu0 0.0
        %1686 = vmatpush1.msra.mxu0 %v1654
        %1687 = vmatprep.subr.mxu0 0.0
        %1688 = vmatpush1.msra.mxu0 %v1653
        %1689 = vmatprep.subr.mxu0 0.0
        %1690 = vmatpush2.msra.mxu0 0.0
        %1691 = vmatprep.subr.mxu0 0.0
        %1692 = vmatpush2.msra.mxu0 0.0
        %1693 = vmatprep.subr.mxu0 0.0
        %1694 = vmatpush2.msra.mxu0 0.0
        %1695 = vmatprep.subr.mxu0 0.0
        %1696 = vmatpush2.msra.mxu0 0.0
        %1697 = vmatprep.subr.mxu0 0.0
        %1698 = vmatpush2.msra.mxu0 0.0
        %1699 = vmatprep.subr.mxu0 0.0
        %1700 = vmatpush2.msra.mxu0 0.0
        %1701 = vmatprep.subr.mxu0 0.0
        %1702 = vmatpush2.msra.mxu0 0.0
        %1703 = vmatprep.subr.mxu0 0.0
        %1704 = vmatpush2.msra.mxu0 0.0
        %1705 = vmatprep.subr.mxu0 0.0
        %1706 = vmatpush2.msra.mxu0 0.0
        %1707 = vmatprep.subr.mxu0 0.0
        %1708 = vmatpush2.msra.mxu0 0.0
        %1709 = vmatprep.subr.mxu0 0.0
        %1710 = vmatpush2.msra.mxu0 0.0
        %1711 = vmatprep.subr.mxu0 0.0
        %1712 = vmatpush2.msra.mxu0 0.0
        %1713 = vmatprep.subr.mxu0 0.0
        %1714 = vmatpush2.msra.mxu0 0.0
        %1715 = vmatprep.subr.mxu0 0.0
        %1716 = vmatpush2.msra.mxu0 0.0
        %1717 = vmatprep.subr.mxu0 0.0
        %1718 = vmatpush2.msra.mxu0 0.0
        %1719 = vmatprep.subr.mxu0 0.0
        %1720 = vmatpush2.msra.mxu0 0.0
        %1721 = vmatprep.mubr.f32.mxu0 0.0
        %1722 = vmatmul.mubr.f32.gmra.mxu0 %v254
        %v1723 = vpop.f32.mrf.mxu0
        %v1724 = vadd.f32 0.0, %v1723
        %v1725 = vpop.f32.mrf.mxu0
        %1726 = vdwg.mxu0
        %s1727 = scalar_lea.vmem %s2, 96
        %v1728 = vld [vmem:[%s1727] sm:$0xff]
        %v1729 = vld [vmem:[%s1727 + $0x8] sm:$0xff]
        %v1730 = vld [vmem:[%s1727 + $0x10] sm:$0xff]
        %v1731 = vld [vmem:[%s1727 + $0x18] sm:$0xff]
        %1732 = vmatprep.subr.mxu0 0.0
        %1733 = vmatpush1.msra.mxu0 0.0
        %1734 = vmatprep.subr.mxu0 0.0
        %1735 = vmatpush1.msra.mxu0 0.0
        %1736 = vmatprep.subr.mxu0 0.0
        %1737 = vmatpush1.msra.mxu0 0.0
        %1738 = vmatprep.subr.mxu0 0.0
        %1739 = vmatpush1.msra.mxu0 0.0
        %1740 = vmatprep.subr.mxu0 0.0
        %1741 = vmatpush1.msra.mxu0 0.0
        %1742 = vmatprep.subr.mxu0 0.0
        %1743 = vmatpush1.msra.mxu0 0.0
        %1744 = vmatprep.subr.mxu0 0.0
        %1745 = vmatpush1.msra.mxu0 0.0
        %1746 = vmatprep.subr.mxu0 0.0
        %1747 = vmatpush1.msra.mxu0 0.0
        %1748 = vmatprep.subr.mxu0 0.0
        %1749 = vmatpush1.msra.mxu0 0.0
        %1750 = vmatprep.subr.mxu0 0.0
        %1751 = vmatpush1.msra.mxu0 0.0
        %1752 = vmatprep.subr.mxu0 0.0
        %1753 = vmatpush1.msra.mxu0 0.0
        %1754 = vmatprep.subr.mxu0 0.0
        %1755 = vmatpush1.msra.mxu0 0.0
        %1756 = vmatprep.subr.mxu0 0.0
        %1757 = vmatpush1.msra.mxu0 %v1731
        %1758 = vmatprep.subr.mxu0 0.0
        %1759 = vmatpush1.msra.mxu0 %v1730
        %1760 = vmatprep.subr.mxu0 0.0
        %1761 = vmatpush1.msra.mxu0 %v1729
        %1762 = vmatprep.subr.mxu0 0.0
        %1763 = vmatpush1.msra.mxu0 %v1728
        %1764 = vmatprep.subr.mxu0 0.0
        %1765 = vmatpush2.msra.mxu0 0.0
        %1766 = vmatprep.subr.mxu0 0.0
        %1767 = vmatpush2.msra.mxu0 0.0
        %1768 = vmatprep.subr.mxu0 0.0
        %1769 = vmatpush2.msra.mxu0 0.0
        %1770 = vmatprep.subr.mxu0 0.0
        %1771 = vmatpush2.msra.mxu0 0.0
        %1772 = vmatprep.subr.mxu0 0.0
        %1773 = vmatpush2.msra.mxu0 0.0
        %1774 = vmatprep.subr.mxu0 0.0
        %1775 = vmatpush2.msra.mxu0 0.0
        %1776 = vmatprep.subr.mxu0 0.0
        %1777 = vmatpush2.msra.mxu0 0.0
        %1778 = vmatprep.subr.mxu0 0.0
        %1779 = vmatpush2.msra.mxu0 0.0
        %1780 = vmatprep.subr.mxu0 0.0
        %1781 = vmatpush2.msra.mxu0 0.0
        %1782 = vmatprep.subr.mxu0 0.0
        %1783 = vmatpush2.msra.mxu0 0.0
        %1784 = vmatprep.subr.mxu0 0.0
        %1785 = vmatpush2.msra.mxu0 0.0
        %1786 = vmatprep.subr.mxu0 0.0
        %1787 = vmatpush2.msra.mxu0 0.0
        %1788 = vmatprep.subr.mxu0 0.0
        %1789 = vmatpush2.msra.mxu0 0.0
        %1790 = vmatprep.subr.mxu0 0.0
        %1791 = vmatpush2.msra.mxu0 0.0
        %1792 = vmatprep.subr.mxu0 0.0
        %1793 = vmatpush2.msra.mxu0 0.0
        %1794 = vmatprep.subr.mxu0 0.0
        %1795 = vmatpush2.msra.mxu0 0.0
        %1796 = vmatprep.mubr.f32.mxu0 0.0
        %1797 = vmatmul.mubr.f32.gmra.mxu0 %v254
        %v1798 = vpop.f32.mrf.mxu0
        %v1799 = vadd.f32 0.0, %v1798
        %v1800 = vpop.f32.mrf.mxu0
        %1801 = vdwg.mxu0
        %s1802 = scalar_lea.vmem %s3, 96
        %v1803 = vld [vmem:[%s1802] sm:$0xff]
        %v1804 = vld [vmem:[%s1802 + $0x8] sm:$0xff]
        %v1805 = vld [vmem:[%s1802 + $0x10] sm:$0xff]
        %v1806 = vld [vmem:[%s1802 + $0x18] sm:$0xff]
        %1807 = vmatprep.subr.mxu0 0.0
        %1808 = vmatpush1.msra.mxu0 0.0
        %1809 = vmatprep.subr.mxu0 0.0
        %1810 = vmatpush1.msra.mxu0 0.0
        %1811 = vmatprep.subr.mxu0 0.0
        %1812 = vmatpush1.msra.mxu0 0.0
        %1813 = vmatprep.subr.mxu0 0.0
        %1814 = vmatpush1.msra.mxu0 0.0
        %1815 = vmatprep.subr.mxu0 0.0
        %1816 = vmatpush1.msra.mxu0 0.0
        %1817 = vmatprep.subr.mxu0 0.0
        %1818 = vmatpush1.msra.mxu0 0.0
        %1819 = vmatprep.subr.mxu0 0.0
        %1820 = vmatpush1.msra.mxu0 0.0
        %1821 = vmatprep.subr.mxu0 0.0
        %1822 = vmatpush1.msra.mxu0 0.0
        %1823 = vmatprep.subr.mxu0 0.0
        %1824 = vmatpush1.msra.mxu0 0.0
        %1825 = vmatprep.subr.mxu0 0.0
        %1826 = vmatpush1.msra.mxu0 0.0
        %1827 = vmatprep.subr.mxu0 0.0
        %1828 = vmatpush1.msra.mxu0 0.0
        %1829 = vmatprep.subr.mxu0 0.0
        %1830 = vmatpush1.msra.mxu0 0.0
        %1831 = vmatprep.subr.mxu0 0.0
        %1832 = vmatpush1.msra.mxu0 %v1806
        %1833 = vmatprep.subr.mxu0 0.0
        %1834 = vmatpush1.msra.mxu0 %v1805
        %1835 = vmatprep.subr.mxu0 0.0
        %1836 = vmatpush1.msra.mxu0 %v1804
        %1837 = vmatprep.subr.mxu0 0.0
        %1838 = vmatpush1.msra.mxu0 %v1803
        %1839 = vmatprep.subr.mxu0 0.0
        %1840 = vmatpush2.msra.mxu0 0.0
        %1841 = vmatprep.subr.mxu0 0.0
        %1842 = vmatpush2.msra.mxu0 0.0
        %1843 = vmatprep.subr.mxu0 0.0
        %1844 = vmatpush2.msra.mxu0 0.0
        %1845 = vmatprep.subr.mxu0 0.0
        %1846 = vmatpush2.msra.mxu0 0.0
        %1847 = vmatprep.subr.mxu0 0.0
        %1848 = vmatpush2.msra.mxu0 0.0
        %1849 = vmatprep.subr.mxu0 0.0
        %1850 = vmatpush2.msra.mxu0 0.0
        %1851 = vmatprep.subr.mxu0 0.0
        %1852 = vmatpush2.msra.mxu0 0.0
        %1853 = vmatprep.subr.mxu0 0.0
        %1854 = vmatpush2.msra.mxu0 0.0
        %1855 = vmatprep.subr.mxu0 0.0
        %1856 = vmatpush2.msra.mxu0 0.0
        %1857 = vmatprep.subr.mxu0 0.0
        %1858 = vmatpush2.msra.mxu0 0.0
        %1859 = vmatprep.subr.mxu0 0.0
        %1860 = vmatpush2.msra.mxu0 0.0
        %1861 = vmatprep.subr.mxu0 0.0
        %1862 = vmatpush2.msra.mxu0 0.0
        %1863 = vmatprep.subr.mxu0 0.0
        %1864 = vmatpush2.msra.mxu0 0.0
        %1865 = vmatprep.subr.mxu0 0.0
        %1866 = vmatpush2.msra.mxu0 0.0
        %1867 = vmatprep.subr.mxu0 0.0
        %1868 = vmatpush2.msra.mxu0 0.0
        %1869 = vmatprep.subr.mxu0 0.0
        %1870 = vmatpush2.msra.mxu0 0.0
        %1871 = vmatprep.mubr.f32.mxu0 0.0
        %1872 = vmatmul.mubr.f32.gmra.mxu0 %v254
        %v1873 = vpop.f32.mrf.mxu0
        %v1874 = vadd.f32 0.0, %v1873
        %v1875 = vpop.f32.mrf.mxu0
        %1876 = vdwg.mxu0
        %v1878 = vsel %vm474, %v1724, 0
        %v1881 = vsel %vm474, %v1799, 0
        %1883 = vmatprep.subr.mxu0 0.0
        %1884 = vmatpush1.xpose.msra.mxu0 0.0
        %1885 = vmatprep.subr.mxu0 0.0
        %1886 = vmatpush1.xpose.msra.mxu0 0.0
        %1887 = vmatprep.subr.mxu0 0.0
        %1888 = vmatpush1.xpose.msra.mxu0 0.0
        %1889 = vmatprep.subr.mxu0 0.0
        %1890 = vmatpush1.xpose.msra.mxu0 0.0
        %1891 = vmatprep.subr.mxu0 0.0
        %1892 = vmatpush1.xpose.msra.mxu0 0.0
        %1893 = vmatprep.subr.mxu0 0.0
        %1894 = vmatpush1.xpose.msra.mxu0 0.0
        %1895 = vmatprep.subr.mxu0 0.0
        %1896 = vmatpush1.xpose.msra.mxu0 0.0
        %1897 = vmatprep.subr.mxu0 0.0
        %1898 = vmatpush1.xpose.msra.mxu0 0.0
        %1899 = vmatprep.subr.mxu0 0.0
        %1900 = vmatpush1.xpose.msra.mxu0 0.0
        %1901 = vmatprep.subr.mxu0 0.0
        %1902 = vmatpush1.xpose.msra.mxu0 0.0
        %1903 = vmatprep.subr.mxu0 0.0
        %1904 = vmatpush1.xpose.msra.mxu0 0.0
        %1905 = vmatprep.subr.mxu0 0.0
        %1906 = vmatpush1.xpose.msra.mxu0 0.0
        %1907 = vmatprep.subr.mxu0 0.0
        %1908 = vmatpush1.xpose.msra.mxu0 0.0
        %1909 = vmatprep.subr.mxu0 0.0
        %1910 = vmatpush1.xpose.msra.mxu0 0.0
        %1911 = vmatprep.subr.mxu0 0.0
        %1912 = vmatpush1.xpose.msra.mxu0 0.0
        %1913 = vmatprep.subr.mxu0 0.0
        %1914 = vmatpush1.xpose.msra.mxu0 %v1881
        %1915 = vmatprep.subr.mxu0 0.0
        %1916 = vmatpush2.xpose.msra.mxu0 0.0
        %1917 = vmatprep.subr.mxu0 0.0
        %1918 = vmatpush2.xpose.msra.mxu0 0.0
        %1919 = vmatprep.subr.mxu0 0.0
        %1920 = vmatpush2.xpose.msra.mxu0 0.0
        %1921 = vmatprep.subr.mxu0 0.0
        %1922 = vmatpush2.xpose.msra.mxu0 0.0
        %1923 = vmatprep.subr.mxu0 0.0
        %1924 = vmatpush2.xpose.msra.mxu0 0.0
        %1925 = vmatprep.subr.mxu0 0.0
        %1926 = vmatpush2.xpose.msra.mxu0 0.0
        %1927 = vmatprep.subr.mxu0 0.0
        %1928 = vmatpush2.xpose.msra.mxu0 0.0
        %1929 = vmatprep.subr.mxu0 0.0
        %1930 = vmatpush2.xpose.msra.mxu0 0.0
        %1931 = vmatprep.subr.mxu0 0.0
        %1932 = vmatpush2.xpose.msra.mxu0 0.0
        %1933 = vmatprep.subr.mxu0 0.0
        %1934 = vmatpush2.xpose.msra.mxu0 0.0
        %1935 = vmatprep.subr.mxu0 0.0
        %1936 = vmatpush2.xpose.msra.mxu0 0.0
        %1937 = vmatprep.subr.mxu0 0.0
        %1938 = vmatpush2.xpose.msra.mxu0 0.0
        %1939 = vmatprep.subr.mxu0 0.0
        %1940 = vmatpush2.xpose.msra.mxu0 0.0
        %1941 = vmatprep.subr.mxu0 0.0
        %1942 = vmatpush2.xpose.msra.mxu0 0.0
        %1943 = vmatprep.subr.mxu0 0.0
        %1944 = vmatpush2.xpose.msra.mxu0 0.0
        %1945 = vmatprep.subr.mxu0 0.0
        %1946 = vmatpush2.xpose.msra.mxu0 0.0
        %1947 = vmatprep.mubr.f32.mxu0 0.0
        %1948 = vmatmul.mubr.f32.gmra.mxu0 %v1878
        %v1949 = vpop.f32.mrf.mxu0
        %v1950 = vadd.f32 0.0, %v1949
        %v1951 = vpop.f32.mrf.mxu0
        %1952 = vdwg.mxu0
        %v1953 = vsel %vm551, %v1950, -inf
        %1954 = vmax.xlane.f32.xlu0 %v1953
        %v1955 = vpop.xlane.xlu0 %1954
        %v1956 = vsub.f32 %v1950, %v1955
        %v1957 = vmul.f32 %v1956, 1.442695
        %v1958 = vpow.pop %v1957
        %v1959 = vsel %vm551, %v1958, 0.0
        %1960 = vadd.xlane.f32.xlu0 %v1959
        %v1961 = vpop.xlane.xlu0 %1960
        %v1962 = vrcp.pop %v1961
        %v1963 = vmul.f32 %v1958, %v1962
        %v1965 = vsel %vm551, %v1963, 0
        %1967 = vmatprep.subr.mxu0 0.0
        %1968 = vmatpush1.msra.mxu0 0.0
        %1969 = vmatprep.subr.mxu0 0.0
        %1970 = vmatpush1.msra.mxu0 0.0
        %1971 = vmatprep.subr.mxu0 0.0
        %1972 = vmatpush1.msra.mxu0 0.0
        %1973 = vmatprep.subr.mxu0 0.0
        %1974 = vmatpush1.msra.mxu0 0.0
        %1975 = vmatprep.subr.mxu0 0.0
        %1976 = vmatpush1.msra.mxu0 0.0
        %1977 = vmatprep.subr.mxu0 0.0
        %1978 = vmatpush1.msra.mxu0 0.0
        %1979 = vmatprep.subr.mxu0 0.0
        %1980 = vmatpush1.msra.mxu0 0.0
        %1981 = vmatprep.subr.mxu0 0.0
        %1982 = vmatpush1.msra.mxu0 0.0
        %1983 = vmatprep.subr.mxu0 0.0
        %1984 = vmatpush1.msra.mxu0 0.0
        %1985 = vmatprep.subr.mxu0 0.0
        %1986 = vmatpush1.msra.mxu0 0.0
        %1987 = vmatprep.subr.mxu0 0.0
        %1988 = vmatpush1.msra.mxu0 0.0
        %1989 = vmatprep.subr.mxu0 0.0
        %1990 = vmatpush1.msra.mxu0 0.0
        %1991 = vmatprep.subr.mxu0 0.0
        %1992 = vmatpush1.msra.mxu0 0.0
        %1993 = vmatprep.subr.mxu0 0.0
        %1994 = vmatpush1.msra.mxu0 0.0
        %1995 = vmatprep.subr.mxu0 0.0
        %1996 = vmatpush1.msra.mxu0 0.0
        %1997 = vmatprep.subr.mxu0 0.0
        %1998 = vmatpush1.msra.mxu0 %v1874
        %1999 = vmatprep.subr.mxu0 0.0
        %2000 = vmatpush2.msra.mxu0 0.0
        %2001 = vmatprep.subr.mxu0 0.0
        %2002 = vmatpush2.msra.mxu0 0.0
        %2003 = vmatprep.subr.mxu0 0.0
        %2004 = vmatpush2.msra.mxu0 0.0
        %2005 = vmatprep.subr.mxu0 0.0
        %2006 = vmatpush2.msra.mxu0 0.0
        %2007 = vmatprep.subr.mxu0 0.0
        %2008 = vmatpush2.msra.mxu0 0.0
        %2009 = vmatprep.subr.mxu0 0.0
        %2010 = vmatpush2.msra.mxu0 0.0
        %2011 = vmatprep.subr.mxu0 0.0
        %2012 = vmatpush2.msra.mxu0 0.0
        %2013 = vmatprep.subr.mxu0 0.0
        %2014 = vmatpush2.msra.mxu0 0.0
        %2015 = vmatprep.subr.mxu0 0.0
        %2016 = vmatpush2.msra.mxu0 0.0
        %2017 = vmatprep.subr.mxu0 0.0
        %2018 = vmatpush2.msra.mxu0 0.0
        %2019 = vmatprep.subr.mxu0 0.0
        %2020 = vmatpush2.msra.mxu0 0.0
        %2021 = vmatprep.subr.mxu0 0.0
        %2022 = vmatpush2.msra.mxu0 0.0
        %2023 = vmatprep.subr.mxu0 0.0
        %2024 = vmatpush2.msra.mxu0 0.0
        %2025 = vmatprep.subr.mxu0 0.0
        %2026 = vmatpush2.msra.mxu0 0.0
        %2027 = vmatprep.subr.mxu0 0.0
        %2028 = vmatpush2.msra.mxu0 0.0
        %2029 = vmatprep.subr.mxu0 0.0
        %2030 = vmatpush2.msra.mxu0 0.0
        %2031 = vmatprep.mubr.f32.mxu0 0.0
        %2032 = vmatmul.mubr.f32.gmra.mxu0 %v1965
        %v2033 = vpop.f32.mrf.mxu0
        %v2034 = vadd.f32 0.0, %v2033
        %v2035 = vpop.f32.mrf.mxu0
        %2036 = vdwg.mxu0
        %s2037 = scalar_lea.vmem %s4, 192
        %v2038 = vld [vmem:[%s2037] sm:$0xff]
        %v2039 = vld [vmem:[%s2037 + $0x8] sm:$0xff]
        %v2040 = vld [vmem:[%s2037 + $0x10] sm:$0xff]
        %v2041 = vld [vmem:[%s2037 + $0x18] sm:$0xff]
        %v2042 = vld [vmem:[%s2037 + $0x20] sm:$0xff]
        %v2043 = vld [vmem:[%s2037 + $0x28] sm:$0xff]
        %v2044 = vld [vmem:[%s2037 + $0x30] sm:$0xff]
        %v2045 = vld [vmem:[%s2037 + $0x38] sm:$0xff]
        %v2047 = vsel %vm474, %v2034, 0
        %2049 = vmatprep.subr.mxu0 0.0
        %2050 = vmatpush1.msra.mxu0 0.0
        %2051 = vmatprep.subr.mxu0 0.0
        %2052 = vmatpush1.msra.mxu0 0.0
        %2053 = vmatprep.subr.mxu0 0.0
        %2054 = vmatpush1.msra.mxu0 0.0
        %2055 = vmatprep.subr.mxu0 0.0
        %2056 = vmatpush1.msra.mxu0 0.0
        %2057 = vmatprep.subr.mxu0 0.0
        %2058 = vmatpush1.msra.mxu0 0.0
        %2059 = vmatprep.subr.mxu0 0.0
        %2060 = vmatpush1.msra.mxu0 0.0
        %2061 = vmatprep.subr.mxu0 0.0
        %2062 = vmatpush1.msra.mxu0 0.0
        %2063 = vmatprep.subr.mxu0 0.0
        %2064 = vmatpush1.msra.mxu0 0.0
        %2065 = vmatprep.subr.mxu0 0.0
        %2066 = vmatpush1.msra.mxu0 %v2045
        %2067 = vmatprep.subr.mxu0 0.0
        %2068 = vmatpush1.msra.mxu0 %v2044
        %2069 = vmatprep.subr.mxu0 0.0
        %2070 = vmatpush1.msra.mxu0 %v2043
        %2071 = vmatprep.subr.mxu0 0.0
        %2072 = vmatpush1.msra.mxu0 %v2042
        %2073 = vmatprep.subr.mxu0 0.0
        %2074 = vmatpush1.msra.mxu0 %v2041
        %2075 = vmatprep.subr.mxu0 0.0
        %2076 = vmatpush1.msra.mxu0 %v2040
        %2077 = vmatprep.subr.mxu0 0.0
        %2078 = vmatpush1.msra.mxu0 %v2039
        %2079 = vmatprep.subr.mxu0 0.0
        %2080 = vmatpush1.msra.mxu0 %v2038
        %2081 = vmatprep.subr.mxu0 0.0
        %2082 = vmatpush2.msra.mxu0 0.0
        %2083 = vmatprep.subr.mxu0 0.0
        %2084 = vmatpush2.msra.mxu0 0.0
        %2085 = vmatprep.subr.mxu0 0.0
        %2086 = vmatpush2.msra.mxu0 0.0
        %2087 = vmatprep.subr.mxu0 0.0
        %2088 = vmatpush2.msra.mxu0 0.0
        %2089 = vmatprep.subr.mxu0 0.0
        %2090 = vmatpush2.msra.mxu0 0.0
        %2091 = vmatprep.subr.mxu0 0.0
        %2092 = vmatpush2.msra.mxu0 0.0
        %2093 = vmatprep.subr.mxu0 0.0
        %2094 = vmatpush2.msra.mxu0 0.0
        %2095 = vmatprep.subr.mxu0 0.0
        %2096 = vmatpush2.msra.mxu0 0.0
        %2097 = vmatprep.subr.mxu0 0.0
        %2098 = vmatpush2.msra.mxu0 0.0
        %2099 = vmatprep.subr.mxu0 0.0
        %2100 = vmatpush2.msra.mxu0 0.0
        %2101 = vmatprep.subr.mxu0 0.0
        %2102 = vmatpush2.msra.mxu0 0.0
        %2103 = vmatprep.subr.mxu0 0.0
        %2104 = vmatpush2.msra.mxu0 0.0
        %2105 = vmatprep.subr.mxu0 0.0
        %2106 = vmatpush2.msra.mxu0 0.0
        %2107 = vmatprep.subr.mxu0 0.0
        %2108 = vmatpush2.msra.mxu0 0.0
        %2109 = vmatprep.subr.mxu0 0.0
        %2110 = vmatpush2.msra.mxu0 0.0
        %2111 = vmatprep.subr.mxu0 0.0
        %2112 = vmatpush2.msra.mxu0 0.0
        %2113 = vmatprep.mubr.f32.mxu0 0.0
        %2114 = vmatmul.mubr.f32.gmra.mxu0 %v2047
        %v2115 = vpop.f32.mrf.mxu0
        %v2116 = vadd.f32 0.0, %v2115
        %v2117 = vpop.f32.mrf.mxu0
        %2118 = vdwg.mxu0
        %v2119 = vadd.f32 %v1651, %v2116
        %s2120 = scalar_lea.vmem %s1, 128
        %v2121 = vld [vmem:[%s2120] sm:$0xff]
        %v2122 = vld [vmem:[%s2120 + $0x8] sm:$0xff]
        %v2123 = vld [vmem:[%s2120 + $0x10] sm:$0xff]
        %v2124 = vld [vmem:[%s2120 + $0x18] sm:$0xff]
        %2125 = vmatprep.subr.mxu0 0.0
        %2126 = vmatpush1.msra.mxu0 0.0
        %2127 = vmatprep.subr.mxu0 0.0
        %2128 = vmatpush1.msra.mxu0 0.0
        %2129 = vmatprep.subr.mxu0 0.0
        %2130 = vmatpush1.msra.mxu0 0.0
        %2131 = vmatprep.subr.mxu0 0.0
        %2132 = vmatpush1.msra.mxu0 0.0
        %2133 = vmatprep.subr.mxu0 0.0
        %2134 = vmatpush1.msra.mxu0 0.0
        %2135 = vmatprep.subr.mxu0 0.0
        %2136 = vmatpush1.msra.mxu0 0.0
        %2137 = vmatprep.subr.mxu0 0.0
        %2138 = vmatpush1.msra.mxu0 0.0
        %2139 = vmatprep.subr.mxu0 0.0
        %2140 = vmatpush1.msra.mxu0 0.0
        %2141 = vmatprep.subr.mxu0 0.0
        %2142 = vmatpush1.msra.mxu0 0.0
        %2143 = vmatprep.subr.mxu0 0.0
        %2144 = vmatpush1.msra.mxu0 0.0
        %2145 = vmatprep.subr.mxu0 0.0
        %2146 = vmatpush1.msra.mxu0 0.0
        %2147 = vmatprep.subr.mxu0 0.0
        %2148 = vmatpush1.msra.mxu0 0.0
        %2149 = vmatprep.subr.mxu0 0.0
        %2150 = vmatpush1.msra.mxu0 %v2124
        %2151 = vmatprep.subr.mxu0 0.0
        %2152 = vmatpush1.msra.mxu0 %v2123
        %2153 = vmatprep.subr.mxu0 0.0
        %2154 = vmatpush1.msra.mxu0 %v2122
        %2155 = vmatprep.subr.mxu0 0.0
        %2156 = vmatpush1.msra.mxu0 %v2121
        %2157 = vmatprep.subr.mxu0 0.0
        %2158 = vmatpush2.msra.mxu0 0.0
        %2159 = vmatprep.subr.mxu0 0.0
        %2160 = vmatpush2.msra.mxu0 0.0
        %2161 = vmatprep.subr.mxu0 0.0
        %2162 = vmatpush2.msra.mxu0 0.0
        %2163 = vmatprep.subr.mxu0 0.0
        %2164 = vmatpush2.msra.mxu0 0.0
        %2165 = vmatprep.subr.mxu0 0.0
        %2166 = vmatpush2.msra.mxu0 0.0
        %2167 = vmatprep.subr.mxu0 0.0
        %2168 = vmatpush2.msra.mxu0 0.0
        %2169 = vmatprep.subr.mxu0 0.0
        %2170 = vmatpush2.msra.mxu0 0.0
        %2171 = vmatprep.subr.mxu0 0.0
        %2172 = vmatpush2.msra.mxu0 0.0
        %2173 = vmatprep.subr.mxu0 0.0
        %2174 = vmatpush2.msra.mxu0 0.0
        %2175 = vmatprep.subr.mxu0 0.0
        %2176 = vmatpush2.msra.mxu0 0.0
        %2177 = vmatprep.subr.mxu0 0.0
        %2178 = vmatpush2.msra.mxu0 0.0
        %2179 = vmatprep.subr.mxu0 0.0
        %2180 = vmatpush2.msra.mxu0 0.0
        %2181 = vmatprep.subr.mxu0 0.0
        %2182 = vmatpush2.msra.mxu0 0.0
        %2183 = vmatprep.subr.mxu0 0.0
        %2184 = vmatpush2.msra.mxu0 0.0
        %2185 = vmatprep.subr.mxu0 0.0
        %2186 = vmatpush2.msra.mxu0 0.0
        %2187 = vmatprep.subr.mxu0 0.0
        %2188 = vmatpush2.msra.mxu0 0.0
        %2189 = vmatprep.mubr.f32.mxu0 0.0
        %2190 = vmatmul.mubr.f32.gmra.mxu0 %v254
        %v2191 = vpop.f32.mrf.mxu0
        %v2192 = vadd.f32 0.0, %v2191
        %v2193 = vpop.f32.mrf.mxu0
        %2194 = vdwg.mxu0
        %s2195 = scalar_lea.vmem %s2, 128
        %v2196 = vld [vmem:[%s2195] sm:$0xff]
        %v2197 = vld [vmem:[%s2195 + $0x8] sm:$0xff]
        %v2198 = vld [vmem:[%s2195 + $0x10] sm:$0xff]
        %v2199 = vld [vmem:[%s2195 + $0x18] sm:$0xff]
        %2200 = vmatprep.subr.mxu0 0.0
        %2201 = vmatpush1.msra.mxu0 0.0
        %2202 = vmatprep.subr.mxu0 0.0
        %2203 = vmatpush1.msra.mxu0 0.0
        %2204 = vmatprep.subr.mxu0 0.0
        %2205 = vmatpush1.msra.mxu0 0.0
        %2206 = vmatprep.subr.mxu0 0.0
        %2207 = vmatpush1.msra.mxu0 0.0
        %2208 = vmatprep.subr.mxu0 0.0
        %2209 = vmatpush1.msra.mxu0 0.0
        %2210 = vmatprep.subr.mxu0 0.0
        %2211 = vmatpush1.msra.mxu0 0.0
        %2212 = vmatprep.subr.mxu0 0.0
        %2213 = vmatpush1.msra.mxu0 0.0
        %2214 = vmatprep.subr.mxu0 0.0
        %2215 = vmatpush1.msra.mxu0 0.0
        %2216 = vmatprep.subr.mxu0 0.0
        %2217 = vmatpush1.msra.mxu0 0.0
        %2218 = vmatprep.subr.mxu0 0.0
        %2219 = vmatpush1.msra.mxu0 0.0
        %2220 = vmatprep.subr.mxu0 0.0
        %2221 = vmatpush1.msra.mxu0 0.0
        %2222 = vmatprep.subr.mxu0 0.0
        %2223 = vmatpush1.msra.mxu0 0.0
        %2224 = vmatprep.subr.mxu0 0.0
        %2225 = vmatpush1.msra.mxu0 %v2199
        %2226 = vmatprep.subr.mxu0 0.0
        %2227 = vmatpush1.msra.mxu0 %v2198
        %2228 = vmatprep.subr.mxu0 0.0
        %2229 = vmatpush1.msra.mxu0 %v2197
        %2230 = vmatprep.subr.mxu0 0.0
        %2231 = vmatpush1.msra.mxu0 %v2196
        %2232 = vmatprep.subr.mxu0 0.0
        %2233 = vmatpush2.msra.mxu0 0.0
        %2234 = vmatprep.subr.mxu0 0.0
        %2235 = vmatpush2.msra.mxu0 0.0
        %2236 = vmatprep.subr.mxu0 0.0
        %2237 = vmatpush2.msra.mxu0 0.0
        %2238 = vmatprep.subr.mxu0 0.0
        %2239 = vmatpush2.msra.mxu0 0.0
        %2240 = vmatprep.subr.mxu0 0.0
        %2241 = vmatpush2.msra.mxu0 0.0
        %2242 = vmatprep.subr.mxu0 0.0
        %2243 = vmatpush2.msra.mxu0 0.0
        %2244 = vmatprep.subr.mxu0 0.0
        %2245 = vmatpush2.msra.mxu0 0.0
        %2246 = vmatprep.subr.mxu0 0.0
        %2247 = vmatpush2.msra.mxu0 0.0
        %2248 = vmatprep.subr.mxu0 0.0
        %2249 = vmatpush2.msra.mxu0 0.0
        %2250 = vmatprep.subr.mxu0 0.0
        %2251 = vmatpush2.msra.mxu0 0.0
        %2252 = vmatprep.subr.mxu0 0.0
        %2253 = vmatpush2.msra.mxu0 0.0
        %2254 = vmatprep.subr.mxu0 0.0
        %2255 = vmatpush2.msra.mxu0 0.0
        %2256 = vmatprep.subr.mxu0 0.0
        %2257 = vmatpush2.msra.mxu0 0.0
        %2258 = vmatprep.subr.mxu0 0.0
        %2259 = vmatpush2.msra.mxu0 0.0
        %2260 = vmatprep.subr.mxu0 0.0
        %2261 = vmatpush2.msra.mxu0 0.0
        %2262 = vmatprep.subr.mxu0 0.0
        %2263 = vmatpush2.msra.mxu0 0.0
        %2264 = vmatprep.mubr.f32.mxu0 0.0
        %2265 = vmatmul.mubr.f32.gmra.mxu0 %v254
        %v2266 = vpop.f32.mrf.mxu0
        %v2267 = vadd.f32 0.0, %v2266
        %v2268 = vpop.f32.mrf.mxu0
        %2269 = vdwg.mxu0
        %s2270 = scalar_lea.vmem %s3, 128
        %v2271 = vld [vmem:[%s2270] sm:$0xff]
        %v2272 = vld [vmem:[%s2270 + $0x8] sm:$0xff]
        %v2273 = vld [vmem:[%s2270 + $0x10] sm:$0xff]
        %v2274 = vld [vmem:[%s2270 + $0x18] sm:$0xff]
        %2275 = vmatprep.subr.mxu0 0.0
        %2276 = vmatpush1.msra.mxu0 0.0
        %2277 = vmatprep.subr.mxu0 0.0
        %2278 = vmatpush1.msra.mxu0 0.0
        %2279 = vmatprep.subr.mxu0 0.0
        %2280 = vmatpush1.msra.mxu0 0.0
        %2281 = vmatprep.subr.mxu0 0.0
        %2282 = vmatpush1.msra.mxu0 0.0
        %2283 = vmatprep.subr.mxu0 0.0
        %2284 = vmatpush1.msra.mxu0 0.0
        %2285 = vmatprep.subr.mxu0 0.0
        %2286 = vmatpush1.msra.mxu0 0.0
        %2287 = vmatprep.subr.mxu0 0.0
        %2288 = vmatpush1.msra.mxu0 0.0
        %2289 = vmatprep.subr.mxu0 0.0
        %2290 = vmatpush1.msra.mxu0 0.0
        %2291 = vmatprep.subr.mxu0 0.0
        %2292 = vmatpush1.msra.mxu0 0.0
        %2293 = vmatprep.subr.mxu0 0.0
        %2294 = vmatpush1.msra.mxu0 0.0
        %2295 = vmatprep.subr.mxu0 0.0
        %2296 = vmatpush1.msra.mxu0 0.0
        %2297 = vmatprep.subr.mxu0 0.0
        %2298 = vmatpush1.msra.mxu0 0.0
        %2299 = vmatprep.subr.mxu0 0.0
        %2300 = vmatpush1.msra.mxu0 %v2274
        %2301 = vmatprep.subr.mxu0 0.0
        %2302 = vmatpush1.msra.mxu0 %v2273
        %2303 = vmatprep.subr.mxu0 0.0
        %2304 = vmatpush1.msra.mxu0 %v2272
        %2305 = vmatprep.subr.mxu0 0.0
        %2306 = vmatpush1.msra.mxu0 %v2271
        %2307 = vmatprep.subr.mxu0 0.0
        %2308 = vmatpush2.msra.mxu0 0.0
        %2309 = vmatprep.subr.mxu0 0.0
        %2310 = vmatpush2.msra.mxu0 0.0
        %2311 = vmatprep.subr.mxu0 0.0
        %2312 = vmatpush2.msra.mxu0 0.0
        %2313 = vmatprep.subr.mxu0 0.0
        %2314 = vmatpush2.msra.mxu0 0.0
        %2315 = vmatprep.subr.mxu0 0.0
        %2316 = vmatpush2.msra.mxu0 0.0
        %2317 = vmatprep.subr.mxu0 0.0
        %2318 = vmatpush2.msra.mxu0 0.0
        %2319 = vmatprep.subr.mxu0 0.0
        %2320 = vmatpush2.msra.mxu0 0.0
        %2321 = vmatprep.subr.mxu0 0.0
        %2322 = vmatpush2.msra.mxu0 0.0
        %2323 = vmatprep.subr.mxu0 0.0
        %2324 = vmatpush2.msra.mxu0 0.0
        %2325 = vmatprep.subr.mxu0 0.0
        %2326 = vmatpush2.msra.mxu0 0.0
        %2327 = vmatprep.subr.mxu0 0.0
        %2328 = vmatpush2.msra.mxu0 0.0
        %2329 = vmatprep.subr.mxu0 0.0
        %2330 = vmatpush2.msra.mxu0 0.0
        %2331 = vmatprep.subr.mxu0 0.0
        %2332 = vmatpush2.msra.mxu0 0.0
        %2333 = vmatprep.subr.mxu0 0.0
        %2334 = vmatpush2.msra.mxu0 0.0
        %2335 = vmatprep.subr.mxu0 0.0
        %2336 = vmatpush2.msra.mxu0 0.0
        %2337 = vmatprep.subr.mxu0 0.0
        %2338 = vmatpush2.msra.mxu0 0.0
        %2339 = vmatprep.mubr.f32.mxu0 0.0
        %2340 = vmatmul.mubr.f32.gmra.mxu0 %v254
        %v2341 = vpop.f32.mrf.mxu0
        %v2342 = vadd.f32 0.0, %v2341
        %v2343 = vpop.f32.mrf.mxu0
        %2344 = vdwg.mxu0
        %v2346 = vsel %vm474, %v2192, 0
        %v2349 = vsel %vm474, %v2267, 0
        %2351 = vmatprep.subr.mxu0 0.0
        %2352 = vmatpush1.xpose.msra.mxu0 0.0
        %2353 = vmatprep.subr.mxu0 0.0
        %2354 = vmatpush1.xpose.msra.mxu0 0.0
        %2355 = vmatprep.subr.mxu0 0.0
        %2356 = vmatpush1.xpose.msra.mxu0 0.0
        %2357 = vmatprep.subr.mxu0 0.0
        %2358 = vmatpush1.xpose.msra.mxu0 0.0
        %2359 = vmatprep.subr.mxu0 0.0
        %2360 = vmatpush1.xpose.msra.mxu0 0.0
        %2361 = vmatprep.subr.mxu0 0.0
        %2362 = vmatpush1.xpose.msra.mxu0 0.0
        %2363 = vmatprep.subr.mxu0 0.0
        %2364 = vmatpush1.xpose.msra.mxu0 0.0
        %2365 = vmatprep.subr.mxu0 0.0
        %2366 = vmatpush1.xpose.msra.mxu0 0.0
        %2367 = vmatprep.subr.mxu0 0.0
        %2368 = vmatpush1.xpose.msra.mxu0 0.0
        %2369 = vmatprep.subr.mxu0 0.0
        %2370 = vmatpush1.xpose.msra.mxu0 0.0
        %2371 = vmatprep.subr.mxu0 0.0
        %2372 = vmatpush1.xpose.msra.mxu0 0.0
        %2373 = vmatprep.subr.mxu0 0.0
        %2374 = vmatpush1.xpose.msra.mxu0 0.0
        %2375 = vmatprep.subr.mxu0 0.0
        %2376 = vmatpush1.xpose.msra.mxu0 0.0
        %2377 = vmatprep.subr.mxu0 0.0
        %2378 = vmatpush1.xpose.msra.mxu0 0.0
        %2379 = vmatprep.subr.mxu0 0.0
        %2380 = vmatpush1.xpose.msra.mxu0 0.0
        %2381 = vmatprep.subr.mxu0 0.0
        %2382 = vmatpush1.xpose.msra.mxu0 %v2349
        %2383 = vmatprep.subr.mxu0 0.0
        %2384 = vmatpush2.xpose.msra.mxu0 0.0
        %2385 = vmatprep.subr.mxu0 0.0
        %2386 = vmatpush2.xpose.msra.mxu0 0.0
        %2387 = vmatprep.subr.mxu0 0.0
        %2388 = vmatpush2.xpose.msra.mxu0 0.0
        %2389 = vmatprep.subr.mxu0 0.0
        %2390 = vmatpush2.xpose.msra.mxu0 0.0
        %2391 = vmatprep.subr.mxu0 0.0
        %2392 = vmatpush2.xpose.msra.mxu0 0.0
        %2393 = vmatprep.subr.mxu0 0.0
        %2394 = vmatpush2.xpose.msra.mxu0 0.0
        %2395 = vmatprep.subr.mxu0 0.0
        %2396 = vmatpush2.xpose.msra.mxu0 0.0
        %2397 = vmatprep.subr.mxu0 0.0
        %2398 = vmatpush2.xpose.msra.mxu0 0.0
        %2399 = vmatprep.subr.mxu0 0.0
        %2400 = vmatpush2.xpose.msra.mxu0 0.0
        %2401 = vmatprep.subr.mxu0 0.0
        %2402 = vmatpush2.xpose.msra.mxu0 0.0
        %2403 = vmatprep.subr.mxu0 0.0
        %2404 = vmatpush2.xpose.msra.mxu0 0.0
        %2405 = vmatprep.subr.mxu0 0.0
        %2406 = vmatpush2.xpose.msra.mxu0 0.0
        %2407 = vmatprep.subr.mxu0 0.0
        %2408 = vmatpush2.xpose.msra.mxu0 0.0
        %2409 = vmatprep.subr.mxu0 0.0
        %2410 = vmatpush2.xpose.msra.mxu0 0.0
        %2411 = vmatprep.subr.mxu0 0.0
        %2412 = vmatpush2.xpose.msra.mxu0 0.0
        %2413 = vmatprep.subr.mxu0 0.0
        %2414 = vmatpush2.xpose.msra.mxu0 0.0
        %2415 = vmatprep.mubr.f32.mxu0 0.0
        %2416 = vmatmul.mubr.f32.gmra.mxu0 %v2346
        %v2417 = vpop.f32.mrf.mxu0
        %v2418 = vadd.f32 0.0, %v2417
        %v2419 = vpop.f32.mrf.mxu0
        %2420 = vdwg.mxu0
        %v2421 = vsel %vm551, %v2418, -inf
        %2422 = vmax.xlane.f32.xlu0 %v2421
        %v2423 = vpop.xlane.xlu0 %2422
        %v2424 = vsub.f32 %v2418, %v2423
        %v2425 = vmul.f32 %v2424, 1.442695
        %v2426 = vpow.pop %v2425
        %v2427 = vsel %vm551, %v2426, 0.0
        %2428 = vadd.xlane.f32.xlu0 %v2427
        %v2429 = vpop.xlane.xlu0 %2428
        %v2430 = vrcp.pop %v2429
        %v2431 = vmul.f32 %v2426, %v2430
        %v2433 = vsel %vm551, %v2431, 0
        %2435 = vmatprep.subr.mxu0 0.0
        %2436 = vmatpush1.msra.mxu0 0.0
        %2437 = vmatprep.subr.mxu0 0.0
        %2438 = vmatpush1.msra.mxu0 0.0
        %2439 = vmatprep.subr.mxu0 0.0
        %2440 = vmatpush1.msra.mxu0 0.0
        %2441 = vmatprep.subr.mxu0 0.0
        %2442 = vmatpush1.msra.mxu0 0.0
        %2443 = vmatprep.subr.mxu0 0.0
        %2444 = vmatpush1.msra.mxu0 0.0
        %2445 = vmatprep.subr.mxu0 0.0
        %2446 = vmatpush1.msra.mxu0 0.0
        %2447 = vmatprep.subr.mxu0 0.0
        %2448 = vmatpush1.msra.mxu0 0.0
        %2449 = vmatprep.subr.mxu0 0.0
        %2450 = vmatpush1.msra.mxu0 0.0
        %2451 = vmatprep.subr.mxu0 0.0
        %2452 = vmatpush1.msra.mxu0 0.0
        %2453 = vmatprep.subr.mxu0 0.0
        %2454 = vmatpush1.msra.mxu0 0.0
        %2455 = vmatprep.subr.mxu0 0.0
        %2456 = vmatpush1.msra.mxu0 0.0
        %2457 = vmatprep.subr.mxu0 0.0
        %2458 = vmatpush1.msra.mxu0 0.0
        %2459 = vmatprep.subr.mxu0 0.0
        %2460 = vmatpush1.msra.mxu0 0.0
        %2461 = vmatprep.subr.mxu0 0.0
        %2462 = vmatpush1.msra.mxu0 0.0
        %2463 = vmatprep.subr.mxu0 0.0
        %2464 = vmatpush1.msra.mxu0 0.0
        %2465 = vmatprep.subr.mxu0 0.0
        %2466 = vmatpush1.msra.mxu0 %v2342
        %2467 = vmatprep.subr.mxu0 0.0
        %2468 = vmatpush2.msra.mxu0 0.0
        %2469 = vmatprep.subr.mxu0 0.0
        %2470 = vmatpush2.msra.mxu0 0.0
        %2471 = vmatprep.subr.mxu0 0.0
        %2472 = vmatpush2.msra.mxu0 0.0
        %2473 = vmatprep.subr.mxu0 0.0
        %2474 = vmatpush2.msra.mxu0 0.0
        %2475 = vmatprep.subr.mxu0 0.0
        %2476 = vmatpush2.msra.mxu0 0.0
        %2477 = vmatprep.subr.mxu0 0.0
        %2478 = vmatpush2.msra.mxu0 0.0
        %2479 = vmatprep.subr.mxu0 0.0
        %2480 = vmatpush2.msra.mxu0 0.0
        %2481 = vmatprep.subr.mxu0 0.0
        %2482 = vmatpush2.msra.mxu0 0.0
        %2483 = vmatprep.subr.mxu0 0.0
        %2484 = vmatpush2.msra.mxu0 0.0
        %2485 = vmatprep.subr.mxu0 0.0
        %2486 = vmatpush2.msra.mxu0 0.0
        %2487 = vmatprep.subr.mxu0 0.0
        %2488 = vmatpush2.msra.mxu0 0.0
        %2489 = vmatprep.subr.mxu0 0.0
        %2490 = vmatpush2.msra.mxu0 0.0
        %2491 = vmatprep.subr.mxu0 0.0
        %2492 = vmatpush2.msra.mxu0 0.0
        %2493 = vmatprep.subr.mxu0 0.0
        %2494 = vmatpush2.msra.mxu0 0.0
        %2495 = vmatprep.subr.mxu0 0.0
        %2496 = vmatpush2.msra.mxu0 0.0
        %2497 = vmatprep.subr.mxu0 0.0
        %2498 = vmatpush2.msra.mxu0 0.0
        %2499 = vmatprep.mubr.f32.mxu0 0.0
        %2500 = vmatmul.mubr.f32.gmra.mxu0 %v2433
        %v2501 = vpop.f32.mrf.mxu0
        %v2502 = vadd.f32 0.0, %v2501
        %v2503 = vpop.f32.mrf.mxu0
        %2504 = vdwg.mxu0
        %s2505 = scalar_lea.vmem %s4, 256
        %v2506 = vld [vmem:[%s2505] sm:$0xff]
        %v2507 = vld [vmem:[%s2505 + $0x8] sm:$0xff]
        %v2508 = vld [vmem:[%s2505 + $0x10] sm:$0xff]
        %v2509 = vld [vmem:[%s2505 + $0x18] sm:$0xff]
        %v2510 = vld [vmem:[%s2505 + $0x20] sm:$0xff]
        %v2511 = vld [vmem:[%s2505 + $0x28] sm:$0xff]
        %v2512 = vld [vmem:[%s2505 + $0x30] sm:$0xff]
        %v2513 = vld [vmem:[%s2505 + $0x38] sm:$0xff]
        %v2515 = vsel %vm474, %v2502, 0
        %2517 = vmatprep.subr.mxu0 0.0
        %2518 = vmatpush1.msra.mxu0 0.0
        %2519 = vmatprep.subr.mxu0 0.0
        %2520 = vmatpush1.msra.mxu0 0.0
        %2521 = vmatprep.subr.mxu0 0.0
        %2522 = vmatpush1.msra.mxu0 0.0
        %2523 = vmatprep.subr.mxu0 0.0
        %2524 = vmatpush1.msra.mxu0 0.0
        %2525 = vmatprep.subr.mxu0 0.0
        %2526 = vmatpush1.msra.mxu0 0.0
        %2527 = vmatprep.subr.mxu0 0.0
        %2528 = vmatpush1.msra.mxu0 0.0
        %2529 = vmatprep.subr.mxu0 0.0
        %2530 = vmatpush1.msra.mxu0 0.0
        %2531 = vmatprep.subr.mxu0 0.0
        %2532 = vmatpush1.msra.mxu0 0.0
        %2533 = vmatprep.subr.mxu0 0.0
        %2534 = vmatpush1.msra.mxu0 %v2513
        %2535 = vmatprep.subr.mxu0 0.0
        %2536 = vmatpush1.msra.mxu0 %v2512
        %2537 = vmatprep.subr.mxu0 0.0
        %2538 = vmatpush1.msra.mxu0 %v2511
        %2539 = vmatprep.subr.mxu0 0.0
        %2540 = vmatpush1.msra.mxu0 %v2510
        %2541 = vmatprep.subr.mxu0 0.0
        %2542 = vmatpush1.msra.mxu0 %v2509
        %2543 = vmatprep.subr.mxu0 0.0
        %2544 = vmatpush1.msra.mxu0 %v2508
        %2545 = vmatprep.subr.mxu0 0.0
        %2546 = vmatpush1.msra.mxu0 %v2507
        %2547 = vmatprep.subr.mxu0 0.0
        %2548 = vmatpush1.msra.mxu0 %v2506
        %2549 = vmatprep.subr.mxu0 0.0
        %2550 = vmatpush2.msra.mxu0 0.0
        %2551 = vmatprep.subr.mxu0 0.0
        %2552 = vmatpush2.msra.mxu0 0.0
        %2553 = vmatprep.subr.mxu0 0.0
        %2554 = vmatpush2.msra.mxu0 0.0
        %2555 = vmatprep.subr.mxu0 0.0
        %2556 = vmatpush2.msra.mxu0 0.0
        %2557 = vmatprep.subr.mxu0 0.0
        %2558 = vmatpush2.msra.mxu0 0.0
        %2559 = vmatprep.subr.mxu0 0.0
        %2560 = vmatpush2.msra.mxu0 0.0
        %2561 = vmatprep.subr.mxu0 0.0
        %2562 = vmatpush2.msra.mxu0 0.0
        %2563 = vmatprep.subr.mxu0 0.0
        %2564 = vmatpush2.msra.mxu0 0.0
        %2565 = vmatprep.subr.mxu0 0.0
        %2566 = vmatpush2.msra.mxu0 0.0
        %2567 = vmatprep.subr.mxu0 0.0
        %2568 = vmatpush2.msra.mxu0 0.0
        %2569 = vmatprep.subr.mxu0 0.0
        %2570 = vmatpush2.msra.mxu0 0.0
        %2571 = vmatprep.subr.mxu0 0.0
        %2572 = vmatpush2.msra.mxu0 0.0
        %2573 = vmatprep.subr.mxu0 0.0
        %2574 = vmatpush2.msra.mxu0 0.0
        %2575 = vmatprep.subr.mxu0 0.0
        %2576 = vmatpush2.msra.mxu0 0.0
        %2577 = vmatprep.subr.mxu0 0.0
        %2578 = vmatpush2.msra.mxu0 0.0
        %2579 = vmatprep.subr.mxu0 0.0
        %2580 = vmatpush2.msra.mxu0 0.0
        %2581 = vmatprep.mubr.f32.mxu0 0.0
        %2582 = vmatmul.mubr.f32.gmra.mxu0 %v2515
        %v2583 = vpop.f32.mrf.mxu0
        %v2584 = vadd.f32 0.0, %v2583
        %v2585 = vpop.f32.mrf.mxu0
        %2586 = vdwg.mxu0
        %v2587 = vadd.f32 %v2119, %v2584
        %s2588 = scalar_lea.vmem %s1, 160
        %v2589 = vld [vmem:[%s2588] sm:$0xff]
        %v2590 = vld [vmem:[%s2588 + $0x8] sm:$0xff]
        %v2591 = vld [vmem:[%s2588 + $0x10] sm:$0xff]
        %v2592 = vld [vmem:[%s2588 + $0x18] sm:$0xff]
        %2593 = vmatprep.subr.mxu0 0.0
        %2594 = vmatpush1.msra.mxu0 0.0
        %2595 = vmatprep.subr.mxu0 0.0
        %2596 = vmatpush1.msra.mxu0 0.0
        %2597 = vmatprep.subr.mxu0 0.0
        %2598 = vmatpush1.msra.mxu0 0.0
        %2599 = vmatprep.subr.mxu0 0.0
        %2600 = vmatpush1.msra.mxu0 0.0
        %2601 = vmatprep.subr.mxu0 0.0
        %2602 = vmatpush1.msra.mxu0 0.0
        %2603 = vmatprep.subr.mxu0 0.0
        %2604 = vmatpush1.msra.mxu0 0.0
        %2605 = vmatprep.subr.mxu0 0.0
        %2606 = vmatpush1.msra.mxu0 0.0
        %2607 = vmatprep.subr.mxu0 0.0
        %2608 = vmatpush1.msra.mxu0 0.0
        %2609 = vmatprep.subr.mxu0 0.0
        %2610 = vmatpush1.msra.mxu0 0.0
        %2611 = vmatprep.subr.mxu0 0.0
        %2612 = vmatpush1.msra.mxu0 0.0
        %2613 = vmatprep.subr.mxu0 0.0
        %2614 = vmatpush1.msra.mxu0 0.0
        %2615 = vmatprep.subr.mxu0 0.0
        %2616 = vmatpush1.msra.mxu0 0.0
        %2617 = vmatprep.subr.mxu0 0.0
        %2618 = vmatpush1.msra.mxu0 %v2592
        %2619 = vmatprep.subr.mxu0 0.0
        %2620 = vmatpush1.msra.mxu0 %v2591
        %2621 = vmatprep.subr.mxu0 0.0
        %2622 = vmatpush1.msra.mxu0 %v2590
        %2623 = vmatprep.subr.mxu0 0.0
        %2624 = vmatpush1.msra.mxu0 %v2589
        %2625 = vmatprep.subr.mxu0 0.0
        %2626 = vmatpush2.msra.mxu0 0.0
        %2627 = vmatprep.subr.mxu0 0.0
        %2628 = vmatpush2.msra.mxu0 0.0
        %2629 = vmatprep.subr.mxu0 0.0
        %2630 = vmatpush2.msra.mxu0 0.0
        %2631 = vmatprep.subr.mxu0 0.0
        %2632 = vmatpush2.msra.mxu0 0.0
        %2633 = vmatprep.subr.mxu0 0.0
        %2634 = vmatpush2.msra.mxu0 0.0
        %2635 = vmatprep.subr.mxu0 0.0
        %2636 = vmatpush2.msra.mxu0 0.0
        %2637 = vmatprep.subr.mxu0 0.0
        %2638 = vmatpush2.msra.mxu0 0.0
        %2639 = vmatprep.subr.mxu0 0.0
        %2640 = vmatpush2.msra.mxu0 0.0
        %2641 = vmatprep.subr.mxu0 0.0
        %2642 = vmatpush2.msra.mxu0 0.0
        %2643 = vmatprep.subr.mxu0 0.0
        %2644 = vmatpush2.msra.mxu0 0.0
        %2645 = vmatprep.subr.mxu0 0.0
        %2646 = vmatpush2.msra.mxu0 0.0
        %2647 = vmatprep.subr.mxu0 0.0
        %2648 = vmatpush2.msra.mxu0 0.0
        %2649 = vmatprep.subr.mxu0 0.0
        %2650 = vmatpush2.msra.mxu0 0.0
        %2651 = vmatprep.subr.mxu0 0.0
        %2652 = vmatpush2.msra.mxu0 0.0
        %2653 = vmatprep.subr.mxu0 0.0
        %2654 = vmatpush2.msra.mxu0 0.0
        %2655 = vmatprep.subr.mxu0 0.0
        %2656 = vmatpush2.msra.mxu0 0.0
        %2657 = vmatprep.mubr.f32.mxu0 0.0
        %2658 = vmatmul.mubr.f32.gmra.mxu0 %v254
        %v2659 = vpop.f32.mrf.mxu0
        %v2660 = vadd.f32 0.0, %v2659
        %v2661 = vpop.f32.mrf.mxu0
        %2662 = vdwg.mxu0
        %s2663 = scalar_lea.vmem %s2, 160
        %v2664 = vld [vmem:[%s2663] sm:$0xff]
        %v2665 = vld [vmem:[%s2663 + $0x8] sm:$0xff]
        %v2666 = vld [vmem:[%s2663 + $0x10] sm:$0xff]
        %v2667 = vld [vmem:[%s2663 + $0x18] sm:$0xff]
        %2668 = vmatprep.subr.mxu0 0.0
        %2669 = vmatpush1.msra.mxu0 0.0
        %2670 = vmatprep.subr.mxu0 0.0
        %2671 = vmatpush1.msra.mxu0 0.0
        %2672 = vmatprep.subr.mxu0 0.0
        %2673 = vmatpush1.msra.mxu0 0.0
        %2674 = vmatprep.subr.mxu0 0.0
        %2675 = vmatpush1.msra.mxu0 0.0
        %2676 = vmatprep.subr.mxu0 0.0
        %2677 = vmatpush1.msra.mxu0 0.0
        %2678 = vmatprep.subr.mxu0 0.0
        %2679 = vmatpush1.msra.mxu0 0.0
        %2680 = vmatprep.subr.mxu0 0.0
        %2681 = vmatpush1.msra.mxu0 0.0
        %2682 = vmatprep.subr.mxu0 0.0
        %2683 = vmatpush1.msra.mxu0 0.0
        %2684 = vmatprep.subr.mxu0 0.0
        %2685 = vmatpush1.msra.mxu0 0.0
        %2686 = vmatprep.subr.mxu0 0.0
        %2687 = vmatpush1.msra.mxu0 0.0
        %2688 = vmatprep.subr.mxu0 0.0
        %2689 = vmatpush1.msra.mxu0 0.0
        %2690 = vmatprep.subr.mxu0 0.0
        %2691 = vmatpush1.msra.mxu0 0.0
        %2692 = vmatprep.subr.mxu0 0.0
        %2693 = vmatpush1.msra.mxu0 %v2667
        %2694 = vmatprep.subr.mxu0 0.0
        %2695 = vmatpush1.msra.mxu0 %v2666
        %2696 = vmatprep.subr.mxu0 0.0
        %2697 = vmatpush1.msra.mxu0 %v2665
        %2698 = vmatprep.subr.mxu0 0.0
        %2699 = vmatpush1.msra.mxu0 %v2664
        %2700 = vmatprep.subr.mxu0 0.0
        %2701 = vmatpush2.msra.mxu0 0.0
        %2702 = vmatprep.subr.mxu0 0.0
        %2703 = vmatpush2.msra.mxu0 0.0
        %2704 = vmatprep.subr.mxu0 0.0
        %2705 = vmatpush2.msra.mxu0 0.0
        %2706 = vmatprep.subr.mxu0 0.0
        %2707 = vmatpush2.msra.mxu0 0.0
        %2708 = vmatprep.subr.mxu0 0.0
        %2709 = vmatpush2.msra.mxu0 0.0
        %2710 = vmatprep.subr.mxu0 0.0
        %2711 = vmatpush2.msra.mxu0 0.0
        %2712 = vmatprep.subr.mxu0 0.0
        %2713 = vmatpush2.msra.mxu0 0.0
        %2714 = vmatprep.subr.mxu0 0.0
        %2715 = vmatpush2.msra.mxu0 0.0
        %2716 = vmatprep.subr.mxu0 0.0
        %2717 = vmatpush2.msra.mxu0 0.0
        %2718 = vmatprep.subr.mxu0 0.0
        %2719 = vmatpush2.msra.mxu0 0.0
        %2720 = vmatprep.subr.mxu0 0.0
        %2721 = vmatpush2.msra.mxu0 0.0
        %2722 = vmatprep.subr.mxu0 0.0
        %2723 = vmatpush2.msra.mxu0 0.0
        %2724 = vmatprep.subr.mxu0 0.0
        %2725 = vmatpush2.msra.mxu0 0.0
        %2726 = vmatprep.subr.mxu0 0.0
        %2727 = vmatpush2.msra.mxu0 0.0
        %2728 = vmatprep.subr.mxu0 0.0
        %2729 = vmatpush2.msra.mxu0 0.0
        %2730 = vmatprep.subr.mxu0 0.0
        %2731 = vmatpush2.msra.mxu0 0.0
        %2732 = vmatprep.mubr.f32.mxu0 0.0
        %2733 = vmatmul.mubr.f32.gmra.mxu0 %v254
        %v2734 = vpop.f32.mrf.mxu0
        %v2735 = vadd.f32 0.0, %v2734
        %v2736 = vpop.f32.mrf.mxu0
        %2737 = vdwg.mxu0
        %s2738 = scalar_lea.vmem %s3, 160
        %v2739 = vld [vmem:[%s2738] sm:$0xff]
        %v2740 = vld [vmem:[%s2738 + $0x8] sm:$0xff]
        %v2741 = vld [vmem:[%s2738 + $0x10] sm:$0xff]
        %v2742 = vld [vmem:[%s2738 + $0x18] sm:$0xff]
        %2743 = vmatprep.subr.mxu0 0.0
        %2744 = vmatpush1.msra.mxu0 0.0
        %2745 = vmatprep.subr.mxu0 0.0
        %2746 = vmatpush1.msra.mxu0 0.0
        %2747 = vmatprep.subr.mxu0 0.0
        %2748 = vmatpush1.msra.mxu0 0.0
        %2749 = vmatprep.subr.mxu0 0.0
        %2750 = vmatpush1.msra.mxu0 0.0
        %2751 = vmatprep.subr.mxu0 0.0
        %2752 = vmatpush1.msra.mxu0 0.0
        %2753 = vmatprep.subr.mxu0 0.0
        %2754 = vmatpush1.msra.mxu0 0.0
        %2755 = vmatprep.subr.mxu0 0.0
        %2756 = vmatpush1.msra.mxu0 0.0
        %2757 = vmatprep.subr.mxu0 0.0
        %2758 = vmatpush1.msra.mxu0 0.0
        %2759 = vmatprep.subr.mxu0 0.0
        %2760 = vmatpush1.msra.mxu0 0.0
        %2761 = vmatprep.subr.mxu0 0.0
        %2762 = vmatpush1.msra.mxu0 0.0
        %2763 = vmatprep.subr.mxu0 0.0
        %2764 = vmatpush1.msra.mxu0 0.0
        %2765 = vmatprep.subr.mxu0 0.0
        %2766 = vmatpush1.msra.mxu0 0.0
        %2767 = vmatprep.subr.mxu0 0.0
        %2768 = vmatpush1.msra.mxu0 %v2742
        %2769 = vmatprep.subr.mxu0 0.0
        %2770 = vmatpush1.msra.mxu0 %v2741
        %2771 = vmatprep.subr.mxu0 0.0
        %2772 = vmatpush1.msra.mxu0 %v2740
        %2773 = vmatprep.subr.mxu0 0.0
        %2774 = vmatpush1.msra.mxu0 %v2739
        %2775 = vmatprep.subr.mxu0 0.0
        %2776 = vmatpush2.msra.mxu0 0.0
        %2777 = vmatprep.subr.mxu0 0.0
        %2778 = vmatpush2.msra.mxu0 0.0
        %2779 = vmatprep.subr.mxu0 0.0
        %2780 = vmatpush2.msra.mxu0 0.0
        %2781 = vmatprep.subr.mxu0 0.0
        %2782 = vmatpush2.msra.mxu0 0.0
        %2783 = vmatprep.subr.mxu0 0.0
        %2784 = vmatpush2.msra.mxu0 0.0
        %2785 = vmatprep.subr.mxu0 0.0
        %2786 = vmatpush2.msra.mxu0 0.0
        %2787 = vmatprep.subr.mxu0 0.0
        %2788 = vmatpush2.msra.mxu0 0.0
        %2789 = vmatprep.subr.mxu0 0.0
        %2790 = vmatpush2.msra.mxu0 0.0
        %2791 = vmatprep.subr.mxu0 0.0
        %2792 = vmatpush2.msra.mxu0 0.0
        %2793 = vmatprep.subr.mxu0 0.0
        %2794 = vmatpush2.msra.mxu0 0.0
        %2795 = vmatprep.subr.mxu0 0.0
        %2796 = vmatpush2.msra.mxu0 0.0
        %2797 = vmatprep.subr.mxu0 0.0
        %2798 = vmatpush2.msra.mxu0 0.0
        %2799 = vmatprep.subr.mxu0 0.0
        %2800 = vmatpush2.msra.mxu0 0.0
        %2801 = vmatprep.subr.mxu0 0.0
        %2802 = vmatpush2.msra.mxu0 0.0
        %2803 = vmatprep.subr.mxu0 0.0
        %2804 = vmatpush2.msra.mxu0 0.0
        %2805 = vmatprep.subr.mxu0 0.0
        %2806 = vmatpush2.msra.mxu0 0.0
        %2807 = vmatprep.mubr.f32.mxu0 0.0
        %2808 = vmatmul.mubr.f32.gmra.mxu0 %v254
        %v2809 = vpop.f32.mrf.mxu0
        %v2810 = vadd.f32 0.0, %v2809
        %v2811 = vpop.f32.mrf.mxu0
        %2812 = vdwg.mxu0
        %v2814 = vsel %vm474, %v2660, 0
        %v2817 = vsel %vm474, %v2735, 0
        %2819 = vmatprep.subr.mxu0 0.0
        %2820 = vmatpush1.xpose.msra.mxu0 0.0
        %2821 = vmatprep.subr.mxu0 0.0
        %2822 = vmatpush1.xpose.msra.mxu0 0.0
        %2823 = vmatprep.subr.mxu0 0.0
        %2824 = vmatpush1.xpose.msra.mxu0 0.0
        %2825 = vmatprep.subr.mxu0 0.0
        %2826 = vmatpush1.xpose.msra.mxu0 0.0
        %2827 = vmatprep.subr.mxu0 0.0
        %2828 = vmatpush1.xpose.msra.mxu0 0.0
        %2829 = vmatprep.subr.mxu0 0.0
        %2830 = vmatpush1.xpose.msra.mxu0 0.0
        %2831 = vmatprep.subr.mxu0 0.0
        %2832 = vmatpush1.xpose.msra.mxu0 0.0
        %2833 = vmatprep.subr.mxu0 0.0
        %2834 = vmatpush1.xpose.msra.mxu0 0.0
        %2835 = vmatprep.subr.mxu0 0.0
        %2836 = vmatpush1.xpose.msra.mxu0 0.0
        %2837 = vmatprep.subr.mxu0 0.0
        %2838 = vmatpush1.xpose.msra.mxu0 0.0
        %2839 = vmatprep.subr.mxu0 0.0
        %2840 = vmatpush1.xpose.msra.mxu0 0.0
        %2841 = vmatprep.subr.mxu0 0.0
        %2842 = vmatpush1.xpose.msra.mxu0 0.0
        %2843 = vmatprep.subr.mxu0 0.0
        %2844 = vmatpush1.xpose.msra.mxu0 0.0
        %2845 = vmatprep.subr.mxu0 0.0
        %2846 = vmatpush1.xpose.msra.mxu0 0.0
        %2847 = vmatprep.subr.mxu0 0.0
        %2848 = vmatpush1.xpose.msra.mxu0 0.0
        %2849 = vmatprep.subr.mxu0 0.0
        %2850 = vmatpush1.xpose.msra.mxu0 %v2817
        %2851 = vmatprep.subr.mxu0 0.0
        %2852 = vmatpush2.xpose.msra.mxu0 0.0
        %2853 = vmatprep.subr.mxu0 0.0
        %2854 = vmatpush2.xpose.msra.mxu0 0.0
        %2855 = vmatprep.subr.mxu0 0.0
        %2856 = vmatpush2.xpose.msra.mxu0 0.0
        %2857 = vmatprep.subr.mxu0 0.0
        %2858 = vmatpush2.xpose.msra.mxu0 0.0
        %2859 = vmatprep.subr.mxu0 0.0
        %2860 = vmatpush2.xpose.msra.mxu0 0.0
        %2861 = vmatprep.subr.mxu0 0.0
        %2862 = vmatpush2.xpose.msra.mxu0 0.0
        %2863 = vmatprep.subr.mxu0 0.0
        %2864 = vmatpush2.xpose.msra.mxu0 0.0
        %2865 = vmatprep.subr.mxu0 0.0
        %2866 = vmatpush2.xpose.msra.mxu0 0.0
        %2867 = vmatprep.subr.mxu0 0.0
        %2868 = vmatpush2.xpose.msra.mxu0 0.0
        %2869 = vmatprep.subr.mxu0 0.0
        %2870 = vmatpush2.xpose.msra.mxu0 0.0
        %2871 = vmatprep.subr.mxu0 0.0
        %2872 = vmatpush2.xpose.msra.mxu0 0.0
        %2873 = vmatprep.subr.mxu0 0.0
        %2874 = vmatpush2.xpose.msra.mxu0 0.0
        %2875 = vmatprep.subr.mxu0 0.0
        %2876 = vmatpush2.xpose.msra.mxu0 0.0
        %2877 = vmatprep.subr.mxu0 0.0
        %2878 = vmatpush2.xpose.msra.mxu0 0.0
        %2879 = vmatprep.subr.mxu0 0.0
        %2880 = vmatpush2.xpose.msra.mxu0 0.0
        %2881 = vmatprep.subr.mxu0 0.0
        %2882 = vmatpush2.xpose.msra.mxu0 0.0
        %2883 = vmatprep.mubr.f32.mxu0 0.0
        %2884 = vmatmul.mubr.f32.gmra.mxu0 %v2814
        %v2885 = vpop.f32.mrf.mxu0
        %v2886 = vadd.f32 0.0, %v2885
        %v2887 = vpop.f32.mrf.mxu0
        %2888 = vdwg.mxu0
        %v2889 = vsel %vm551, %v2886, -inf
        %2890 = vmax.xlane.f32.xlu0 %v2889
        %v2891 = vpop.xlane.xlu0 %2890
        %v2892 = vsub.f32 %v2886, %v2891
        %v2893 = vmul.f32 %v2892, 1.442695
        %v2894 = vpow.pop %v2893
        %v2895 = vsel %vm551, %v2894, 0.0
        %2896 = vadd.xlane.f32.xlu0 %v2895
        %v2897 = vpop.xlane.xlu0 %2896
        %v2898 = vrcp.pop %v2897
        %v2899 = vmul.f32 %v2894, %v2898
        %v2901 = vsel %vm551, %v2899, 0
        %2903 = vmatprep.subr.mxu0 0.0
        %2904 = vmatpush1.msra.mxu0 0.0
        %2905 = vmatprep.subr.mxu0 0.0
        %2906 = vmatpush1.msra.mxu0 0.0
        %2907 = vmatprep.subr.mxu0 0.0
        %2908 = vmatpush1.msra.mxu0 0.0
        %2909 = vmatprep.subr.mxu0 0.0
        %2910 = vmatpush1.msra.mxu0 0.0
        %2911 = vmatprep.subr.mxu0 0.0
        %2912 = vmatpush1.msra.mxu0 0.0
        %2913 = vmatprep.subr.mxu0 0.0
        %2914 = vmatpush1.msra.mxu0 0.0
        %2915 = vmatprep.subr.mxu0 0.0
        %2916 = vmatpush1.msra.mxu0 0.0
        %2917 = vmatprep.subr.mxu0 0.0
        %2918 = vmatpush1.msra.mxu0 0.0
        %2919 = vmatprep.subr.mxu0 0.0
        %2920 = vmatpush1.msra.mxu0 0.0
        %2921 = vmatprep.subr.mxu0 0.0
        %2922 = vmatpush1.msra.mxu0 0.0
        %2923 = vmatprep.subr.mxu0 0.0
        %2924 = vmatpush1.msra.mxu0 0.0
        %2925 = vmatprep.subr.mxu0 0.0
        %2926 = vmatpush1.msra.mxu0 0.0
        %2927 = vmatprep.subr.mxu0 0.0
        %2928 = vmatpush1.msra.mxu0 0.0
        %2929 = vmatprep.subr.mxu0 0.0
        %2930 = vmatpush1.msra.mxu0 0.0
        %2931 = vmatprep.subr.mxu0 0.0
        %2932 = vmatpush1.msra.mxu0 0.0
        %2933 = vmatprep.subr.mxu0 0.0
        %2934 = vmatpush1.msra.mxu0 %v2810
        %2935 = vmatprep.subr.mxu0 0.0
        %2936 = vmatpush2.msra.mxu0 0.0
        %2937 = vmatprep.subr.mxu0 0.0
        %2938 = vmatpush2.msra.mxu0 0.0
        %2939 = vmatprep.subr.mxu0 0.0
        %2940 = vmatpush2.msra.mxu0 0.0
        %2941 = vmatprep.subr.mxu0 0.0
        %2942 = vmatpush2.msra.mxu0 0.0
        %2943 = vmatprep.subr.mxu0 0.0
        %2944 = vmatpush2.msra.mxu0 0.0
        %2945 = vmatprep.subr.mxu0 0.0
        %2946 = vmatpush2.msra.mxu0 0.0
        %2947 = vmatprep.subr.mxu0 0.0
        %2948 = vmatpush2.msra.mxu0 0.0
        %2949 = vmatprep.subr.mxu0 0.0
        %2950 = vmatpush2.msra.mxu0 0.0
        %2951 = vmatprep.subr.mxu0 0.0
        %2952 = vmatpush2.msra.mxu0 0.0
        %2953 = vmatprep.subr.mxu0 0.0
        %2954 = vmatpush2.msra.mxu0 0.0
        %2955 = vmatprep.subr.mxu0 0.0
        %2956 = vmatpush2.msra.mxu0 0.0
        %2957 = vmatprep.subr.mxu0 0.0
        %2958 = vmatpush2.msra.mxu0 0.0
        %2959 = vmatprep.subr.mxu0 0.0
        %2960 = vmatpush2.msra.mxu0 0.0
        %2961 = vmatprep.subr.mxu0 0.0
        %2962 = vmatpush2.msra.mxu0 0.0
        %2963 = vmatprep.subr.mxu0 0.0
        %2964 = vmatpush2.msra.mxu0 0.0
        %2965 = vmatprep.subr.mxu0 0.0
        %2966 = vmatpush2.msra.mxu0 0.0
        %2967 = vmatprep.mubr.f32.mxu0 0.0
        %2968 = vmatmul.mubr.f32.gmra.mxu0 %v2901
        %v2969 = vpop.f32.mrf.mxu0
        %v2970 = vadd.f32 0.0, %v2969
        %v2971 = vpop.f32.mrf.mxu0
        %2972 = vdwg.mxu0
        %s2973 = scalar_lea.vmem %s4, 320
        %v2974 = vld [vmem:[%s2973] sm:$0xff]
        %v2975 = vld [vmem:[%s2973 + $0x8] sm:$0xff]
        %v2976 = vld [vmem:[%s2973 + $0x10] sm:$0xff]
        %v2977 = vld [vmem:[%s2973 + $0x18] sm:$0xff]
        %v2978 = vld [vmem:[%s2973 + $0x20] sm:$0xff]
        %v2979 = vld [vmem:[%s2973 + $0x28] sm:$0xff]
        %v2980 = vld [vmem:[%s2973 + $0x30] sm:$0xff]
        %v2981 = vld [vmem:[%s2973 + $0x38] sm:$0xff]
        %v2983 = vsel %vm474, %v2970, 0
        %2985 = vmatprep.subr.mxu0 0.0
        %2986 = vmatpush1.msra.mxu0 0.0
        %2987 = vmatprep.subr.mxu0 0.0
        %2988 = vmatpush1.msra.mxu0 0.0
        %2989 = vmatprep.subr.mxu0 0.0
        %2990 = vmatpush1.msra.mxu0 0.0
        %2991 = vmatprep.subr.mxu0 0.0
        %2992 = vmatpush1.msra.mxu0 0.0
        %2993 = vmatprep.subr.mxu0 0.0
        %2994 = vmatpush1.msra.mxu0 0.0
        %2995 = vmatprep.subr.mxu0 0.0
        %2996 = vmatpush1.msra.mxu0 0.0
        %2997 = vmatprep.subr.mxu0 0.0
        %2998 = vmatpush1.msra.mxu0 0.0
        %2999 = vmatprep.subr.mxu0 0.0
        %3000 = vmatpush1.msra.mxu0 0.0
        %3001 = vmatprep.subr.mxu0 0.0
        %3002 = vmatpush1.msra.mxu0 %v2981
        %3003 = vmatprep.subr.mxu0 0.0
        %3004 = vmatpush1.msra.mxu0 %v2980
        %3005 = vmatprep.subr.mxu0 0.0
        %3006 = vmatpush1.msra.mxu0 %v2979
        %3007 = vmatprep.subr.mxu0 0.0
        %3008 = vmatpush1.msra.mxu0 %v2978
        %3009 = vmatprep.subr.mxu0 0.0
        %3010 = vmatpush1.msra.mxu0 %v2977
        %3011 = vmatprep.subr.mxu0 0.0
        %3012 = vmatpush1.msra.mxu0 %v2976
        %3013 = vmatprep.subr.mxu0 0.0
        %3014 = vmatpush1.msra.mxu0 %v2975
        %3015 = vmatprep.subr.mxu0 0.0
        %3016 = vmatpush1.msra.mxu0 %v2974
        %3017 = vmatprep.subr.mxu0 0.0
        %3018 = vmatpush2.msra.mxu0 0.0
        %3019 = vmatprep.subr.mxu0 0.0
        %3020 = vmatpush2.msra.mxu0 0.0
        %3021 = vmatprep.subr.mxu0 0.0
        %3022 = vmatpush2.msra.mxu0 0.0
        %3023 = vmatprep.subr.mxu0 0.0
        %3024 = vmatpush2.msra.mxu0 0.0
        %3025 = vmatprep.subr.mxu0 0.0
        %3026 = vmatpush2.msra.mxu0 0.0
        %3027 = vmatprep.subr.mxu0 0.0
        %3028 = vmatpush2.msra.mxu0 0.0
        %3029 = vmatprep.subr.mxu0 0.0
        %3030 = vmatpush2.msra.mxu0 0.0
        %3031 = vmatprep.subr.mxu0 0.0
        %3032 = vmatpush2.msra.mxu0 0.0
        %3033 = vmatprep.subr.mxu0 0.0
        %3034 = vmatpush2.msra.mxu0 0.0
        %3035 = vmatprep.subr.mxu0 0.0
        %3036 = vmatpush2.msra.mxu0 0.0
        %3037 = vmatprep.subr.mxu0 0.0
        %3038 = vmatpush2.msra.mxu0 0.0
        %3039 = vmatprep.subr.mxu0 0.0
        %3040 = vmatpush2.msra.mxu0 0.0
        %3041 = vmatprep.subr.mxu0 0.0
        %3042 = vmatpush2.msra.mxu0 0.0
        %3043 = vmatprep.subr.mxu0 0.0
        %3044 = vmatpush2.msra.mxu0 0.0
        %3045 = vmatprep.subr.mxu0 0.0
        %3046 = vmatpush2.msra.mxu0 0.0
        %3047 = vmatprep.subr.mxu0 0.0
        %3048 = vmatpush2.msra.mxu0 0.0
        %3049 = vmatprep.mubr.f32.mxu0 0.0
        %3050 = vmatmul.mubr.f32.gmra.mxu0 %v2983
        %v3051 = vpop.f32.mrf.mxu0
        %v3052 = vadd.f32 0.0, %v3051
        %v3053 = vpop.f32.mrf.mxu0
        %3054 = vdwg.mxu0
        %v3055 = vadd.f32 %v2587, %v3052
        %s3056 = scalar_lea.vmem %s1, 192
        %v3057 = vld [vmem:[%s3056] sm:$0xff]
        %v3058 = vld [vmem:[%s3056 + $0x8] sm:$0xff]
        %v3059 = vld [vmem:[%s3056 + $0x10] sm:$0xff]
        %v3060 = vld [vmem:[%s3056 + $0x18] sm:$0xff]
        %3061 = vmatprep.subr.mxu0 0.0
        %3062 = vmatpush1.msra.mxu0 0.0
        %3063 = vmatprep.subr.mxu0 0.0
        %3064 = vmatpush1.msra.mxu0 0.0
        %3065 = vmatprep.subr.mxu0 0.0
        %3066 = vmatpush1.msra.mxu0 0.0
        %3067 = vmatprep.subr.mxu0 0.0
        %3068 = vmatpush1.msra.mxu0 0.0
        %3069 = vmatprep.subr.mxu0 0.0
        %3070 = vmatpush1.msra.mxu0 0.0
        %3071 = vmatprep.subr.mxu0 0.0
        %3072 = vmatpush1.msra.mxu0 0.0
        %3073 = vmatprep.subr.mxu0 0.0
        %3074 = vmatpush1.msra.mxu0 0.0
        %3075 = vmatprep.subr.mxu0 0.0
        %3076 = vmatpush1.msra.mxu0 0.0
        %3077 = vmatprep.subr.mxu0 0.0
        %3078 = vmatpush1.msra.mxu0 0.0
        %3079 = vmatprep.subr.mxu0 0.0
        %3080 = vmatpush1.msra.mxu0 0.0
        %3081 = vmatprep.subr.mxu0 0.0
        %3082 = vmatpush1.msra.mxu0 0.0
        %3083 = vmatprep.subr.mxu0 0.0
        %3084 = vmatpush1.msra.mxu0 0.0
        %3085 = vmatprep.subr.mxu0 0.0
        %3086 = vmatpush1.msra.mxu0 %v3060
        %3087 = vmatprep.subr.mxu0 0.0
        %3088 = vmatpush1.msra.mxu0 %v3059
        %3089 = vmatprep.subr.mxu0 0.0
        %3090 = vmatpush1.msra.mxu0 %v3058
        %3091 = vmatprep.subr.mxu0 0.0
        %3092 = vmatpush1.msra.mxu0 %v3057
        %3093 = vmatprep.subr.mxu0 0.0
        %3094 = vmatpush2.msra.mxu0 0.0
        %3095 = vmatprep.subr.mxu0 0.0
        %3096 = vmatpush2.msra.mxu0 0.0
        %3097 = vmatprep.subr.mxu0 0.0
        %3098 = vmatpush2.msra.mxu0 0.0
        %3099 = vmatprep.subr.mxu0 0.0
        %3100 = vmatpush2.msra.mxu0 0.0
        %3101 = vmatprep.subr.mxu0 0.0
        %3102 = vmatpush2.msra.mxu0 0.0
        %3103 = vmatprep.subr.mxu0 0.0
        %3104 = vmatpush2.msra.mxu0 0.0
        %3105 = vmatprep.subr.mxu0 0.0
        %3106 = vmatpush2.msra.mxu0 0.0
        %3107 = vmatprep.subr.mxu0 0.0
        %3108 = vmatpush2.msra.mxu0 0.0
        %3109 = vmatprep.subr.mxu0 0.0
        %3110 = vmatpush2.msra.mxu0 0.0
        %3111 = vmatprep.subr.mxu0 0.0
        %3112 = vmatpush2.msra.mxu0 0.0
        %3113 = vmatprep.subr.mxu0 0.0
        %3114 = vmatpush2.msra.mxu0 0.0
        %3115 = vmatprep.subr.mxu0 0.0
        %3116 = vmatpush2.msra.mxu0 0.0
        %3117 = vmatprep.subr.mxu0 0.0
        %3118 = vmatpush2.msra.mxu0 0.0
        %3119 = vmatprep.subr.mxu0 0.0
        %3120 = vmatpush2.msra.mxu0 0.0
        %3121 = vmatprep.subr.mxu0 0.0
        %3122 = vmatpush2.msra.mxu0 0.0
        %3123 = vmatprep.subr.mxu0 0.0
        %3124 = vmatpush2.msra.mxu0 0.0
        %3125 = vmatprep.mubr.f32.mxu0 0.0
        %3126 = vmatmul.mubr.f32.gmra.mxu0 %v254
        %v3127 = vpop.f32.mrf.mxu0
        %v3128 = vadd.f32 0.0, %v3127
        %v3129 = vpop.f32.mrf.mxu0
        %3130 = vdwg.mxu0
        %s3131 = scalar_lea.vmem %s2, 192
        %v3132 = vld [vmem:[%s3131] sm:$0xff]
        %v3133 = vld [vmem:[%s3131 + $0x8] sm:$0xff]
        %v3134 = vld [vmem:[%s3131 + $0x10] sm:$0xff]
        %v3135 = vld [vmem:[%s3131 + $0x18] sm:$0xff]
        %3136 = vmatprep.subr.mxu0 0.0
        %3137 = vmatpush1.msra.mxu0 0.0
        %3138 = vmatprep.subr.mxu0 0.0
        %3139 = vmatpush1.msra.mxu0 0.0
        %3140 = vmatprep.subr.mxu0 0.0
        %3141 = vmatpush1.msra.mxu0 0.0
        %3142 = vmatprep.subr.mxu0 0.0
        %3143 = vmatpush1.msra.mxu0 0.0
        %3144 = vmatprep.subr.mxu0 0.0
        %3145 = vmatpush1.msra.mxu0 0.0
        %3146 = vmatprep.subr.mxu0 0.0
        %3147 = vmatpush1.msra.mxu0 0.0
        %3148 = vmatprep.subr.mxu0 0.0
        %3149 = vmatpush1.msra.mxu0 0.0
        %3150 = vmatprep.subr.mxu0 0.0
        %3151 = vmatpush1.msra.mxu0 0.0
        %3152 = vmatprep.subr.mxu0 0.0
        %3153 = vmatpush1.msra.mxu0 0.0
        %3154 = vmatprep.subr.mxu0 0.0
        %3155 = vmatpush1.msra.mxu0 0.0
        %3156 = vmatprep.subr.mxu0 0.0
        %3157 = vmatpush1.msra.mxu0 0.0
        %3158 = vmatprep.subr.mxu0 0.0
        %3159 = vmatpush1.msra.mxu0 0.0
        %3160 = vmatprep.subr.mxu0 0.0
        %3161 = vmatpush1.msra.mxu0 %v3135
        %3162 = vmatprep.subr.mxu0 0.0
        %3163 = vmatpush1.msra.mxu0 %v3134
        %3164 = vmatprep.subr.mxu0 0.0
        %3165 = vmatpush1.msra.mxu0 %v3133
        %3166 = vmatprep.subr.mxu0 0.0
        %3167 = vmatpush1.msra.mxu0 %v3132
        %3168 = vmatprep.subr.mxu0 0.0
        %3169 = vmatpush2.msra.mxu0 0.0
        %3170 = vmatprep.subr.mxu0 0.0
        %3171 = vmatpush2.msra.mxu0 0.0
        %3172 = vmatprep.subr.mxu0 0.0
        %3173 = vmatpush2.msra.mxu0 0.0
        %3174 = vmatprep.subr.mxu0 0.0
        %3175 = vmatpush2.msra.mxu0 0.0
        %3176 = vmatprep.subr.mxu0 0.0
        %3177 = vmatpush2.msra.mxu0 0.0
        %3178 = vmatprep.subr.mxu0 0.0
        %3179 = vmatpush2.msra.mxu0 0.0
        %3180 = vmatprep.subr.mxu0 0.0
        %3181 = vmatpush2.msra.mxu0 0.0
        %3182 = vmatprep.subr.mxu0 0.0
        %3183 = vmatpush2.msra.mxu0 0.0
        %3184 = vmatprep.subr.mxu0 0.0
        %3185 = vmatpush2.msra.mxu0 0.0
        %3186 = vmatprep.subr.mxu0 0.0
        %3187 = vmatpush2.msra.mxu0 0.0
        %3188 = vmatprep.subr.mxu0 0.0
        %3189 = vmatpush2.msra.mxu0 0.0
        %3190 = vmatprep.subr.mxu0 0.0
        %3191 = vmatpush2.msra.mxu0 0.0
        %3192 = vmatprep.subr.mxu0 0.0
        %3193 = vmatpush2.msra.mxu0 0.0
        %3194 = vmatprep.subr.mxu0 0.0
        %3195 = vmatpush2.msra.mxu0 0.0
        %3196 = vmatprep.subr.mxu0 0.0
        %3197 = vmatpush2.msra.mxu0 0.0
        %3198 = vmatprep.subr.mxu0 0.0
        %3199 = vmatpush2.msra.mxu0 0.0
        %3200 = vmatprep.mubr.f32.mxu0 0.0
        %3201 = vmatmul.mubr.f32.gmra.mxu0 %v254
        %v3202 = vpop.f32.mrf.mxu0
        %v3203 = vadd.f32 0.0, %v3202
        %v3204 = vpop.f32.mrf.mxu0
        %3205 = vdwg.mxu0
        %s3206 = scalar_lea.vmem %s3, 192
        %v3207 = vld [vmem:[%s3206] sm:$0xff]
        %v3208 = vld [vmem:[%s3206 + $0x8] sm:$0xff]
        %v3209 = vld [vmem:[%s3206 + $0x10] sm:$0xff]
        %v3210 = vld [vmem:[%s3206 + $0x18] sm:$0xff]
        %3211 = vmatprep.subr.mxu0 0.0
        %3212 = vmatpush1.msra.mxu0 0.0
        %3213 = vmatprep.subr.mxu0 0.0
        %3214 = vmatpush1.msra.mxu0 0.0
        %3215 = vmatprep.subr.mxu0 0.0
        %3216 = vmatpush1.msra.mxu0 0.0
        %3217 = vmatprep.subr.mxu0 0.0
        %3218 = vmatpush1.msra.mxu0 0.0
        %3219 = vmatprep.subr.mxu0 0.0
        %3220 = vmatpush1.msra.mxu0 0.0
        %3221 = vmatprep.subr.mxu0 0.0
        %3222 = vmatpush1.msra.mxu0 0.0
        %3223 = vmatprep.subr.mxu0 0.0
        %3224 = vmatpush1.msra.mxu0 0.0
        %3225 = vmatprep.subr.mxu0 0.0
        %3226 = vmatpush1.msra.mxu0 0.0
        %3227 = vmatprep.subr.mxu0 0.0
        %3228 = vmatpush1.msra.mxu0 0.0
        %3229 = vmatprep.subr.mxu0 0.0
        %3230 = vmatpush1.msra.mxu0 0.0
        %3231 = vmatprep.subr.mxu0 0.0
        %3232 = vmatpush1.msra.mxu0 0.0
        %3233 = vmatprep.subr.mxu0 0.0
        %3234 = vmatpush1.msra.mxu0 0.0
        %3235 = vmatprep.subr.mxu0 0.0
        %3236 = vmatpush1.msra.mxu0 %v3210
        %3237 = vmatprep.subr.mxu0 0.0
        %3238 = vmatpush1.msra.mxu0 %v3209
        %3239 = vmatprep.subr.mxu0 0.0
        %3240 = vmatpush1.msra.mxu0 %v3208
        %3241 = vmatprep.subr.mxu0 0.0
        %3242 = vmatpush1.msra.mxu0 %v3207
        %3243 = vmatprep.subr.mxu0 0.0
        %3244 = vmatpush2.msra.mxu0 0.0
        %3245 = vmatprep.subr.mxu0 0.0
        %3246 = vmatpush2.msra.mxu0 0.0
        %3247 = vmatprep.subr.mxu0 0.0
        %3248 = vmatpush2.msra.mxu0 0.0
        %3249 = vmatprep.subr.mxu0 0.0
        %3250 = vmatpush2.msra.mxu0 0.0
        %3251 = vmatprep.subr.mxu0 0.0
        %3252 = vmatpush2.msra.mxu0 0.0
        %3253 = vmatprep.subr.mxu0 0.0
        %3254 = vmatpush2.msra.mxu0 0.0
        %3255 = vmatprep.subr.mxu0 0.0
        %3256 = vmatpush2.msra.mxu0 0.0
        %3257 = vmatprep.subr.mxu0 0.0
        %3258 = vmatpush2.msra.mxu0 0.0
        %3259 = vmatprep.subr.mxu0 0.0
        %3260 = vmatpush2.msra.mxu0 0.0
        %3261 = vmatprep.subr.mxu0 0.0
        %3262 = vmatpush2.msra.mxu0 0.0
        %3263 = vmatprep.subr.mxu0 0.0
        %3264 = vmatpush2.msra.mxu0 0.0
        %3265 = vmatprep.subr.mxu0 0.0
        %3266 = vmatpush2.msra.mxu0 0.0
        %3267 = vmatprep.subr.mxu0 0.0
        %3268 = vmatpush2.msra.mxu0 0.0
        %3269 = vmatprep.subr.mxu0 0.0
        %3270 = vmatpush2.msra.mxu0 0.0
        %3271 = vmatprep.subr.mxu0 0.0
        %3272 = vmatpush2.msra.mxu0 0.0
        %3273 = vmatprep.subr.mxu0 0.0
        %3274 = vmatpush2.msra.mxu0 0.0
        %3275 = vmatprep.mubr.f32.mxu0 0.0
        %3276 = vmatmul.mubr.f32.gmra.mxu0 %v254
        %v3277 = vpop.f32.mrf.mxu0
        %v3278 = vadd.f32 0.0, %v3277
        %v3279 = vpop.f32.mrf.mxu0
        %3280 = vdwg.mxu0
        %v3282 = vsel %vm474, %v3128, 0
        %v3285 = vsel %vm474, %v3203, 0
        %3287 = vmatprep.subr.mxu0 0.0
        %3288 = vmatpush1.xpose.msra.mxu0 0.0
        %3289 = vmatprep.subr.mxu0 0.0
        %3290 = vmatpush1.xpose.msra.mxu0 0.0
        %3291 = vmatprep.subr.mxu0 0.0
        %3292 = vmatpush1.xpose.msra.mxu0 0.0
        %3293 = vmatprep.subr.mxu0 0.0
        %3294 = vmatpush1.xpose.msra.mxu0 0.0
        %3295 = vmatprep.subr.mxu0 0.0
        %3296 = vmatpush1.xpose.msra.mxu0 0.0
        %3297 = vmatprep.subr.mxu0 0.0
        %3298 = vmatpush1.xpose.msra.mxu0 0.0
        %3299 = vmatprep.subr.mxu0 0.0
        %3300 = vmatpush1.xpose.msra.mxu0 0.0
        %3301 = vmatprep.subr.mxu0 0.0
        %3302 = vmatpush1.xpose.msra.mxu0 0.0
        %3303 = vmatprep.subr.mxu0 0.0
        %3304 = vmatpush1.xpose.msra.mxu0 0.0
        %3305 = vmatprep.subr.mxu0 0.0
        %3306 = vmatpush1.xpose.msra.mxu0 0.0
        %3307 = vmatprep.subr.mxu0 0.0
        %3308 = vmatpush1.xpose.msra.mxu0 0.0
        %3309 = vmatprep.subr.mxu0 0.0
        %3310 = vmatpush1.xpose.msra.mxu0 0.0
        %3311 = vmatprep.subr.mxu0 0.0
        %3312 = vmatpush1.xpose.msra.mxu0 0.0
        %3313 = vmatprep.subr.mxu0 0.0
        %3314 = vmatpush1.xpose.msra.mxu0 0.0
        %3315 = vmatprep.subr.mxu0 0.0
        %3316 = vmatpush1.xpose.msra.mxu0 0.0
        %3317 = vmatprep.subr.mxu0 0.0
        %3318 = vmatpush1.xpose.msra.mxu0 %v3285
        %3319 = vmatprep.subr.mxu0 0.0
        %3320 = vmatpush2.xpose.msra.mxu0 0.0
        %3321 = vmatprep.subr.mxu0 0.0
        %3322 = vmatpush2.xpose.msra.mxu0 0.0
        %3323 = vmatprep.subr.mxu0 0.0
        %3324 = vmatpush2.xpose.msra.mxu0 0.0
        %3325 = vmatprep.subr.mxu0 0.0
        %3326 = vmatpush2.xpose.msra.mxu0 0.0
        %3327 = vmatprep.subr.mxu0 0.0
        %3328 = vmatpush2.xpose.msra.mxu0 0.0
        %3329 = vmatprep.subr.mxu0 0.0
        %3330 = vmatpush2.xpose.msra.mxu0 0.0
        %3331 = vmatprep.subr.mxu0 0.0
        %3332 = vmatpush2.xpose.msra.mxu0 0.0
        %3333 = vmatprep.subr.mxu0 0.0
        %3334 = vmatpush2.xpose.msra.mxu0 0.0
        %3335 = vmatprep.subr.mxu0 0.0
        %3336 = vmatpush2.xpose.msra.mxu0 0.0
        %3337 = vmatprep.subr.mxu0 0.0
        %3338 = vmatpush2.xpose.msra.mxu0 0.0
        %3339 = vmatprep.subr.mxu0 0.0
        %3340 = vmatpush2.xpose.msra.mxu0 0.0
        %3341 = vmatprep.subr.mxu0 0.0
        %3342 = vmatpush2.xpose.msra.mxu0 0.0
        %3343 = vmatprep.subr.mxu0 0.0
        %3344 = vmatpush2.xpose.msra.mxu0 0.0
        %3345 = vmatprep.subr.mxu0 0.0
        %3346 = vmatpush2.xpose.msra.mxu0 0.0
        %3347 = vmatprep.subr.mxu0 0.0
        %3348 = vmatpush2.xpose.msra.mxu0 0.0
        %3349 = vmatprep.subr.mxu0 0.0
        %3350 = vmatpush2.xpose.msra.mxu0 0.0
        %3351 = vmatprep.mubr.f32.mxu0 0.0
        %3352 = vmatmul.mubr.f32.gmra.mxu0 %v3282
        %v3353 = vpop.f32.mrf.mxu0
        %v3354 = vadd.f32 0.0, %v3353
        %v3355 = vpop.f32.mrf.mxu0
        %3356 = vdwg.mxu0
        %v3357 = vsel %vm551, %v3354, -inf
        %3358 = vmax.xlane.f32.xlu0 %v3357
        %v3359 = vpop.xlane.xlu0 %3358
        %v3360 = vsub.f32 %v3354, %v3359
        %v3361 = vmul.f32 %v3360, 1.442695
        %v3362 = vpow.pop %v3361
        %v3363 = vsel %vm551, %v3362, 0.0
        %3364 = vadd.xlane.f32.xlu0 %v3363
        %v3365 = vpop.xlane.xlu0 %3364
        %v3366 = vrcp.pop %v3365
        %v3367 = vmul.f32 %v3362, %v3366
        %v3369 = vsel %vm551, %v3367, 0
        %3371 = vmatprep.subr.mxu0 0.0
        %3372 = vmatpush1.msra.mxu0 0.0
        %3373 = vmatprep.subr.mxu0 0.0
        %3374 = vmatpush1.msra.mxu0 0.0
        %3375 = vmatprep.subr.mxu0 0.0
        %3376 = vmatpush1.msra.mxu0 0.0
        %3377 = vmatprep.subr.mxu0 0.0
        %3378 = vmatpush1.msra.mxu0 0.0
        %3379 = vmatprep.subr.mxu0 0.0
        %3380 = vmatpush1.msra.mxu0 0.0
        %3381 = vmatprep.subr.mxu0 0.0
        %3382 = vmatpush1.msra.mxu0 0.0
        %3383 = vmatprep.subr.mxu0 0.0
        %3384 = vmatpush1.msra.mxu0 0.0
        %3385 = vmatprep.subr.mxu0 0.0
        %3386 = vmatpush1.msra.mxu0 0.0
        %3387 = vmatprep.subr.mxu0 0.0
        %3388 = vmatpush1.msra.mxu0 0.0
        %3389 = vmatprep.subr.mxu0 0.0
        %3390 = vmatpush1.msra.mxu0 0.0
        %3391 = vmatprep.subr.mxu0 0.0
        %3392 = vmatpush1.msra.mxu0 0.0
        %3393 = vmatprep.subr.mxu0 0.0
        %3394 = vmatpush1.msra.mxu0 0.0
        %3395 = vmatprep.subr.mxu0 0.0
        %3396 = vmatpush1.msra.mxu0 0.0
        %3397 = vmatprep.subr.mxu0 0.0
        %3398 = vmatpush1.msra.mxu0 0.0
        %3399 = vmatprep.subr.mxu0 0.0
        %3400 = vmatpush1.msra.mxu0 0.0
        %3401 = vmatprep.subr.mxu0 0.0
        %3402 = vmatpush1.msra.mxu0 %v3278
        %3403 = vmatprep.subr.mxu0 0.0
        %3404 = vmatpush2.msra.mxu0 0.0
        %3405 = vmatprep.subr.mxu0 0.0
        %3406 = vmatpush2.msra.mxu0 0.0
        %3407 = vmatprep.subr.mxu0 0.0
        %3408 = vmatpush2.msra.mxu0 0.0
        %3409 = vmatprep.subr.mxu0 0.0
        %3410 = vmatpush2.msra.mxu0 0.0
        %3411 = vmatprep.subr.mxu0 0.0
        %3412 = vmatpush2.msra.mxu0 0.0
        %3413 = vmatprep.subr.mxu0 0.0
        %3414 = vmatpush2.msra.mxu0 0.0
        %3415 = vmatprep.subr.mxu0 0.0
        %3416 = vmatpush2.msra.mxu0 0.0
        %3417 = vmatprep.subr.mxu0 0.0
        %3418 = vmatpush2.msra.mxu0 0.0
        %3419 = vmatprep.subr.mxu0 0.0
        %3420 = vmatpush2.msra.mxu0 0.0
        %3421 = vmatprep.subr.mxu0 0.0
        %3422 = vmatpush2.msra.mxu0 0.0
        %3423 = vmatprep.subr.mxu0 0.0
        %3424 = vmatpush2.msra.mxu0 0.0
        %3425 = vmatprep.subr.mxu0 0.0
        %3426 = vmatpush2.msra.mxu0 0.0
        %3427 = vmatprep.subr.mxu0 0.0
        %3428 = vmatpush2.msra.mxu0 0.0
        %3429 = vmatprep.subr.mxu0 0.0
        %3430 = vmatpush2.msra.mxu0 0.0
        %3431 = vmatprep.subr.mxu0 0.0
        %3432 = vmatpush2.msra.mxu0 0.0
        %3433 = vmatprep.subr.mxu0 0.0
        %3434 = vmatpush2.msra.mxu0 0.0
        %3435 = vmatprep.mubr.f32.mxu0 0.0
        %3436 = vmatmul.mubr.f32.gmra.mxu0 %v3369
        %v3437 = vpop.f32.mrf.mxu0
        %v3438 = vadd.f32 0.0, %v3437
        %v3439 = vpop.f32.mrf.mxu0
        %3440 = vdwg.mxu0
        %s3441 = scalar_lea.vmem %s4, 384
        %v3442 = vld [vmem:[%s3441] sm:$0xff]
        %v3443 = vld [vmem:[%s3441 + $0x8] sm:$0xff]
        %v3444 = vld [vmem:[%s3441 + $0x10] sm:$0xff]
        %v3445 = vld [vmem:[%s3441 + $0x18] sm:$0xff]
        %v3446 = vld [vmem:[%s3441 + $0x20] sm:$0xff]
        %v3447 = vld [vmem:[%s3441 + $0x28] sm:$0xff]
        %v3448 = vld [vmem:[%s3441 + $0x30] sm:$0xff]
        %v3449 = vld [vmem:[%s3441 + $0x38] sm:$0xff]
        %v3451 = vsel %vm474, %v3438, 0
        %3453 = vmatprep.subr.mxu0 0.0
        %3454 = vmatpush1.msra.mxu0 0.0
        %3455 = vmatprep.subr.mxu0 0.0
        %3456 = vmatpush1.msra.mxu0 0.0
        %3457 = vmatprep.subr.mxu0 0.0
        %3458 = vmatpush1.msra.mxu0 0.0
        %3459 = vmatprep.subr.mxu0 0.0
        %3460 = vmatpush1.msra.mxu0 0.0
        %3461 = vmatprep.subr.mxu0 0.0
        %3462 = vmatpush1.msra.mxu0 0.0
        %3463 = vmatprep.subr.mxu0 0.0
        %3464 = vmatpush1.msra.mxu0 0.0
        %3465 = vmatprep.subr.mxu0 0.0
        %3466 = vmatpush1.msra.mxu0 0.0
        %3467 = vmatprep.subr.mxu0 0.0
        %3468 = vmatpush1.msra.mxu0 0.0
        %3469 = vmatprep.subr.mxu0 0.0
        %3470 = vmatpush1.msra.mxu0 %v3449
        %3471 = vmatprep.subr.mxu0 0.0
        %3472 = vmatpush1.msra.mxu0 %v3448
        %3473 = vmatprep.subr.mxu0 0.0
        %3474 = vmatpush1.msra.mxu0 %v3447
        %3475 = vmatprep.subr.mxu0 0.0
        %3476 = vmatpush1.msra.mxu0 %v3446
        %3477 = vmatprep.subr.mxu0 0.0
        %3478 = vmatpush1.msra.mxu0 %v3445
        %3479 = vmatprep.subr.mxu0 0.0
        %3480 = vmatpush1.msra.mxu0 %v3444
        %3481 = vmatprep.subr.mxu0 0.0
        %3482 = vmatpush1.msra.mxu0 %v3443
        %3483 = vmatprep.subr.mxu0 0.0
        %3484 = vmatpush1.msra.mxu0 %v3442
        %3485 = vmatprep.subr.mxu0 0.0
        %3486 = vmatpush2.msra.mxu0 0.0
        %3487 = vmatprep.subr.mxu0 0.0
        %3488 = vmatpush2.msra.mxu0 0.0
        %3489 = vmatprep.subr.mxu0 0.0
        %3490 = vmatpush2.msra.mxu0 0.0
        %3491 = vmatprep.subr.mxu0 0.0
        %3492 = vmatpush2.msra.mxu0 0.0
        %3493 = vmatprep.subr.mxu0 0.0
        %3494 = vmatpush2.msra.mxu0 0.0
        %3495 = vmatprep.subr.mxu0 0.0
        %3496 = vmatpush2.msra.mxu0 0.0
        %3497 = vmatprep.subr.mxu0 0.0
        %3498 = vmatpush2.msra.mxu0 0.0
        %3499 = vmatprep.subr.mxu0 0.0
        %3500 = vmatpush2.msra.mxu0 0.0
        %3501 = vmatprep.subr.mxu0 0.0
        %3502 = vmatpush2.msra.mxu0 0.0
        %3503 = vmatprep.subr.mxu0 0.0
        %3504 = vmatpush2.msra.mxu0 0.0
        %3505 = vmatprep.subr.mxu0 0.0
        %3506 = vmatpush2.msra.mxu0 0.0
        %3507 = vmatprep.subr.mxu0 0.0
        %3508 = vmatpush2.msra.mxu0 0.0
        %3509 = vmatprep.subr.mxu0 0.0
        %3510 = vmatpush2.msra.mxu0 0.0
        %3511 = vmatprep.subr.mxu0 0.0
        %3512 = vmatpush2.msra.mxu0 0.0
        %3513 = vmatprep.subr.mxu0 0.0
        %3514 = vmatpush2.msra.mxu0 0.0
        %3515 = vmatprep.subr.mxu0 0.0
        %3516 = vmatpush2.msra.mxu0 0.0
        %3517 = vmatprep.mubr.f32.mxu0 0.0
        %3518 = vmatmul.mubr.f32.gmra.mxu0 %v3451
        %v3519 = vpop.f32.mrf.mxu0
        %v3520 = vadd.f32 0.0, %v3519
        %v3521 = vpop.f32.mrf.mxu0
        %3522 = vdwg.mxu0
        %v3523 = vadd.f32 %v3055, %v3520
        %s3524 = scalar_lea.vmem %s1, 224
        %v3525 = vld [vmem:[%s3524] sm:$0xff]
        %v3526 = vld [vmem:[%s3524 + $0x8] sm:$0xff]
        %v3527 = vld [vmem:[%s3524 + $0x10] sm:$0xff]
        %v3528 = vld [vmem:[%s3524 + $0x18] sm:$0xff]
        %3529 = vmatprep.subr.mxu0 0.0
        %3530 = vmatpush1.msra.mxu0 0.0
        %3531 = vmatprep.subr.mxu0 0.0
        %3532 = vmatpush1.msra.mxu0 0.0
        %3533 = vmatprep.subr.mxu0 0.0
        %3534 = vmatpush1.msra.mxu0 0.0
        %3535 = vmatprep.subr.mxu0 0.0
        %3536 = vmatpush1.msra.mxu0 0.0
        %3537 = vmatprep.subr.mxu0 0.0
        %3538 = vmatpush1.msra.mxu0 0.0
        %3539 = vmatprep.subr.mxu0 0.0
        %3540 = vmatpush1.msra.mxu0 0.0
        %3541 = vmatprep.subr.mxu0 0.0
        %3542 = vmatpush1.msra.mxu0 0.0
        %3543 = vmatprep.subr.mxu0 0.0
        %3544 = vmatpush1.msra.mxu0 0.0
        %3545 = vmatprep.subr.mxu0 0.0
        %3546 = vmatpush1.msra.mxu0 0.0
        %3547 = vmatprep.subr.mxu0 0.0
        %3548 = vmatpush1.msra.mxu0 0.0
        %3549 = vmatprep.subr.mxu0 0.0
        %3550 = vmatpush1.msra.mxu0 0.0
        %3551 = vmatprep.subr.mxu0 0.0
        %3552 = vmatpush1.msra.mxu0 0.0
        %3553 = vmatprep.subr.mxu0 0.0
        %3554 = vmatpush1.msra.mxu0 %v3528
        %3555 = vmatprep.subr.mxu0 0.0
        %3556 = vmatpush1.msra.mxu0 %v3527
        %3557 = vmatprep.subr.mxu0 0.0
        %3558 = vmatpush1.msra.mxu0 %v3526
        %3559 = vmatprep.subr.mxu0 0.0
        %3560 = vmatpush1.msra.mxu0 %v3525
        %3561 = vmatprep.subr.mxu0 0.0
        %3562 = vmatpush2.msra.mxu0 0.0
        %3563 = vmatprep.subr.mxu0 0.0
        %3564 = vmatpush2.msra.mxu0 0.0
        %3565 = vmatprep.subr.mxu0 0.0
        %3566 = vmatpush2.msra.mxu0 0.0
        %3567 = vmatprep.subr.mxu0 0.0
        %3568 = vmatpush2.msra.mxu0 0.0
        %3569 = vmatprep.subr.mxu0 0.0
        %3570 = vmatpush2.msra.mxu0 0.0
        %3571 = vmatprep.subr.mxu0 0.0
        %3572 = vmatpush2.msra.mxu0 0.0
        %3573 = vmatprep.subr.mxu0 0.0
        %3574 = vmatpush2.msra.mxu0 0.0
        %3575 = vmatprep.subr.mxu0 0.0
        %3576 = vmatpush2.msra.mxu0 0.0
        %3577 = vmatprep.subr.mxu0 0.0
        %3578 = vmatpush2.msra.mxu0 0.0
        %3579 = vmatprep.subr.mxu0 0.0
        %3580 = vmatpush2.msra.mxu0 0.0
        %3581 = vmatprep.subr.mxu0 0.0
        %3582 = vmatpush2.msra.mxu0 0.0
        %3583 = vmatprep.subr.mxu0 0.0
        %3584 = vmatpush2.msra.mxu0 0.0
        %3585 = vmatprep.subr.mxu0 0.0
        %3586 = vmatpush2.msra.mxu0 0.0
        %3587 = vmatprep.subr.mxu0 0.0
        %3588 = vmatpush2.msra.mxu0 0.0
        %3589 = vmatprep.subr.mxu0 0.0
        %3590 = vmatpush2.msra.mxu0 0.0
        %3591 = vmatprep.subr.mxu0 0.0
        %3592 = vmatpush2.msra.mxu0 0.0
        %3593 = vmatprep.mubr.f32.mxu0 0.0
        %3594 = vmatmul.mubr.f32.gmra.mxu0 %v254
        %v3595 = vpop.f32.mrf.mxu0
        %v3596 = vadd.f32 0.0, %v3595
        %v3597 = vpop.f32.mrf.mxu0
        %3598 = vdwg.mxu0
        %s3599 = scalar_lea.vmem %s2, 224
        %v3600 = vld [vmem:[%s3599] sm:$0xff]
        %v3601 = vld [vmem:[%s3599 + $0x8] sm:$0xff]
        %v3602 = vld [vmem:[%s3599 + $0x10] sm:$0xff]
        %v3603 = vld [vmem:[%s3599 + $0x18] sm:$0xff]
        %3604 = vmatprep.subr.mxu0 0.0
        %3605 = vmatpush1.msra.mxu0 0.0
        %3606 = vmatprep.subr.mxu0 0.0
        %3607 = vmatpush1.msra.mxu0 0.0
        %3608 = vmatprep.subr.mxu0 0.0
        %3609 = vmatpush1.msra.mxu0 0.0
        %3610 = vmatprep.subr.mxu0 0.0
        %3611 = vmatpush1.msra.mxu0 0.0
        %3612 = vmatprep.subr.mxu0 0.0
        %3613 = vmatpush1.msra.mxu0 0.0
        %3614 = vmatprep.subr.mxu0 0.0
        %3615 = vmatpush1.msra.mxu0 0.0
        %3616 = vmatprep.subr.mxu0 0.0
        %3617 = vmatpush1.msra.mxu0 0.0
        %3618 = vmatprep.subr.mxu0 0.0
        %3619 = vmatpush1.msra.mxu0 0.0
        %3620 = vmatprep.subr.mxu0 0.0
        %3621 = vmatpush1.msra.mxu0 0.0
        %3622 = vmatprep.subr.mxu0 0.0
        %3623 = vmatpush1.msra.mxu0 0.0
        %3624 = vmatprep.subr.mxu0 0.0
        %3625 = vmatpush1.msra.mxu0 0.0
        %3626 = vmatprep.subr.mxu0 0.0
        %3627 = vmatpush1.msra.mxu0 0.0
        %3628 = vmatprep.subr.mxu0 0.0
        %3629 = vmatpush1.msra.mxu0 %v3603
        %3630 = vmatprep.subr.mxu0 0.0
        %3631 = vmatpush1.msra.mxu0 %v3602
        %3632 = vmatprep.subr.mxu0 0.0
        %3633 = vmatpush1.msra.mxu0 %v3601
        %3634 = vmatprep.subr.mxu0 0.0
        %3635 = vmatpush1.msra.mxu0 %v3600
        %3636 = vmatprep.subr.mxu0 0.0
        %3637 = vmatpush2.msra.mxu0 0.0
        %3638 = vmatprep.subr.mxu0 0.0
        %3639 = vmatpush2.msra.mxu0 0.0
        %3640 = vmatprep.subr.mxu0 0.0
        %3641 = vmatpush2.msra.mxu0 0.0
        %3642 = vmatprep.subr.mxu0 0.0
        %3643 = vmatpush2.msra.mxu0 0.0
        %3644 = vmatprep.subr.mxu0 0.0
        %3645 = vmatpush2.msra.mxu0 0.0
        %3646 = vmatprep.subr.mxu0 0.0
        %3647 = vmatpush2.msra.mxu0 0.0
        %3648 = vmatprep.subr.mxu0 0.0
        %3649 = vmatpush2.msra.mxu0 0.0
        %3650 = vmatprep.subr.mxu0 0.0
        %3651 = vmatpush2.msra.mxu0 0.0
        %3652 = vmatprep.subr.mxu0 0.0
        %3653 = vmatpush2.msra.mxu0 0.0
        %3654 = vmatprep.subr.mxu0 0.0
        %3655 = vmatpush2.msra.mxu0 0.0
        %3656 = vmatprep.subr.mxu0 0.0
        %3657 = vmatpush2.msra.mxu0 0.0
        %3658 = vmatprep.subr.mxu0 0.0
        %3659 = vmatpush2.msra.mxu0 0.0
        %3660 = vmatprep.subr.mxu0 0.0
        %3661 = vmatpush2.msra.mxu0 0.0
        %3662 = vmatprep.subr.mxu0 0.0
        %3663 = vmatpush2.msra.mxu0 0.0
        %3664 = vmatprep.subr.mxu0 0.0
        %3665 = vmatpush2.msra.mxu0 0.0
        %3666 = vmatprep.subr.mxu0 0.0
        %3667 = vmatpush2.msra.mxu0 0.0
        %3668 = vmatprep.mubr.f32.mxu0 0.0
        %3669 = vmatmul.mubr.f32.gmra.mxu0 %v254
        %v3670 = vpop.f32.mrf.mxu0
        %v3671 = vadd.f32 0.0, %v3670
        %v3672 = vpop.f32.mrf.mxu0
        %3673 = vdwg.mxu0
        %s3674 = scalar_lea.vmem %s3, 224
        %v3675 = vld [vmem:[%s3674] sm:$0xff]
        %v3676 = vld [vmem:[%s3674 + $0x8] sm:$0xff]
        %v3677 = vld [vmem:[%s3674 + $0x10] sm:$0xff]
        %v3678 = vld [vmem:[%s3674 + $0x18] sm:$0xff]
        %3679 = vmatprep.subr.mxu0 0.0
        %3680 = vmatpush1.msra.mxu0 0.0
        %3681 = vmatprep.subr.mxu0 0.0
        %3682 = vmatpush1.msra.mxu0 0.0
        %3683 = vmatprep.subr.mxu0 0.0
        %3684 = vmatpush1.msra.mxu0 0.0
        %3685 = vmatprep.subr.mxu0 0.0
        %3686 = vmatpush1.msra.mxu0 0.0
        %3687 = vmatprep.subr.mxu0 0.0
        %3688 = vmatpush1.msra.mxu0 0.0
        %3689 = vmatprep.subr.mxu0 0.0
        %3690 = vmatpush1.msra.mxu0 0.0
        %3691 = vmatprep.subr.mxu0 0.0
        %3692 = vmatpush1.msra.mxu0 0.0
        %3693 = vmatprep.subr.mxu0 0.0
        %3694 = vmatpush1.msra.mxu0 0.0
        %3695 = vmatprep.subr.mxu0 0.0
        %3696 = vmatpush1.msra.mxu0 0.0
        %3697 = vmatprep.subr.mxu0 0.0
        %3698 = vmatpush1.msra.mxu0 0.0
        %3699 = vmatprep.subr.mxu0 0.0
        %3700 = vmatpush1.msra.mxu0 0.0
        %3701 = vmatprep.subr.mxu0 0.0
        %3702 = vmatpush1.msra.mxu0 0.0
        %3703 = vmatprep.subr.mxu0 0.0
        %3704 = vmatpush1.msra.mxu0 %v3678
        %3705 = vmatprep.subr.mxu0 0.0
        %3706 = vmatpush1.msra.mxu0 %v3677
        %3707 = vmatprep.subr.mxu0 0.0
        %3708 = vmatpush1.msra.mxu0 %v3676
        %3709 = vmatprep.subr.mxu0 0.0
        %3710 = vmatpush1.msra.mxu0 %v3675
        %3711 = vmatprep.subr.mxu0 0.0
        %3712 = vmatpush2.msra.mxu0 0.0
        %3713 = vmatprep.subr.mxu0 0.0
        %3714 = vmatpush2.msra.mxu0 0.0
        %3715 = vmatprep.subr.mxu0 0.0
        %3716 = vmatpush2.msra.mxu0 0.0
        %3717 = vmatprep.subr.mxu0 0.0
        %3718 = vmatpush2.msra.mxu0 0.0
        %3719 = vmatprep.subr.mxu0 0.0
        %3720 = vmatpush2.msra.mxu0 0.0
        %3721 = vmatprep.subr.mxu0 0.0
        %3722 = vmatpush2.msra.mxu0 0.0
        %3723 = vmatprep.subr.mxu0 0.0
        %3724 = vmatpush2.msra.mxu0 0.0
        %3725 = vmatprep.subr.mxu0 0.0
        %3726 = vmatpush2.msra.mxu0 0.0
        %3727 = vmatprep.subr.mxu0 0.0
        %3728 = vmatpush2.msra.mxu0 0.0
        %3729 = vmatprep.subr.mxu0 0.0
        %3730 = vmatpush2.msra.mxu0 0.0
        %3731 = vmatprep.subr.mxu0 0.0
        %3732 = vmatpush2.msra.mxu0 0.0
        %3733 = vmatprep.subr.mxu0 0.0
        %3734 = vmatpush2.msra.mxu0 0.0
        %3735 = vmatprep.subr.mxu0 0.0
        %3736 = vmatpush2.msra.mxu0 0.0
        %3737 = vmatprep.subr.mxu0 0.0
        %3738 = vmatpush2.msra.mxu0 0.0
        %3739 = vmatprep.subr.mxu0 0.0
        %3740 = vmatpush2.msra.mxu0 0.0
        %3741 = vmatprep.subr.mxu0 0.0
        %3742 = vmatpush2.msra.mxu0 0.0
        %3743 = vmatprep.mubr.f32.mxu0 0.0
        %3744 = vmatmul.mubr.f32.gmra.mxu0 %v254
        %v3745 = vpop.f32.mrf.mxu0
        %v3746 = vadd.f32 0.0, %v3745
        %v3747 = vpop.f32.mrf.mxu0
        %3748 = vdwg.mxu0
        %v3750 = vsel %vm474, %v3596, 0
        %v3753 = vsel %vm474, %v3671, 0
        %3755 = vmatprep.subr.mxu0 0.0
        %3756 = vmatpush1.xpose.msra.mxu0 0.0
        %3757 = vmatprep.subr.mxu0 0.0
        %3758 = vmatpush1.xpose.msra.mxu0 0.0
        %3759 = vmatprep.subr.mxu0 0.0
        %3760 = vmatpush1.xpose.msra.mxu0 0.0
        %3761 = vmatprep.subr.mxu0 0.0
        %3762 = vmatpush1.xpose.msra.mxu0 0.0
        %3763 = vmatprep.subr.mxu0 0.0
        %3764 = vmatpush1.xpose.msra.mxu0 0.0
        %3765 = vmatprep.subr.mxu0 0.0
        %3766 = vmatpush1.xpose.msra.mxu0 0.0
        %3767 = vmatprep.subr.mxu0 0.0
        %3768 = vmatpush1.xpose.msra.mxu0 0.0
        %3769 = vmatprep.subr.mxu0 0.0
        %3770 = vmatpush1.xpose.msra.mxu0 0.0
        %3771 = vmatprep.subr.mxu0 0.0
        %3772 = vmatpush1.xpose.msra.mxu0 0.0
        %3773 = vmatprep.subr.mxu0 0.0
        %3774 = vmatpush1.xpose.msra.mxu0 0.0
        %3775 = vmatprep.subr.mxu0 0.0
        %3776 = vmatpush1.xpose.msra.mxu0 0.0
        %3777 = vmatprep.subr.mxu0 0.0
        %3778 = vmatpush1.xpose.msra.mxu0 0.0
        %3779 = vmatprep.subr.mxu0 0.0
        %3780 = vmatpush1.xpose.msra.mxu0 0.0
        %3781 = vmatprep.subr.mxu0 0.0
        %3782 = vmatpush1.xpose.msra.mxu0 0.0
        %3783 = vmatprep.subr.mxu0 0.0
        %3784 = vmatpush1.xpose.msra.mxu0 0.0
        %3785 = vmatprep.subr.mxu0 0.0
        %3786 = vmatpush1.xpose.msra.mxu0 %v3753
        %3787 = vmatprep.subr.mxu0 0.0
        %3788 = vmatpush2.xpose.msra.mxu0 0.0
        %3789 = vmatprep.subr.mxu0 0.0
        %3790 = vmatpush2.xpose.msra.mxu0 0.0
        %3791 = vmatprep.subr.mxu0 0.0
        %3792 = vmatpush2.xpose.msra.mxu0 0.0
        %3793 = vmatprep.subr.mxu0 0.0
        %3794 = vmatpush2.xpose.msra.mxu0 0.0
        %3795 = vmatprep.subr.mxu0 0.0
        %3796 = vmatpush2.xpose.msra.mxu0 0.0
        %3797 = vmatprep.subr.mxu0 0.0
        %3798 = vmatpush2.xpose.msra.mxu0 0.0
        %3799 = vmatprep.subr.mxu0 0.0
        %3800 = vmatpush2.xpose.msra.mxu0 0.0
        %3801 = vmatprep.subr.mxu0 0.0
        %3802 = vmatpush2.xpose.msra.mxu0 0.0
        %3803 = vmatprep.subr.mxu0 0.0
        %3804 = vmatpush2.xpose.msra.mxu0 0.0
        %3805 = vmatprep.subr.mxu0 0.0
        %3806 = vmatpush2.xpose.msra.mxu0 0.0
        %3807 = vmatprep.subr.mxu0 0.0
        %3808 = vmatpush2.xpose.msra.mxu0 0.0
        %3809 = vmatprep.subr.mxu0 0.0
        %3810 = vmatpush2.xpose.msra.mxu0 0.0
        %3811 = vmatprep.subr.mxu0 0.0
        %3812 = vmatpush2.xpose.msra.mxu0 0.0
        %3813 = vmatprep.subr.mxu0 0.0
        %3814 = vmatpush2.xpose.msra.mxu0 0.0
        %3815 = vmatprep.subr.mxu0 0.0
        %3816 = vmatpush2.xpose.msra.mxu0 0.0
        %3817 = vmatprep.subr.mxu0 0.0
        %3818 = vmatpush2.xpose.msra.mxu0 0.0
        %3819 = vmatprep.mubr.f32.mxu0 0.0
        %3820 = vmatmul.mubr.f32.gmra.mxu0 %v3750
        %v3821 = vpop.f32.mrf.mxu0
        %v3822 = vadd.f32 0.0, %v3821
        %v3823 = vpop.f32.mrf.mxu0
        %3824 = vdwg.mxu0
        %v3825 = vsel %vm551, %v3822, -inf
        %3826 = vmax.xlane.f32.xlu0 %v3825
        %v3827 = vpop.xlane.xlu0 %3826
        %v3828 = vsub.f32 %v3822, %v3827
        %v3829 = vmul.f32 %v3828, 1.442695
        %v3830 = vpow.pop %v3829
        %v3831 = vsel %vm551, %v3830, 0.0
        %3832 = vadd.xlane.f32.xlu0 %v3831
        %v3833 = vpop.xlane.xlu0 %3832
        %v3834 = vrcp.pop %v3833
        %v3835 = vmul.f32 %v3830, %v3834
        %v3837 = vsel %vm551, %v3835, 0
        %3839 = vmatprep.subr.mxu0 0.0
        %3840 = vmatpush1.msra.mxu0 0.0
        %3841 = vmatprep.subr.mxu0 0.0
        %3842 = vmatpush1.msra.mxu0 0.0
        %3843 = vmatprep.subr.mxu0 0.0
        %3844 = vmatpush1.msra.mxu0 0.0
        %3845 = vmatprep.subr.mxu0 0.0
        %3846 = vmatpush1.msra.mxu0 0.0
        %3847 = vmatprep.subr.mxu0 0.0
        %3848 = vmatpush1.msra.mxu0 0.0
        %3849 = vmatprep.subr.mxu0 0.0
        %3850 = vmatpush1.msra.mxu0 0.0
        %3851 = vmatprep.subr.mxu0 0.0
        %3852 = vmatpush1.msra.mxu0 0.0
        %3853 = vmatprep.subr.mxu0 0.0
        %3854 = vmatpush1.msra.mxu0 0.0
        %3855 = vmatprep.subr.mxu0 0.0
        %3856 = vmatpush1.msra.mxu0 0.0
        %3857 = vmatprep.subr.mxu0 0.0
        %3858 = vmatpush1.msra.mxu0 0.0
        %3859 = vmatprep.subr.mxu0 0.0
        %3860 = vmatpush1.msra.mxu0 0.0
        %3861 = vmatprep.subr.mxu0 0.0
        %3862 = vmatpush1.msra.mxu0 0.0
        %3863 = vmatprep.subr.mxu0 0.0
        %3864 = vmatpush1.msra.mxu0 0.0
        %3865 = vmatprep.subr.mxu0 0.0
        %3866 = vmatpush1.msra.mxu0 0.0
        %3867 = vmatprep.subr.mxu0 0.0
        %3868 = vmatpush1.msra.mxu0 0.0
        %3869 = vmatprep.subr.mxu0 0.0
        %3870 = vmatpush1.msra.mxu0 %v3746
        %3871 = vmatprep.subr.mxu0 0.0
        %3872 = vmatpush2.msra.mxu0 0.0
        %3873 = vmatprep.subr.mxu0 0.0
        %3874 = vmatpush2.msra.mxu0 0.0
        %3875 = vmatprep.subr.mxu0 0.0
        %3876 = vmatpush2.msra.mxu0 0.0
        %3877 = vmatprep.subr.mxu0 0.0
        %3878 = vmatpush2.msra.mxu0 0.0
        %3879 = vmatprep.subr.mxu0 0.0
        %3880 = vmatpush2.msra.mxu0 0.0
        %3881 = vmatprep.subr.mxu0 0.0
        %3882 = vmatpush2.msra.mxu0 0.0
        %3883 = vmatprep.subr.mxu0 0.0
        %3884 = vmatpush2.msra.mxu0 0.0
        %3885 = vmatprep.subr.mxu0 0.0
        %3886 = vmatpush2.msra.mxu0 0.0
        %3887 = vmatprep.subr.mxu0 0.0
        %3888 = vmatpush2.msra.mxu0 0.0
        %3889 = vmatprep.subr.mxu0 0.0
        %3890 = vmatpush2.msra.mxu0 0.0
        %3891 = vmatprep.subr.mxu0 0.0
        %3892 = vmatpush2.msra.mxu0 0.0
        %3893 = vmatprep.subr.mxu0 0.0
        %3894 = vmatpush2.msra.mxu0 0.0
        %3895 = vmatprep.subr.mxu0 0.0
        %3896 = vmatpush2.msra.mxu0 0.0
        %3897 = vmatprep.subr.mxu0 0.0
        %3898 = vmatpush2.msra.mxu0 0.0
        %3899 = vmatprep.subr.mxu0 0.0
        %3900 = vmatpush2.msra.mxu0 0.0
        %3901 = vmatprep.subr.mxu0 0.0
        %3902 = vmatpush2.msra.mxu0 0.0
        %3903 = vmatprep.mubr.f32.mxu0 0.0
        %3904 = vmatmul.mubr.f32.gmra.mxu0 %v3837
        %v3905 = vpop.f32.mrf.mxu0
        %v3906 = vadd.f32 0.0, %v3905
        %v3907 = vpop.f32.mrf.mxu0
        %3908 = vdwg.mxu0
        %s3909 = scalar_lea.vmem %s4, 448
        %v3910 = vld [vmem:[%s3909] sm:$0xff]
        %v3911 = vld [vmem:[%s3909 + $0x8] sm:$0xff]
        %v3912 = vld [vmem:[%s3909 + $0x10] sm:$0xff]
        %v3913 = vld [vmem:[%s3909 + $0x18] sm:$0xff]
        %v3914 = vld [vmem:[%s3909 + $0x20] sm:$0xff]
        %v3915 = vld [vmem:[%s3909 + $0x28] sm:$0xff]
        %v3916 = vld [vmem:[%s3909 + $0x30] sm:$0xff]
        %v3917 = vld [vmem:[%s3909 + $0x38] sm:$0xff]
        %v3919 = vsel %vm474, %v3906, 0
        %3921 = vmatprep.subr.mxu0 0.0
        %3922 = vmatpush1.msra.mxu0 0.0
        %3923 = vmatprep.subr.mxu0 0.0
        %3924 = vmatpush1.msra.mxu0 0.0
        %3925 = vmatprep.subr.mxu0 0.0
        %3926 = vmatpush1.msra.mxu0 0.0
        %3927 = vmatprep.subr.mxu0 0.0
        %3928 = vmatpush1.msra.mxu0 0.0
        %3929 = vmatprep.subr.mxu0 0.0
        %3930 = vmatpush1.msra.mxu0 0.0
        %3931 = vmatprep.subr.mxu0 0.0
        %3932 = vmatpush1.msra.mxu0 0.0
        %3933 = vmatprep.subr.mxu0 0.0
        %3934 = vmatpush1.msra.mxu0 0.0
        %3935 = vmatprep.subr.mxu0 0.0
        %3936 = vmatpush1.msra.mxu0 0.0
        %3937 = vmatprep.subr.mxu0 0.0
        %3938 = vmatpush1.msra.mxu0 %v3917
        %3939 = vmatprep.subr.mxu0 0.0
        %3940 = vmatpush1.msra.mxu0 %v3916
        %3941 = vmatprep.subr.mxu0 0.0
        %3942 = vmatpush1.msra.mxu0 %v3915
        %3943 = vmatprep.subr.mxu0 0.0
        %3944 = vmatpush1.msra.mxu0 %v3914
        %3945 = vmatprep.subr.mxu0 0.0
        %3946 = vmatpush1.msra.mxu0 %v3913
        %3947 = vmatprep.subr.mxu0 0.0
        %3948 = vmatpush1.msra.mxu0 %v3912
        %3949 = vmatprep.subr.mxu0 0.0
        %3950 = vmatpush1.msra.mxu0 %v3911
        %3951 = vmatprep.subr.mxu0 0.0
        %3952 = vmatpush1.msra.mxu0 %v3910
        %3953 = vmatprep.subr.mxu0 0.0
        %3954 = vmatpush2.msra.mxu0 0.0
        %3955 = vmatprep.subr.mxu0 0.0
        %3956 = vmatpush2.msra.mxu0 0.0
        %3957 = vmatprep.subr.mxu0 0.0
        %3958 = vmatpush2.msra.mxu0 0.0
        %3959 = vmatprep.subr.mxu0 0.0
        %3960 = vmatpush2.msra.mxu0 0.0
        %3961 = vmatprep.subr.mxu0 0.0
        %3962 = vmatpush2.msra.mxu0 0.0
        %3963 = vmatprep.subr.mxu0 0.0
        %3964 = vmatpush2.msra.mxu0 0.0
        %3965 = vmatprep.subr.mxu0 0.0
        %3966 = vmatpush2.msra.mxu0 0.0
        %3967 = vmatprep.subr.mxu0 0.0
        %3968 = vmatpush2.msra.mxu0 0.0
        %3969 = vmatprep.subr.mxu0 0.0
        %3970 = vmatpush2.msra.mxu0 0.0
        %3971 = vmatprep.subr.mxu0 0.0
        %3972 = vmatpush2.msra.mxu0 0.0
        %3973 = vmatprep.subr.mxu0 0.0
        %3974 = vmatpush2.msra.mxu0 0.0
        %3975 = vmatprep.subr.mxu0 0.0
        %3976 = vmatpush2.msra.mxu0 0.0
        %3977 = vmatprep.subr.mxu0 0.0
        %3978 = vmatpush2.msra.mxu0 0.0
        %3979 = vmatprep.subr.mxu0 0.0
        %3980 = vmatpush2.msra.mxu0 0.0
        %3981 = vmatprep.subr.mxu0 0.0
        %3982 = vmatpush2.msra.mxu0 0.0
        %3983 = vmatprep.subr.mxu0 0.0
        %3984 = vmatpush2.msra.mxu0 0.0
        %3985 = vmatprep.mubr.f32.mxu0 0.0
        %3986 = vmatmul.mubr.f32.gmra.mxu0 %v3919
        %v3987 = vpop.f32.mrf.mxu0
        %v3988 = vadd.f32 0.0, %v3987
        %v3989 = vpop.f32.mrf.mxu0
        %3990 = vdwg.mxu0
        %v3991 = vadd.f32 %v3523, %v3988
        %v3992 = vld [vmem:[%s5] sm:$0x1]
        %v3994 = vlaneseq
        %v3995 = vshrl.u32 %v3994, 7
        %v3996 = vsub.s32 0, %v3995
        %v3997 = vrot.slane %v3992, %v3996
        %v3999 = vadd.f32 %v3991, %v3997
        %4000 = vst.msk [vmem:[%s242] sm:$0xff] %vm252, %v3999
        %s4001 = sand.u32 %s159, 1
        %s4002 = scalar_lea.sflag [#allocation3], %s4001
        %s4003 = sand.u32 %s159, 1
        %s4004 = smul.addr %s4003, 8
        %s4005 = scalar_lea.vmem [#allocation2], %s4004
        // Predicated region
        $region45: #{attention_forward.1} parent=43 // pred_check
          %p4006 = pneg %p169
        $region46: #{attention_forward.1} parent=43 // pred_check_branch
          %4008 = sbr.rel (%p4006) target = $region48
        $region47: #{attention_forward.1} parent=43 // pred_region
          %s4010 = ssub.s32 128, 128
          %4011 = vsyncadd %s4002, %s4010
          %s4012 = smul.addr %s20, 128
          %s4013 = scalar_lea.hbm %s6, %s4012
          %s4015 = sshll.u32 %s4005, 4
          %s4016 = int_to_ptr.vmem [resolvable:$true] %s4015
          %4018 = dma.vmem_to_hbm [thread:$0]  %s4016, 128, %s4013, %s4002
        $region48: #{attention_forward.1} parent=43 // pred_fallthru
          _
      $region44: #{attention_forward.1} parent=5 // pred_fallthru
        _
      %p4019 = scmp.le.s32.totalorder 2, %s15
      // Predicated region
      $region49: #{attention_forward.1} parent=5 // pred_check
        %p4020 = pneg %p4019
      $region50: #{attention_forward.1} parent=5 // pred_check_branch
        %4022 = sbr.rel (%p4020) target = $region52
      $region51: #{attention_forward.1} parent=5 // pred_region
        %s4023 = ssub.s32 %s15, 2
        // Predicated region
        $region53: #{attention_forward.1} parent=51 // pred_check
          %p4024 = pneg %p175
        $region54: #{attention_forward.1} parent=51 // pred_check_branch
          %4026 = sbr.rel (%p4024) target = $region56
        $region55: #{attention_forward.1} parent=51 // pred_region
          %s4027 = sand.u32 %s160, 1
          %s4028 = scalar_lea.sflag [#allocation3], %s4027
          %s4029 = sand.u32 %s160, 1
          %s4030 = smul.addr %s4029, 8
          %s4031 = scalar_lea.vmem [#allocation2], %s4030
          %4032 = dma.done %s4028, 128
        $region56: #{attention_forward.1} parent=51 // pred_fallthru
          _
      $region52: #{attention_forward.1} parent=5 // pred_fallthru
        _
    $region6: #{attention_forward.1} parent=1 // loop_footer
      %s19 = sadd.s32 1, %s15
    $region7: #{attention_forward.1} parent=1 // loop_footer_branch
      %14 = sbr.rel target = $region3
    $region8: #{attention_forward.1} parent=1 // loop_exit
      _
    %4033 = vsyncpa [#allocation3], 1
    %s4034 = scalar_lea.sflag [#allocation3], 1
    %4035 = vsyncpa %s4034, 1

</llo_original>
